<compile_context>
chip_gen: v7x
topology: tpu7x:2x2x1
jax: 0.10.0
libtpu: 0.0.40
codegen_flags: <defaults>
</compile_context>

<pallas_src>
import functools
import math

import jax
import jax.numpy as jnp
from jax.experimental import pallas as pl
from jax.experimental.pallas import tpu as pltpu


MATMUL_DTYPE = jnp.bfloat16          # HBM storage / MXU input dtype
VMEM_LIMIT_BYTES = 32 * 1024 * 1024  # conservative scoped request, v7x-safe


# ----------------------------------------------------------------------------
# Tiling / padding helpers
# ----------------------------------------------------------------------------
def _round_up(x, m):
    return ((x + m - 1) // m) * m


def _tile(dim, target, align):
    """Return (tile, padded_dim) with tile % align == 0, padded_dim % tile == 0.

    Prefers an aligned divisor of `dim` (no padding).  Unlike the previous
    revision there is no full-dim fallback: awkward dims are padded so a block
    never exceeds `target` (protects the scoped VMEM budget, incl. v7x).
    """
    target = max(align, (target // align) * align)
    if dim <= target:
        t = _round_up(dim, align)
        return t, t
    for cand in range(target, align - 1, -align):
        if dim % cand == 0:
            return cand, dim
    return target, _round_up(dim, target)


def _attn_tiles(seq_len, tq_target, tk_target):
    """128-aligned q/kv tiles (lane-dense scores) + the padded sequence len."""
    l_pad = _round_up(seq_len, 128)

    def pick(target):
        target = max(128, (target // 128) * 128)
        best = 128
        cand = 128
        while cand <= min(target, l_pad):
            if l_pad % cand == 0:
                best = cand
            cand += 128
        return best

    return pick(tq_target), pick(tk_target), l_pad


def _pad2d(a, rows, cols):
    r, c = a.shape
    if (r, c) == (rows, cols):
        return a
    return jnp.pad(a, ((0, rows - r), (0, cols - c)))


def _fold_q_scale(params, T, C, H, d):
    """Fold log(T)*qm and 1/sqrt(head_dim) into the q columns of c_attn.

    Both are per-q-column scalings, so folding them into W_q / b_q is
    algebraically identical to the PyTorch ordering.
    """
    scale = (math.log(T) / math.sqrt(d)) * params["qm"]          # (d,)
    scale_row = jnp.tile(scale, H).astype(jnp.float32)           # (C,)
    w = params["w_attn"].at[:, :C].multiply(scale_row)
    b = params["b_attn"].at[:C].multiply(scale_row)
    return w, b


# ----------------------------------------------------------------------------
# Tiled linear (GEMM + bias) kernel
# ----------------------------------------------------------------------------
def _linear_kernel(x_ref, w_ref, b_ref, o_ref, acc_ref):
    k = pl.program_id(2)

    @pl.when(k == 0)
    def _():
        acc_ref[...] = jnp.zeros_like(acc_ref)

    acc_ref[...] += jnp.dot(x_ref[...], w_ref[...],
                            preferred_element_type=jnp.float32)

    @pl.when(k == pl.num_programs(2) - 1)
    def _():
        o_ref[...] = (acc_ref[...] + b_ref[...]).astype(o_ref.dtype)


def pallas_linear(x2d, w, b, *, out_dtype=None,
                  tm_target=512, tn_target=512, tk_target=1024):
    M, K = x2d.shape
    Kw, N = w.shape
    assert K == Kw
    out_dtype = out_dtype or x2d.dtype
    sub = 16 if x2d.dtype == jnp.bfloat16 else 8

    tm, Mp = _tile(M, tm_target, sub)
    tk, Kp = _tile(K, tk_target, 128)
    tn, Np = _tile(N, tn_target, 128)

    xp = _pad2d(x2d, Mp, Kp)
    wp = _pad2d(w, Kp, Np)
    bp = jnp.pad(b.astype(jnp.float32), (0, Np - N)).reshape(1, Np)

    out = pl.pallas_call(
        _linear_kernel,
        out_shape=jax.ShapeDtypeStruct((Mp, Np), out_dtype),
        grid=(Mp // tm, Np // tn, Kp // tk),
        in_specs=[
            pl.BlockSpec((tm, tk), lambda i, j, k: (i, k)),
            pl.BlockSpec((tk, tn), lambda i, j, k: (k, j)),
            pl.BlockSpec((1, tn), lambda i, j, k: (0, j)),
        ],
        out_specs=pl.BlockSpec((tm, tn), lambda i, j, k: (i, j)),
        scratch_shapes=[pltpu.VMEM((tm, tn), jnp.float32)],
        compiler_params=pltpu.CompilerParams(
            dimension_semantics=("parallel", "parallel", "arbitrary"),
            vmem_limit_bytes=VMEM_LIMIT_BYTES,
        ),
    )(xp, wp, bp)
    if (Mp, Np) != (M, N):
        out = out[:M, :N]
    return out


# ----------------------------------------------------------------------------
# Flash attention kernel (one head per grid step, online softmax)
# ----------------------------------------------------------------------------
def _flash_attn_kernel(q_ref, k_ref, v_ref, o_ref, m_sc, l_sc, acc_sc, *,
                       tq, tk, causal, kv_len, kv_padded):
    qi = pl.program_id(2)
    ki = pl.program_id(3)
    nk = pl.num_programs(3)

    @pl.when(ki == 0)
    def _():
        m_sc[...] = jnp.full_like(m_sc, -jnp.inf)
        l_sc[...] = jnp.zeros_like(l_sc)
        acc_sc[...] = jnp.zeros_like(acc_sc)

    q_start = qi * tq
    kv_start = ki * tk

    def compute(masked):
        q = q_ref[...]                                            # (tq, d)
        k = k_ref[...]                                            # (tk, d)
        v = v_ref[...]                                            # (tk, d)
        # scale (log(T)*qm / sqrt(d)) is already folded into the q columns
        s = jax.lax.dot_general(q, k, (((1,), (1,)), ((), ())),
                                preferred_element_type=jnp.float32)  # (tq, tk)
        if masked:
            col = kv_start + jax.lax.broadcasted_iota(jnp.int32, (tq, tk), 1)
            if causal:
                row = q_start + jax.lax.broadcasted_iota(jnp.int32, (tq, tk), 0)
                keep = col <= row
            else:
                keep = col < kv_len            # mask zero-padded KV positions
            s = jnp.where(keep, s, -jnp.inf)

        # m/l are stored lane-replicated in (tq, 128) slabs; a cheap lane-max
        # recovers the (tq, 1) value, and all scratch stores are full-width.
        m_prev = jnp.max(m_sc[...], axis=-1, keepdims=True)       # (tq, 1)
        l_prev = jnp.max(l_sc[...], axis=-1, keepdims=True)       # (tq, 1)
        m_next = jnp.maximum(m_prev, jnp.max(s, axis=-1, keepdims=True))
        alpha = jnp.exp(m_prev - m_next)
        p = jnp.exp(s - m_next)
        l_next = alpha * l_prev + jnp.sum(p, axis=-1, keepdims=True)
        acc_sc[...] = alpha * acc_sc[...] + jax.lax.dot_general(
            p.astype(v.dtype), v, (((1,), (0,)), ((), ())),
            preferred_element_type=jnp.float32)
        m_sc[...] = jnp.broadcast_to(m_next, m_sc.shape)
        l_sc[...] = jnp.broadcast_to(l_next, l_sc.shape)

    if causal:
        q_last = q_start + (tq - 1)
        kv_last = kv_start + (tk - 1)
        skipped = kv_start > q_last        # fully above diagonal: no compute
        below = kv_last <= q_start         # fully below diagonal: no mask

        @pl.when(below)
        def _():
            compute(False)

        @pl.when(jnp.logical_not(below | skipped))
        def _():
            compute(True)
    else:
        if kv_padded:
            @pl.when(ki == nk - 1)
            def _():
                compute(True)

            @pl.when(ki != nk - 1)
            def _():
                compute(False)
        else:
            compute(False)

    @pl.when(ki == nk - 1)
    def _():
        l_fin = jnp.max(l_sc[...], axis=-1, keepdims=True)
        o_ref[...] = (acc_sc[...] *
                      pl.reciprocal(l_fin, approx=True)).astype(o_ref.dtype)


def pallas_flash_attention(qkv, n_head, head_dim, *, causal=True,
                           tq_target=1024, tk_target=512):
    B, L, three_c = qkv.shape
    H, d = n_head, head_dim
    C = H * d
    assert three_c == 3 * C

    tq, tk, l_pad = _attn_tiles(L, tq_target, tk_target)
    if l_pad > L:
        qkv = jnp.pad(qkv, ((0, 0), (0, l_pad - L), (0, 0)))
    nq, nk = l_pad // tq, l_pad // tk
    grid = (B, H, nq, nk)

    if causal:
        # Clamp the kv block index at the causal boundary: the repeated index
        # makes Pallas elide the DMA for blocks strictly above the diagonal.
        def _kv_idx(qi, ki):
            return jnp.minimum(ki, (qi * tq + tq - 1) // tk)
    else:
        def _kv_idx(qi, ki):
            return ki

    kern = functools.partial(_flash_attn_kernel, tq=tq, tk=tk, causal=causal,
                             kv_len=L, kv_padded=(l_pad > L))
    scratch = [
        pltpu.VMEM((tq, 128), jnp.float32),   # m (lane-replicated)
        pltpu.VMEM((tq, 128), jnp.float32),   # l (lane-replicated)
        pltpu.VMEM((tq, d), jnp.float32),     # acc
    ]
    cparams = pltpu.CompilerParams(
        dimension_semantics=("parallel", "parallel", "parallel", "arbitrary"),
        vmem_limit_bytes=VMEM_LIMIT_BYTES,
    )

    if d % 128 == 0:
        # Lane-aligned heads: read q/k/v per head straight out of the
        # interleaved qkv activation, write the output straight into (B, L, C).
        in_specs = [
            pl.BlockSpec((None, tq, d), lambda b, h, qi, ki: (b, qi, h)),
            pl.BlockSpec((None, tk, d),
                         lambda b, h, qi, ki: (b, _kv_idx(qi, ki), H + h)),
            pl.BlockSpec((None, tk, d),
                         lambda b, h, qi, ki: (b, _kv_idx(qi, ki), 2 * H + h)),
        ]
        out_spec = pl.BlockSpec((None, tq, d), lambda b, h, qi, ki: (b, qi, h))
        y = pl.pallas_call(
            kern,
            out_shape=jax.ShapeDtypeStruct((B, l_pad, C), qkv.dtype),
            grid=grid, in_specs=in_specs, out_specs=out_spec,
            scratch_shapes=scratch, compiler_params=cparams,
        )(qkv, qkv, qkv)
        return y[:, :L, :] if l_pad > L else y

    # Small heads (d % 128 != 0): one XLA transpose to a per-head layout so
    # each block is exactly one head and no sub-lane slicing happens in-kernel.
    qkv_h = qkv.reshape(B, l_pad, 3, H, d).transpose(2, 0, 3, 1, 4)
    q, k, v = qkv_h[0], qkv_h[1], qkv_h[2]            # each (B, H, l_pad, d)
    in_specs = [
        pl.BlockSpec((None, None, tq, d), lambda b, h, qi, ki: (b, h, qi, 0)),
        pl.BlockSpec((None, None, tk, d),
                     lambda b, h, qi, ki: (b, h, _kv_idx(qi, ki), 0)),
        pl.BlockSpec((None, None, tk, d),
                     lambda b, h, qi, ki: (b, h, _kv_idx(qi, ki), 0)),
    ]
    out_spec = pl.BlockSpec((None, None, tq, d),
                            lambda b, h, qi, ki: (b, h, qi, 0))
    y = pl.pallas_call(
        kern,
        out_shape=jax.ShapeDtypeStruct((B, H, l_pad, d), qkv.dtype),
        grid=grid, in_specs=in_specs, out_specs=out_spec,
        scratch_shapes=scratch, compiler_params=cparams,
    )(q, k, v)
    y = y.transpose(0, 2, 1, 3).reshape(B, l_pad, C)
    return y[:, :L, :] if l_pad > L else y


# ----------------------------------------------------------------------------
# Forward pass
# ----------------------------------------------------------------------------
def mem_attention_forward(params, x, mem=None, causal=True, *,
                          attn_tq=1024, attn_tk=512):
    """Pallas-backed equivalent of MemAttention.forward (eval mode)."""
    B, T, C = x.shape
    H = params["n_head"]
    d = C // H
    mem_len = params["mem_len"]

    xin = x if mem is None else jnp.concatenate([mem, x], axis=1)
    L = xin.shape[1]

    # Fold log(T)*qm / sqrt(head_dim) into the q columns of c_attn, then cast
    # activations/weights to bf16 once (f32 accumulation inside the kernels).
    w_attn, b_attn = _fold_q_scale(params, T, C, H, d)
    cdt = MATMUL_DTYPE
    xin_c = xin.astype(cdt)
    w_attn_c = w_attn.astype(cdt)
    w_proj_c = params["w_proj"].astype(cdt)

    qkv = pallas_linear(xin_c.reshape(B * L, C), w_attn_c, b_attn,
                        out_dtype=cdt)                       # (B*L, 3C) bf16
    qkv = qkv.reshape(B, L, 3 * C)

    y = pallas_flash_attention(qkv, H, d, causal=causal,
                               tq_target=attn_tq, tk_target=attn_tk)  # bf16

    y = pallas_linear(y.reshape(B * L, C), w_proj_c, params["b_proj"],
                      out_dtype=x.dtype)
    y = y.reshape(B, L, C)
    if mem is not None:
        y = y[:, mem_len:, :]
    return y


# ----------------------------------------------------------------------------
# Pure-JAX reference (same precision policy: bf16 storage, f32 accumulate)
# ----------------------------------------------------------------------------
def ref_forward(params, x, mem=None, causal=True):
    B, T, C = x.shape
    H = params["n_head"]
    d = C // H
    mem_len = params["mem_len"]
    cdt = MATMUL_DTYPE

    xin = x if mem is None else jnp.concatenate([mem, x], axis=1)
    L = xin.shape[1]

    def lin(t, w, b, out_dtype):
        acc = jnp.dot(t.astype(cdt), w.astype(cdt),
                      preferred_element_type=jnp.float32)
        return (acc + b.astype(jnp.float32)).astype(out_dtype)

    w_attn, b_attn = _fold_q_scale(params, T, C, H, d)
    qkv = lin(xin.reshape(B * L, C), w_attn, b_attn, cdt).reshape(B, L, 3 * C)
    q, k, v = jnp.split(qkv, 3, axis=-1)

    def heads(t):
        return t.reshape(B, L, H, d).transpose(0, 2, 1, 3)

    q, k, v = heads(q), heads(k), heads(v)
    s = jnp.einsum("bhqd,bhkd->bhqk", q, k, preferred_element_type=jnp.float32)
    if causal:
        keep = jnp.tril(jnp.ones((L, L), dtype=bool))
        s = jnp.where(keep, s, -jnp.inf)
    p = jax.nn.softmax(s, axis=-1)
    y = jnp.einsum("bhqk,bhkd->bhqd", p.astype(cdt), v,
                   preferred_element_type=jnp.float32)
    y = y.transpose(0, 2, 1, 3).reshape(B, L, C).astype(cdt)
    y = lin(y.reshape(B * L, C), params["w_proj"], params["b_proj"],
            x.dtype).reshape(B, L, C)
    if mem is not None:
        y = y[:, mem_len:, :]
    return y


# ----------------------------------------------------------------------------
# Deterministic parameter init + demo
# ----------------------------------------------------------------------------
def init_params(key, n_embd, n_head, mem_len):
    d = n_embd // n_head
    k1, k2, k3, k4, k5 = jax.random.split(key, 5)
    s = 1.0 / math.sqrt(n_embd)
    return {
        "n_head": n_head,
        "mem_len": mem_len,
        # weights stored as (in, out) so y = x @ W + b
        "w_attn": jax.random.normal(k1, (n_embd, 3 * n_embd), jnp.float32) * s,
        "b_attn": jax.random.normal(k2, (3 * n_embd,), jnp.float32) * 0.02,
        "w_proj": jax.random.normal(k3, (n_embd, n_embd), jnp.float32) * s,
        "b_proj": jax.random.normal(k4, (n_embd,), jnp.float32) * 0.02,
        # qm ~ N(mean=1, std=0.1), shape (head_dim,)
        "qm": 1.0 + 0.1 * jax.random.normal(k5, (d,), jnp.float32),
        # TODO(synk): `attmod` Linear and the `attn_mask` buffer are unused in
        # the reference forward and therefore not materialized.
    }


def _run_config(name, *, B, T, C, H, mem_len, attn_tq, attn_tk, key,
                test_noncausal=False):
    kp, kx, km = jax.random.split(key, 3)
    params = init_params(kp, n_embd=C, n_head=H, mem_len=mem_len)
    x = jax.random.normal(kx, (B, T, C), jnp.float32)
    mem = jax.random.normal(km, (B, mem_len, C), jnp.float32)

    cases = [(None, True), (mem, True)]
    if test_noncausal:
        cases.append((None, False))

    for m, causal in cases:
        y = mem_attention_forward(params, x, mem=m, causal=causal,
                                  attn_tq=attn_tq, attn_tk=attn_tk)
        y = jax.block_until_ready(y)
        assert y.shape == (B, T, C), (name, y.shape)
        y_ref = ref_forward(params, x, mem=m, causal=causal)
        err = float(jnp.max(jnp.abs(y - y_ref)))
        scale = float(jnp.max(jnp.abs(y_ref)))
        tol = 3e-2 * max(1.0, scale)
        assert err < tol, (
            f"{name} mem={'yes' if m is not None else 'no'} causal={causal}: "
            f"max abs err {err} (tol {tol})")


if __name__ == "__main__":
    key = jax.random.PRNGKey(0)
    k1, k2 = jax.random.split(key)

    # Config 1: lane-aligned heads (head_dim = 128), direct qkv-layout path.
    # Small 128-wide attention tiles force multiple q/kv blocks so the online
    # softmax, diagonal masking, causal skip and KV-DMA clamp are exercised;
    # the no-mem case (L = 250) also exercises sequence padding.
    _run_config("wide-head", B=2, T=250, C=256, H=2, mem_len=6,
                attn_tq=128, attn_tk=128, key=k1)

    # Config 2: tiny heads (head_dim = 8) exercising the per-head transposed
    # path, sequence padding, and (via causal=False) the pad-mask branch.
    _run_config("tiny-head", B=2, T=16, C=32, H=4, mem_len=8,
                attn_tq=512, attn_tk=512, key=k2, test_noncausal=True)

    print("KERNEL_OK")
</pallas_src>

<mosaic_0001>
module attributes {stable_mosaic.version = 11 : i64} {
  func.func @_linear_kernel(%arg0: i32, %arg1: i32, %arg2: i32, %arg3: memref<512x256xbf16, #tpu.memory_space<vmem>>, %arg4: memref<256x384xbf16, #tpu.memory_space<vmem>>, %arg5: memref<1x384xf32, #tpu.memory_space<vmem>>, %arg6: memref<512x384xbf16, #tpu.memory_space<vmem>>, %arg7: memref<512x384xf32, #tpu.memory_space<vmem>>) attributes {dimension_semantics = [#tpu.dimension_semantics<parallel>, #tpu.dimension_semantics<parallel>, #tpu.dimension_semantics<arbitrary>], iteration_bounds = array<i64: 1, 2, 1>, scalar_prefetch = 0 : i64, scratch_operands = 1 : i64, tpu.core_type = #tpu.core_type<tc>, window_params = [{transform_indices = @transform_0, window_bounds = array<i64: 512, 256>}, {transform_indices = @transform_1, window_bounds = array<i64: 256, 384>}, {transform_indices = @transform_2, window_bounds = array<i64: 1, 384>}, {transform_indices = @transform_3, window_bounds = array<i64: 512, 384>}]} {
    %c0_i32 = arith.constant 0 : i32
    %0 = arith.cmpi eq, %arg2, %c0_i32 : i32
    %1 = arith.extui %0 : i1 to i32
    %c0_i32_0 = arith.constant 0 : i32
    %2 = arith.cmpi ne, %1, %c0_i32_0 : i32
    scf.if %2 {
      %cst_10 = arith.constant 0.000000e+00 : f32
      %12 = vector.broadcast %cst_10 : f32 to vector<512x384xf32>
      %c0_11 = arith.constant 0 : index
      %c0_12 = arith.constant 0 : index
      %13 = vector.load %arg7[%c0_11, %c0_12] : memref<512x384xf32, #tpu.memory_space<vmem>>, vector<512x384xf32>
      tpu.vector_store %arg7[%c0_11, %c0_12], %12 {strides = array<i32>} : memref<512x384xf32, #tpu.memory_space<vmem>>, vector<512x384xf32>,
    } else {
    }
    %c0 = arith.constant 0 : index
    %c0_1 = arith.constant 0 : index
    %3 = vector.load %arg7[%c0, %c0_1] : memref<512x384xf32, #tpu.memory_space<vmem>>, vector<512x384xf32>
    %c0_2 = arith.constant 0 : index
    %c0_3 = arith.constant 0 : index
    %4 = vector.load %arg3[%c0_2, %c0_3] : memref<512x256xbf16, #tpu.memory_space<vmem>>, vector<512x256xbf16>
    %c0_4 = arith.constant 0 : index
    %c0_5 = arith.constant 0 : index
    %5 = vector.load %arg4[%c0_4, %c0_5] : memref<256x384xbf16, #tpu.memory_space<vmem>>, vector<256x384xbf16>
    %cst = arith.constant dense<0.000000e+00> : vector<512x384xf32>
    %6 = tpu.matmul %4, %5, %cst {dimension_numbers = #tpu.dot_dimension_numbers<[1], [0], [0], [1], [0, 0, 1, 1], [], []>} : vector<512x256xbf16>, vector<256x384xbf16>, vector<512x384xf32> -> vector<512x384xf32>
    %7 = arith.addf %3, %6 : vector<512x384xf32>
    %c0_6 = arith.constant 0 : index
    %c0_7 = arith.constant 0 : index
    %8 = vector.load %arg7[%c0_6, %c0_7] : memref<512x384xf32, #tpu.memory_space<vmem>>, vector<512x384xf32>
    tpu.vector_store %arg7[%c0_6, %c0_7], %7 {strides = array<i32>} : memref<512x384xf32, #tpu.memory_space<vmem>>, vector<512x384xf32>,
    %c0_i32_8 = arith.constant 0 : i32
    %9 = arith.cmpi eq, %arg2, %c0_i32_8 : i32
    %10 = arith.extui %9 : i1 to i32
    %c0_i32_9 = arith.constant 0 : i32
    %11 = arith.cmpi ne, %10, %c0_i32_9 : i32
    scf.if %11 {
      %c0_10 = arith.constant 0 : index
      %c0_11 = arith.constant 0 : index
      %12 = vector.load %arg7[%c0_10, %c0_11] : memref<512x384xf32, #tpu.memory_space<vmem>>, vector<512x384xf32>
      %c0_12 = arith.constant 0 : index
      %c0_13 = arith.constant 0 : index
      %13 = vector.load %arg5[%c0_12, %c0_13] : memref<1x384xf32, #tpu.memory_space<vmem>>, vector<1x384xf32>
      %14 = vector.broadcast %13 : vector<1x384xf32> to vector<512x384xf32>
      %15 = arith.addf %12, %14 : vector<512x384xf32>
      %16 = arith.truncf %15 : vector<512x384xf32> to vector<512x384xbf16>
      %c0_14 = arith.constant 0 : index
      %c0_15 = arith.constant 0 : index
      %17 = vector.load %arg6[%c0_14, %c0_15] : memref<512x384xbf16, #tpu.memory_space<vmem>>, vector<512x384xbf16>
      tpu.vector_store %arg6[%c0_14, %c0_15], %16 {strides = array<i32>} : memref<512x384xbf16, #tpu.memory_space<vmem>>, vector<512x384xbf16>,
    } else {
    }
    return
  }
  func.func @transform_0(%arg0: i32, %arg1: i32, %arg2: i32) -> (i32, i32) {
    %c0_i32 = arith.constant 0 : i32
    return %arg0, %arg2 : i32, i32
  }
  func.func @transform_1(%arg0: i32, %arg1: i32, %arg2: i32) -> (i32, i32) {
    %c0_i32 = arith.constant 0 : i32
    return %arg2, %arg1 : i32, i32
  }
  func.func @transform_2(%arg0: i32, %arg1: i32, %arg2: i32) -> (i32, i32) {
    %c0_i32 = arith.constant 0 : i32
    %c0_i32_0 = arith.constant 0 : i32
    return %c0_i32, %arg1 : i32, i32
  }
  func.func @transform_3(%arg0: i32, %arg1: i32, %arg2: i32) -> (i32, i32) {
    %c0_i32 = arith.constant 0 : i32
    return %arg0, %arg1 : i32, i32
  }
}

</mosaic_0001>

<llo_original>
// kernel: tpu_custom_call.1
$region0: #{tpu_custom_call.1}
  #allocation0 [shape = 'u32[]', space=smem, size = 0x4, offset = 0x4, fixed_abs, tag = 'smem constant byte address 0x4 - core index']
  #allocation1 [shape = 'u32[144,128]{1,0:T(1,128)}', space=vmem, size = 0x12000, scoped, tag = 'internal scratch']
  #allocation2 [shape = 'f32[512,384]{1,0:T(8,128)}', space=vmem, size = 0xc0000, scoped, tag = 'scratch operand']
  %s0 = inlined_call_operand.hbm [shape: bf16[512,256], index: 0, kind: input, shape index: {}]
  %s1 = inlined_call_operand.hbm [shape: bf16[256,768], index: 1, kind: input, shape index: {}]
  %s2 = inlined_call_operand.vmem [shape: f32[1,768], index: 2, kind: input, shape index: {}]
  %s3 = inlined_call_operand.hbm [shape: bf16[512,768], index: 3, kind: output, shape index: {}]
  %s4 = sld [smem:[#allocation0]]
  $region61: #{tpu_custom_call.1} parent=0
    _
  %s6 = ssub.s32 1, %s4
  %s7 = scalar_select 0, %s6, %s4
  $region1: #{tpu_custom_call.1} parent=0
    #allocation3 [shape = 'u8[262144]{0}', space=vmem, size = 0x40000, scoped, tag = 'input window, operand 0, single buffered']
    #allocation4 [shape = 's32[2]{0}', space=sflag, size = 0x8, scoped, tag = 'scoped memory for tpu_custom_call.1']
    #allocation5 [shape = 's32[2]{0}', space=sflag, size = 0x8, scoped, tag = 'scoped memory for tpu_custom_call.1']
    #allocation6 [shape = 'u8[393216]{0}', space=vmem, size = 0x60000, scoped, tag = 'input window, operand 1']
    #allocation7 [shape = 's32[2]{0}', space=sflag, size = 0x8, scoped, tag = 'scoped memory for tpu_custom_call.1']
    #allocation8 [shape = 'u8[786432]{0}', space=vmem, size = 0xc0000, scoped, tag = 'output window, operand 0']
    %8 = vsyncpa [#allocation4], 0
    %9 = vsyncpa [#allocation7], 0
    %s10 = scalar_lea.sflag [#allocation7], 1
    %11 = vsyncpa %s10, 0
    %12 = vsyncpa [#allocation5], 0
    %s13 = scalar_lea.sflag [#allocation5], 1
    %14 = vsyncpa %s13, 0
    loop: start=0, step=1, limit=4
    $region2: #{tpu_custom_call.1} parent=1 // loop_pre_header
      _
    $region3: #{tpu_custom_call.1} parent=1 // loop_header
      %s16 = sphi 0, %s20
      %p17 = scmp.ge.s32.totalorder %s16, 4
      %s23 = sphi 0, %s42
      %s24 = sphi 0, %s38
      %s25 = sphi 0, %s34
      %s26 = sphi 0, %s23
      %s27 = sphi 0, %s24
      %s28 = sphi 0, %s25
      %s29 = sphi 0, %s26
      %s30 = sphi 0, %s27
      %s31 = sphi 0, %s28
      %s47 = sphi 0, %s49
      %s50 = sphi 0, %s47
      %s51 = sphi 0, %s50
      %s67 = sphi 0, %s51
      %s75 = sphi 0, %s77
      %s78 = sphi 0, %s75
      %s79 = sphi 0, %s78
      %s95 = sphi 0, %s79
      %s101 = sphi 0, %s103
      %s104 = sphi 0, %s101
      %s105 = sphi 0, %s104
      %s121 = sphi 0, %s105
      %s129 = sphi 0, %s131
      %s132 = sphi 0, %s129
      %s133 = sphi 0, %s132
      %s149 = sphi 0, %s133
    $region4: #{tpu_custom_call.1} parent=1 // loop_header_branch
      %19 = sbr.rel (%p17) target = $region8
    $region5: #{tpu_custom_call.1} parent=1 // loop_body
      %s21 = ssub.s32 %s16, 1
      %s22 = ssub.s32 %s16, 2
      %s32 = sadd.s32 1, %s25
      %p33 = scmp.ge.s32.totalorder %s32, 1
      %s34 = scalar_select %p33, 0, %s32
      %s35 = sadd.s32 1, %s24
      %s36 = scalar_select %p33, %s35, %s24
      %p37 = scmp.ge.s32.totalorder %s36, 2
      %s38 = scalar_select %p37, 0, %s36
      %s39 = sadd.s32 1, %s23
      %s40 = scalar_select %p37, %s39, %s23
      %p41 = scmp.ge.s32.totalorder %s40, 1
      %s42 = scalar_select %p41, 0, %s40
      %s43 = ssub.s32 %s23, %s42
      %s44 = ssub.s32 %s25, %s34
      %s45 = sor.u32 %s43, %s44
      %p46 = scmp.eq.s32.totalorder %s45, 0
      %s48 = sadd.s32 %s47, 1
      %s49 = scalar_select %p46, %s47, %s48
      %p52 = pneg %p46
      %p53 = scmp.eq.s32.totalorder %s16, 1
      %p54 = por %p52, %p53
      %p55 = scmp.ne.s32.totalorder %s47, %s50
      %p56 = scmp.eq.s32.totalorder %s16, 0
      %p57 = por %p55, %p56
      %p58 = scmp.ne.s32.totalorder %s47, %s50
      %p59 = scmp.eq.s32.totalorder %s21, 1
      %p60 = por %p58, %p59
      %p61 = scmp.ne.s32.totalorder %s50, %s51
      %p62 = scmp.eq.s32.totalorder %s21, 0
      %p63 = por %p61, %p62
      %p64 = scmp.ne.s32.totalorder %s50, %s51
      %p65 = scmp.eq.s32.totalorder %s22, 1
      %p66 = por %p64, %p65
      %p68 = scmp.ne.s32.totalorder %s51, %s67
      %p69 = scmp.eq.s32.totalorder %s22, 0
      %p70 = por %p68, %p69
      %s71 = ssub.s32 %s25, %s34
      %s72 = ssub.s32 %s24, %s38
      %s73 = sor.u32 %s71, %s72
      %p74 = scmp.eq.s32.totalorder %s73, 0
      %s76 = sadd.s32 %s75, 1
      %s77 = scalar_select %p74, %s75, %s76
      %p80 = pneg %p74
      %p81 = scmp.eq.s32.totalorder %s16, 1
      %p82 = por %p80, %p81
      %p83 = scmp.ne.s32.totalorder %s75, %s78
      %p84 = scmp.eq.s32.totalorder %s16, 0
      %p85 = por %p83, %p84
      %p86 = scmp.ne.s32.totalorder %s75, %s78
      %p87 = scmp.eq.s32.totalorder %s21, 1
      %p88 = por %p86, %p87
      %p89 = scmp.ne.s32.totalorder %s78, %s79
      %p90 = scmp.eq.s32.totalorder %s21, 0
      %p91 = por %p89, %p90
      %p92 = scmp.ne.s32.totalorder %s78, %s79
      %p93 = scmp.eq.s32.totalorder %s22, 1
      %p94 = por %p92, %p93
      %p96 = scmp.ne.s32.totalorder %s79, %s95
      %p97 = scmp.eq.s32.totalorder %s22, 0
      %p98 = por %p96, %p97
      %s99 = ssub.s32 %s24, %s38
      %p100 = scmp.eq.s32.totalorder %s99, 0
      %s102 = sadd.s32 %s101, 1
      %s103 = scalar_select %p100, %s101, %s102
      %p106 = pneg %p100
      %p107 = scmp.eq.s32.totalorder %s16, 1
      %p108 = por %p106, %p107
      %p109 = scmp.ne.s32.totalorder %s101, %s104
      %p110 = scmp.eq.s32.totalorder %s16, 0
      %p111 = por %p109, %p110
      %p112 = scmp.ne.s32.totalorder %s101, %s104
      %p113 = scmp.eq.s32.totalorder %s21, 1
      %p114 = por %p112, %p113
      %p115 = scmp.ne.s32.totalorder %s104, %s105
      %p116 = scmp.eq.s32.totalorder %s21, 0
      %p117 = por %p115, %p116
      %p118 = scmp.ne.s32.totalorder %s104, %s105
      %p119 = scmp.eq.s32.totalorder %s22, 1
      %p120 = por %p118, %p119
      %p122 = scmp.ne.s32.totalorder %s105, %s121
      %p123 = scmp.eq.s32.totalorder %s22, 0
      %p124 = por %p122, %p123
      %s125 = ssub.s32 %s23, %s42
      %s126 = ssub.s32 %s24, %s38
      %s127 = sor.u32 %s125, %s126
      %p128 = scmp.eq.s32.totalorder %s127, 0
      %s130 = sadd.s32 %s129, 1
      %s131 = scalar_select %p128, %s129, %s130
      %p134 = pneg %p128
      %p135 = scmp.eq.s32.totalorder %s16, 1
      %p136 = por %p134, %p135
      %p137 = scmp.ne.s32.totalorder %s129, %s132
      %p138 = scmp.eq.s32.totalorder %s16, 0
      %p139 = por %p137, %p138
      %p140 = scmp.ne.s32.totalorder %s129, %s132
      %p141 = scmp.eq.s32.totalorder %s21, 1
      %p142 = por %p140, %p141
      %p143 = scmp.ne.s32.totalorder %s132, %s133
      %p144 = scmp.eq.s32.totalorder %s21, 0
      %p145 = por %p143, %p144
      %p146 = scmp.ne.s32.totalorder %s132, %s133
      %p147 = scmp.eq.s32.totalorder %s22, 1
      %p148 = por %p146, %p147
      %p150 = scmp.ne.s32.totalorder %s133, %s149
      %p151 = scmp.eq.s32.totalorder %s22, 0
      %p152 = por %p150, %p151
      %p153 = scmp.le.s32.totalorder 1, %s16
      %p154 = scmp.lt.s32.totalorder %s16, 3
      %p155 = pnand %p153, %p154
      %p156 = pneg %p155
      // Predicated region
      $region9: #{tpu_custom_call.1} parent=5 // pred_check
        _
      $region10: #{tpu_custom_call.1} parent=5 // pred_check_branch
        %158 = sbr.rel (%p155) target = $region12
      $region11: #{tpu_custom_call.1} parent=5 // pred_region
        %s159 = ssub.s32 %s16, 1
        // Predicated region
        $region13: #{tpu_custom_call.1} parent=11 // pred_check
          %p160 = pneg %p63
        $region14: #{tpu_custom_call.1} parent=11 // pred_check_branch
          %162 = sbr.rel (%p160) target = $region16
        $region15: #{tpu_custom_call.1} parent=11 // pred_region
          %s163 = smul.u32 64, %s26
          %s164 = smul.u32 2, %s28
          %s166 = ssub.s32 8192, 8192
          %167 = vsyncadd [#allocation4], %s166
          %s168 = smul.addr %s163, 2
          %s169 = sadd.s32 %s164, %s168
          %s170 = smul.addr %s169, 64
          %s171 = scalar_lea.hbm %s0, %s170
          %s172 = sshll.u32 [#allocation3], 4
          %s173 = int_to_ptr.vmem [resolvable:$true] %s172
          %178 = dma.hbm_to_vmem [thread:$0]  %s171, 8192, %s173, [#allocation4], 128, 128, 8
        $region16: #{tpu_custom_call.1} parent=11 // pred_fallthru
          _
      $region12: #{tpu_custom_call.1} parent=5 // pred_fallthru
        _
      %p179 = scmp.lt.s32.totalorder %s16, 2
      // Predicated region
      $region17: #{tpu_custom_call.1} parent=5 // pred_check
        %p180 = pneg %p179
      $region18: #{tpu_custom_call.1} parent=5 // pred_check_branch
        %182 = sbr.rel (%p180) target = $region20
      $region19: #{tpu_custom_call.1} parent=5 // pred_region
        // Predicated region
        $region21: #{tpu_custom_call.1} parent=19 // pred_check
          %p183 = pneg %p85
        $region22: #{tpu_custom_call.1} parent=19 // pred_check_branch
          %185 = sbr.rel (%p183) target = $region24
        $region23: #{tpu_custom_call.1} parent=19 // pred_region
          %s186 = sand.u32 %s75, 1
          %s187 = scalar_lea.sflag [#allocation7], %s186
          %s188 = sand.u32 %s75, 1
          %s189 = smul.addr %s188, 384
          %s190 = scalar_lea.vmem [#allocation6], %s189
          %s191 = smul.u32 32, %s25
          %s192 = smul.u32 3, %s24
          %s194 = ssub.s32 6144, 6144
          %195 = vsyncadd %s187, %s194
          %s196 = smul.addr %s191, 6
          %s197 = sadd.s32 %s192, %s196
          %s198 = smul.addr %s197, 64
          %s199 = scalar_lea.hbm %s1, %s198
          %s200 = sshll.u32 %s190, 4
          %s201 = int_to_ptr.vmem [resolvable:$true] %s200
          %206 = dma.hbm_to_vmem [thread:$0]  %s199, 6144, %s201, %s187, 384, 192, 12
        $region24: #{tpu_custom_call.1} parent=19 // pred_fallthru
          _
        // Predicated region
        $region25: #{tpu_custom_call.1} parent=19 // pred_check
          %p207 = pneg %p111
        $region26: #{tpu_custom_call.1} parent=19 // pred_check_branch
          %209 = sbr.rel (%p207) target = $region28
        $region27: #{tpu_custom_call.1} parent=19 // pred_region
          %s210 = smul.u32 3, %s24
          %p211 = scmp.lt.s32.totalorder %s210, 5
          %s212 = scalar_select %p211, %s210, 5
          %s213 = scalar_lea.vmem %s2, %s212
          %s214 = smul.u32 3, %s24
        $region28: #{tpu_custom_call.1} parent=19 // pred_fallthru
          _
      $region20: #{tpu_custom_call.1} parent=5 // pred_fallthru
        _
      %p215 = scmp.le.s32.totalorder 1, %s16
      %p216 = scmp.lt.s32.totalorder %s16, 3
      %p217 = pnand %p215, %p216
      %p218 = pneg %p217
      // Predicated region
      $region29: #{tpu_custom_call.1} parent=5 // pred_check
        _
      $region30: #{tpu_custom_call.1} parent=5 // pred_check_branch
        %220 = sbr.rel (%p217) target = $region32
      $region31: #{tpu_custom_call.1} parent=5 // pred_region
        %s221 = ssub.s32 %s16, 1
        // Predicated region
        $region33: #{tpu_custom_call.1} parent=31 // pred_check
          %p222 = pneg %p63
        $region34: #{tpu_custom_call.1} parent=31 // pred_check_branch
          %224 = sbr.rel (%p222) target = $region36
        $region35: #{tpu_custom_call.1} parent=31 // pred_region
          %225 = dma.done [#allocation4], 8192
        $region36: #{tpu_custom_call.1} parent=31 // pred_fallthru
          _
        %s226 = sand.u32 %s78, 1
        %s227 = scalar_lea.sflag [#allocation7], %s226
        %s228 = sand.u32 %s78, 1
        %s229 = smul.addr %s228, 384
        %s230 = scalar_lea.vmem [#allocation6], %s229
        // Predicated region
        $region37: #{tpu_custom_call.1} parent=31 // pred_check
          %p231 = pneg %p91
        $region38: #{tpu_custom_call.1} parent=31 // pred_check_branch
          %233 = sbr.rel (%p231) target = $region40
        $region39: #{tpu_custom_call.1} parent=31 // pred_region
          %234 = dma.done %s227, 6144
        $region40: #{tpu_custom_call.1} parent=31 // pred_fallthru
          _
        %p235 = pneg %p63
        %p236 = pneg %p60
        %s237 = sand.u32 %s78, 1
        %s238 = scalar_lea.sflag [#allocation7], %s237
        %s239 = sand.u32 %s78, 1
        %s240 = smul.addr %s239, 384
        %s241 = scalar_lea.vmem [#allocation6], %s240
        %p242 = pneg %p91
        %p243 = pneg %p88
        %s244 = smul.u32 3, %s27
        %p245 = scmp.lt.s32.totalorder %s244, 5
        %s246 = scalar_select %p245, %s244, 5
        %s247 = scalar_lea.vmem %s2, %s246
        %p248 = pneg %p117
        %p249 = pneg %p114
        %p250 = pneg %p145
        %p251 = pneg %p142
        %s252 = sand.u32 %s132, 1
        %s253 = scalar_lea.sflag [#allocation5], %s252
        %s254 = sand.u32 %s132, 1
        %s255 = smul.addr %s254, 768
        %s256 = scalar_lea.vmem [#allocation8], %s255
        %s257 = smul.u32 64, %s26
        %s258 = smul.u32 2, %s28
        %s259 = smul.u32 32, %s28
        %s260 = smul.u32 3, %s27
        %s261 = smul.u32 3, %s27
        %p262 = scmp.lt.s32.totalorder %s261, 5
        %s263 = scalar_select %p262, %s261, 5
        %s264 = scalar_lea.vmem %s2, %s263
        %s265 = smul.u32 3, %s27
        %s266 = smul.u32 64, %s26
        %s267 = smul.u32 3, %s27
        %p269 = scmp.eq.s32.totalorder %s28, 0
        // Predicated region
        $region41: #{tpu_custom_call.1} parent=31 // pred_check
          %p270 = pneg %p269
        $region42: #{tpu_custom_call.1} parent=31 // pred_check_branch
          %272 = sbr.rel (%p270) target = $region44
        $region43: #{tpu_custom_call.1} parent=31 // pred_region
          %273 = vst [vmem:[#allocation2] sm:$0xff] 0.0
          %274 = vst [vmem:[#allocation2 + $0x8] sm:$0xff] 0.0
          %275 = vst [vmem:[#allocation2 + $0x10] sm:$0xff] 0.0
          %276 = vst [vmem:[#allocation2 + $0x18] sm:$0xff] 0.0
          %277 = vst [vmem:[#allocation2 + $0x20] sm:$0xff] 0.0
          %278 = vst [vmem:[#allocation2 + $0x28] sm:$0xff] 0.0
          %279 = vst [vmem:[#allocation2 + $0x30] sm:$0xff] 0.0
          %280 = vst [vmem:[#allocation2 + $0x38] sm:$0xff] 0.0
          %281 = vst [vmem:[#allocation2 + $0x40] sm:$0xff] 0.0
          %282 = vst [vmem:[#allocation2 + $0x48] sm:$0xff] 0.0
          %283 = vst [vmem:[#allocation2 + $0x50] sm:$0xff] 0.0
          %284 = vst [vmem:[#allocation2 + $0x58] sm:$0xff] 0.0
          %285 = vst [vmem:[#allocation2 + $0x60] sm:$0xff] 0.0
          %286 = vst [vmem:[#allocation2 + $0x68] sm:$0xff] 0.0
          %287 = vst [vmem:[#allocation2 + $0x70] sm:$0xff] 0.0
          %288 = vst [vmem:[#allocation2 + $0x78] sm:$0xff] 0.0
          %289 = vst [vmem:[#allocation2 + $0x80] sm:$0xff] 0.0
          %290 = vst [vmem:[#allocation2 + $0x88] sm:$0xff] 0.0
          %291 = vst [vmem:[#allocation2 + $0x90] sm:$0xff] 0.0
          %292 = vst [vmem:[#allocation2 + $0x98] sm:$0xff] 0.0
          %293 = vst [vmem:[#allocation2 + $0xa0] sm:$0xff] 0.0
          %294 = vst [vmem:[#allocation2 + $0xa8] sm:$0xff] 0.0
          %295 = vst [vmem:[#allocation2 + $0xb0] sm:$0xff] 0.0
          %296 = vst [vmem:[#allocation2 + $0xb8] sm:$0xff] 0.0
          %297 = vst [vmem:[#allocation2 + $0xc0] sm:$0xff] 0.0
          %298 = vst [vmem:[#allocation2 + $0xc8] sm:$0xff] 0.0
          %299 = vst [vmem:[#allocation2 + $0xd0] sm:$0xff] 0.0
          %300 = vst [vmem:[#allocation2 + $0xd8] sm:$0xff] 0.0
          %301 = vst [vmem:[#allocation2 + $0xe0] sm:$0xff] 0.0
          %302 = vst [vmem:[#allocation2 + $0xe8] sm:$0xff] 0.0
          %303 = vst [vmem:[#allocation2 + $0xf0] sm:$0xff] 0.0
          %304 = vst [vmem:[#allocation2 + $0xf8] sm:$0xff] 0.0
          %305 = vst [vmem:[#allocation2 + $0x100] sm:$0xff] 0.0
          %306 = vst [vmem:[#allocation2 + $0x108] sm:$0xff] 0.0
          %307 = vst [vmem:[#allocation2 + $0x110] sm:$0xff] 0.0
          %308 = vst [vmem:[#allocation2 + $0x118] sm:$0xff] 0.0
          %309 = vst [vmem:[#allocation2 + $0x120] sm:$0xff] 0.0
          %310 = vst [vmem:[#allocation2 + $0x128] sm:$0xff] 0.0
          %311 = vst [vmem:[#allocation2 + $0x130] sm:$0xff] 0.0
          %312 = vst [vmem:[#allocation2 + $0x138] sm:$0xff] 0.0
          %313 = vst [vmem:[#allocation2 + $0x140] sm:$0xff] 0.0
          %314 = vst [vmem:[#allocation2 + $0x148] sm:$0xff] 0.0
          %315 = vst [vmem:[#allocation2 + $0x150] sm:$0xff] 0.0
          %316 = vst [vmem:[#allocation2 + $0x158] sm:$0xff] 0.0
          %317 = vst [vmem:[#allocation2 + $0x160] sm:$0xff] 0.0
          %318 = vst [vmem:[#allocation2 + $0x168] sm:$0xff] 0.0
          %319 = vst [vmem:[#allocation2 + $0x170] sm:$0xff] 0.0
          %320 = vst [vmem:[#allocation2 + $0x178] sm:$0xff] 0.0
          %321 = vst [vmem:[#allocation2 + $0x180] sm:$0xff] 0.0
          %322 = vst [vmem:[#allocation2 + $0x188] sm:$0xff] 0.0
          %323 = vst [vmem:[#allocation2 + $0x190] sm:$0xff] 0.0
          %324 = vst [vmem:[#allocation2 + $0x198] sm:$0xff] 0.0
          %325 = vst [vmem:[#allocation2 + $0x1a0] sm:$0xff] 0.0
          %326 = vst [vmem:[#allocation2 + $0x1a8] sm:$0xff] 0.0
          %327 = vst [vmem:[#allocation2 + $0x1b0] sm:$0xff] 0.0
          %328 = vst [vmem:[#allocation2 + $0x1b8] sm:$0xff] 0.0
          %329 = vst [vmem:[#allocation2 + $0x1c0] sm:$0xff] 0.0
          %330 = vst [vmem:[#allocation2 + $0x1c8] sm:$0xff] 0.0
          %331 = vst [vmem:[#allocation2 + $0x1d0] sm:$0xff] 0.0
          %332 = vst [vmem:[#allocation2 + $0x1d8] sm:$0xff] 0.0
          %333 = vst [vmem:[#allocation2 + $0x1e0] sm:$0xff] 0.0
          %334 = vst [vmem:[#allocation2 + $0x1e8] sm:$0xff] 0.0
          %335 = vst [vmem:[#allocation2 + $0x1f0] sm:$0xff] 0.0
          %336 = vst [vmem:[#allocation2 + $0x1f8] sm:$0xff] 0.0
          %337 = vst [vmem:[#allocation2 + $0x200] sm:$0xff] 0.0
          %338 = vst [vmem:[#allocation2 + $0x208] sm:$0xff] 0.0
          %339 = vst [vmem:[#allocation2 + $0x210] sm:$0xff] 0.0
          %340 = vst [vmem:[#allocation2 + $0x218] sm:$0xff] 0.0
          %341 = vst [vmem:[#allocation2 + $0x220] sm:$0xff] 0.0
          %342 = vst [vmem:[#allocation2 + $0x228] sm:$0xff] 0.0
          %343 = vst [vmem:[#allocation2 + $0x230] sm:$0xff] 0.0
          %344 = vst [vmem:[#allocation2 + $0x238] sm:$0xff] 0.0
          %345 = vst [vmem:[#allocation2 + $0x240] sm:$0xff] 0.0
          %346 = vst [vmem:[#allocation2 + $0x248] sm:$0xff] 0.0
          %347 = vst [vmem:[#allocation2 + $0x250] sm:$0xff] 0.0
          %348 = vst [vmem:[#allocation2 + $0x258] sm:$0xff] 0.0
          %349 = vst [vmem:[#allocation2 + $0x260] sm:$0xff] 0.0
          %350 = vst [vmem:[#allocation2 + $0x268] sm:$0xff] 0.0
          %351 = vst [vmem:[#allocation2 + $0x270] sm:$0xff] 0.0
          %352 = vst [vmem:[#allocation2 + $0x278] sm:$0xff] 0.0
          %353 = vst [vmem:[#allocation2 + $0x280] sm:$0xff] 0.0
          %354 = vst [vmem:[#allocation2 + $0x288] sm:$0xff] 0.0
          %355 = vst [vmem:[#allocation2 + $0x290] sm:$0xff] 0.0
          %356 = vst [vmem:[#allocation2 + $0x298] sm:$0xff] 0.0
          %357 = vst [vmem:[#allocation2 + $0x2a0] sm:$0xff] 0.0
          %358 = vst [vmem:[#allocation2 + $0x2a8] sm:$0xff] 0.0
          %359 = vst [vmem:[#allocation2 + $0x2b0] sm:$0xff] 0.0
          %360 = vst [vmem:[#allocation2 + $0x2b8] sm:$0xff] 0.0
          %361 = vst [vmem:[#allocation2 + $0x2c0] sm:$0xff] 0.0
          %362 = vst [vmem:[#allocation2 + $0x2c8] sm:$0xff] 0.0
          %363 = vst [vmem:[#allocation2 + $0x2d0] sm:$0xff] 0.0
          %364 = vst [vmem:[#allocation2 + $0x2d8] sm:$0xff] 0.0
          %365 = vst [vmem:[#allocation2 + $0x2e0] sm:$0xff] 0.0
          %366 = vst [vmem:[#allocation2 + $0x2e8] sm:$0xff] 0.0
          %367 = vst [vmem:[#allocation2 + $0x2f0] sm:$0xff] 0.0
          %368 = vst [vmem:[#allocation2 + $0x2f8] sm:$0xff] 0.0
          %369 = vst [vmem:[#allocation2 + $0x300] sm:$0xff] 0.0
          %370 = vst [vmem:[#allocation2 + $0x308] sm:$0xff] 0.0
          %371 = vst [vmem:[#allocation2 + $0x310] sm:$0xff] 0.0
          %372 = vst [vmem:[#allocation2 + $0x318] sm:$0xff] 0.0
          %373 = vst [vmem:[#allocation2 + $0x320] sm:$0xff] 0.0
          %374 = vst [vmem:[#allocation2 + $0x328] sm:$0xff] 0.0
          %375 = vst [vmem:[#allocation2 + $0x330] sm:$0xff] 0.0
          %376 = vst [vmem:[#allocation2 + $0x338] sm:$0xff] 0.0
          %377 = vst [vmem:[#allocation2 + $0x340] sm:$0xff] 0.0
          %378 = vst [vmem:[#allocation2 + $0x348] sm:$0xff] 0.0
          %379 = vst [vmem:[#allocation2 + $0x350] sm:$0xff] 0.0
          %380 = vst [vmem:[#allocation2 + $0x358] sm:$0xff] 0.0
          %381 = vst [vmem:[#allocation2 + $0x360] sm:$0xff] 0.0
          %382 = vst [vmem:[#allocation2 + $0x368] sm:$0xff] 0.0
          %383 = vst [vmem:[#allocation2 + $0x370] sm:$0xff] 0.0
          %384 = vst [vmem:[#allocation2 + $0x378] sm:$0xff] 0.0
          %385 = vst [vmem:[#allocation2 + $0x380] sm:$0xff] 0.0
          %386 = vst [vmem:[#allocation2 + $0x388] sm:$0xff] 0.0
          %387 = vst [vmem:[#allocation2 + $0x390] sm:$0xff] 0.0
          %388 = vst [vmem:[#allocation2 + $0x398] sm:$0xff] 0.0
          %389 = vst [vmem:[#allocation2 + $0x3a0] sm:$0xff] 0.0
          %390 = vst [vmem:[#allocation2 + $0x3a8] sm:$0xff] 0.0
          %391 = vst [vmem:[#allocation2 + $0x3b0] sm:$0xff] 0.0
          %392 = vst [vmem:[#allocation2 + $0x3b8] sm:$0xff] 0.0
          %393 = vst [vmem:[#allocation2 + $0x3c0] sm:$0xff] 0.0
          %394 = vst [vmem:[#allocation2 + $0x3c8] sm:$0xff] 0.0
          %395 = vst [vmem:[#allocation2 + $0x3d0] sm:$0xff] 0.0
          %396 = vst [vmem:[#allocation2 + $0x3d8] sm:$0xff] 0.0
          %397 = vst [vmem:[#allocation2 + $0x3e0] sm:$0xff] 0.0
          %398 = vst [vmem:[#allocation2 + $0x3e8] sm:$0xff] 0.0
          %399 = vst [vmem:[#allocation2 + $0x3f0] sm:$0xff] 0.0
          %400 = vst [vmem:[#allocation2 + $0x3f8] sm:$0xff] 0.0
          %401 = vst [vmem:[#allocation2 + $0x400] sm:$0xff] 0.0
          %402 = vst [vmem:[#allocation2 + $0x408] sm:$0xff] 0.0
          %403 = vst [vmem:[#allocation2 + $0x410] sm:$0xff] 0.0
          %404 = vst [vmem:[#allocation2 + $0x418] sm:$0xff] 0.0
          %405 = vst [vmem:[#allocation2 + $0x420] sm:$0xff] 0.0
          %406 = vst [vmem:[#allocation2 + $0x428] sm:$0xff] 0.0
          %407 = vst [vmem:[#allocation2 + $0x430] sm:$0xff] 0.0
          %408 = vst [vmem:[#allocation2 + $0x438] sm:$0xff] 0.0
          %409 = vst [vmem:[#allocation2 + $0x440] sm:$0xff] 0.0
          %410 = vst [vmem:[#allocation2 + $0x448] sm:$0xff] 0.0
          %411 = vst [vmem:[#allocation2 + $0x450] sm:$0xff] 0.0
          %412 = vst [vmem:[#allocation2 + $0x458] sm:$0xff] 0.0
          %413 = vst [vmem:[#allocation2 + $0x460] sm:$0xff] 0.0
          %414 = vst [vmem:[#allocation2 + $0x468] sm:$0xff] 0.0
          %415 = vst [vmem:[#allocation2 + $0x470] sm:$0xff] 0.0
          %416 = vst [vmem:[#allocation2 + $0x478] sm:$0xff] 0.0
          %417 = vst [vmem:[#allocation2 + $0x480] sm:$0xff] 0.0
          %418 = vst [vmem:[#allocation2 + $0x488] sm:$0xff] 0.0
          %419 = vst [vmem:[#allocation2 + $0x490] sm:$0xff] 0.0
          %420 = vst [vmem:[#allocation2 + $0x498] sm:$0xff] 0.0
          %421 = vst [vmem:[#allocation2 + $0x4a0] sm:$0xff] 0.0
          %422 = vst [vmem:[#allocation2 + $0x4a8] sm:$0xff] 0.0
          %423 = vst [vmem:[#allocation2 + $0x4b0] sm:$0xff] 0.0
          %424 = vst [vmem:[#allocation2 + $0x4b8] sm:$0xff] 0.0
          %425 = vst [vmem:[#allocation2 + $0x4c0] sm:$0xff] 0.0
          %426 = vst [vmem:[#allocation2 + $0x4c8] sm:$0xff] 0.0
          %427 = vst [vmem:[#allocation2 + $0x4d0] sm:$0xff] 0.0
          %428 = vst [vmem:[#allocation2 + $0x4d8] sm:$0xff] 0.0
          %429 = vst [vmem:[#allocation2 + $0x4e0] sm:$0xff] 0.0
          %430 = vst [vmem:[#allocation2 + $0x4e8] sm:$0xff] 0.0
          %431 = vst [vmem:[#allocation2 + $0x4f0] sm:$0xff] 0.0
          %432 = vst [vmem:[#allocation2 + $0x4f8] sm:$0xff] 0.0
          %433 = vst [vmem:[#allocation2 + $0x500] sm:$0xff] 0.0
          %434 = vst [vmem:[#allocation2 + $0x508] sm:$0xff] 0.0
          %435 = vst [vmem:[#allocation2 + $0x510] sm:$0xff] 0.0
          %436 = vst [vmem:[#allocation2 + $0x518] sm:$0xff] 0.0
          %437 = vst [vmem:[#allocation2 + $0x520] sm:$0xff] 0.0
          %438 = vst [vmem:[#allocation2 + $0x528] sm:$0xff] 0.0
          %439 = vst [vmem:[#allocation2 + $0x530] sm:$0xff] 0.0
          %440 = vst [vmem:[#allocation2 + $0x538] sm:$0xff] 0.0
          %441 = vst [vmem:[#allocation2 + $0x540] sm:$0xff] 0.0
          %442 = vst [vmem:[#allocation2 + $0x548] sm:$0xff] 0.0
          %443 = vst [vmem:[#allocation2 + $0x550] sm:$0xff] 0.0
          %444 = vst [vmem:[#allocation2 + $0x558] sm:$0xff] 0.0
          %445 = vst [vmem:[#allocation2 + $0x560] sm:$0xff] 0.0
          %446 = vst [vmem:[#allocation2 + $0x568] sm:$0xff] 0.0
          %447 = vst [vmem:[#allocation2 + $0x570] sm:$0xff] 0.0
          %448 = vst [vmem:[#allocation2 + $0x578] sm:$0xff] 0.0
          %449 = vst [vmem:[#allocation2 + $0x580] sm:$0xff] 0.0
          %450 = vst [vmem:[#allocation2 + $0x588] sm:$0xff] 0.0
          %451 = vst [vmem:[#allocation2 + $0x590] sm:$0xff] 0.0
          %452 = vst [vmem:[#allocation2 + $0x598] sm:$0xff] 0.0
          %453 = vst [vmem:[#allocation2 + $0x5a0] sm:$0xff] 0.0
          %454 = vst [vmem:[#allocation2 + $0x5a8] sm:$0xff] 0.0
          %455 = vst [vmem:[#allocation2 + $0x5b0] sm:$0xff] 0.0
          %456 = vst [vmem:[#allocation2 + $0x5b8] sm:$0xff] 0.0
          %457 = vst [vmem:[#allocation2 + $0x5c0] sm:$0xff] 0.0
          %458 = vst [vmem:[#allocation2 + $0x5c8] sm:$0xff] 0.0
          %459 = vst [vmem:[#allocation2 + $0x5d0] sm:$0xff] 0.0
          %460 = vst [vmem:[#allocation2 + $0x5d8] sm:$0xff] 0.0
          %461 = vst [vmem:[#allocation2 + $0x5e0] sm:$0xff] 0.0
          %462 = vst [vmem:[#allocation2 + $0x5e8] sm:$0xff] 0.0
          %463 = vst [vmem:[#allocation2 + $0x5f0] sm:$0xff] 0.0
          %464 = vst [vmem:[#allocation2 + $0x5f8] sm:$0xff] 0.0
        $region44: #{tpu_custom_call.1} parent=31 // pred_fallthru
          _
        %v465 = vld [vmem:[#allocation2] sm:$0xff]
        %v466 = vld [vmem:[#allocation2 + $0x8] sm:$0xff]
        %v467 = vld [vmem:[#allocation2 + $0x10] sm:$0xff]
        %v468 = vld [vmem:[#allocation2 + $0x18] sm:$0xff]
        %v469 = vld [vmem:[#allocation2 + $0x20] sm:$0xff]
        %v470 = vld [vmem:[#allocation2 + $0x28] sm:$0xff]
        %v471 = vld [vmem:[#allocation2 + $0x30] sm:$0xff]
        %v472 = vld [vmem:[#allocation2 + $0x38] sm:$0xff]
        %v473 = vld [vmem:[#allocation2 + $0x40] sm:$0xff]
        %v474 = vld [vmem:[#allocation2 + $0x48] sm:$0xff]
        %v475 = vld [vmem:[#allocation2 + $0x50] sm:$0xff]
        %v476 = vld [vmem:[#allocation2 + $0x58] sm:$0xff]
        %v477 = vld [vmem:[#allocation2 + $0x60] sm:$0xff]
        %v478 = vld [vmem:[#allocation2 + $0x68] sm:$0xff]
        %v479 = vld [vmem:[#allocation2 + $0x70] sm:$0xff]
        %v480 = vld [vmem:[#allocation2 + $0x78] sm:$0xff]
        %v481 = vld [vmem:[#allocation2 + $0x80] sm:$0xff]
        %v482 = vld [vmem:[#allocation2 + $0x88] sm:$0xff]
        %v483 = vld [vmem:[#allocation2 + $0x90] sm:$0xff]
        %v484 = vld [vmem:[#allocation2 + $0x98] sm:$0xff]
        %v485 = vld [vmem:[#allocation2 + $0xa0] sm:$0xff]
        %v486 = vld [vmem:[#allocation2 + $0xa8] sm:$0xff]
        %v487 = vld [vmem:[#allocation2 + $0xb0] sm:$0xff]
        %v488 = vld [vmem:[#allocation2 + $0xb8] sm:$0xff]
        %v489 = vld [vmem:[#allocation2 + $0xc0] sm:$0xff]
        %v490 = vld [vmem:[#allocation2 + $0xc8] sm:$0xff]
        %v491 = vld [vmem:[#allocation2 + $0xd0] sm:$0xff]
        %v492 = vld [vmem:[#allocation2 + $0xd8] sm:$0xff]
        %v493 = vld [vmem:[#allocation2 + $0xe0] sm:$0xff]
        %v494 = vld [vmem:[#allocation2 + $0xe8] sm:$0xff]
        %v495 = vld [vmem:[#allocation2 + $0xf0] sm:$0xff]
        %v496 = vld [vmem:[#allocation2 + $0xf8] sm:$0xff]
        %v497 = vld [vmem:[#allocation2 + $0x100] sm:$0xff]
        %v498 = vld [vmem:[#allocation2 + $0x108] sm:$0xff]
        %v499 = vld [vmem:[#allocation2 + $0x110] sm:$0xff]
        %v500 = vld [vmem:[#allocation2 + $0x118] sm:$0xff]
        %v501 = vld [vmem:[#allocation2 + $0x120] sm:$0xff]
        %v502 = vld [vmem:[#allocation2 + $0x128] sm:$0xff]
        %v503 = vld [vmem:[#allocation2 + $0x130] sm:$0xff]
        %v504 = vld [vmem:[#allocation2 + $0x138] sm:$0xff]
        %v505 = vld [vmem:[#allocation2 + $0x140] sm:$0xff]
        %v506 = vld [vmem:[#allocation2 + $0x148] sm:$0xff]
        %v507 = vld [vmem:[#allocation2 + $0x150] sm:$0xff]
        %v508 = vld [vmem:[#allocation2 + $0x158] sm:$0xff]
        %v509 = vld [vmem:[#allocation2 + $0x160] sm:$0xff]
        %v510 = vld [vmem:[#allocation2 + $0x168] sm:$0xff]
        %v511 = vld [vmem:[#allocation2 + $0x170] sm:$0xff]
        %v512 = vld [vmem:[#allocation2 + $0x178] sm:$0xff]
        %v513 = vld [vmem:[#allocation2 + $0x180] sm:$0xff]
        %v514 = vld [vmem:[#allocation2 + $0x188] sm:$0xff]
        %v515 = vld [vmem:[#allocation2 + $0x190] sm:$0xff]
        %v516 = vld [vmem:[#allocation2 + $0x198] sm:$0xff]
        %v517 = vld [vmem:[#allocation2 + $0x1a0] sm:$0xff]
        %v518 = vld [vmem:[#allocation2 + $0x1a8] sm:$0xff]
        %v519 = vld [vmem:[#allocation2 + $0x1b0] sm:$0xff]
        %v520 = vld [vmem:[#allocation2 + $0x1b8] sm:$0xff]
        %v521 = vld [vmem:[#allocation2 + $0x1c0] sm:$0xff]
        %v522 = vld [vmem:[#allocation2 + $0x1c8] sm:$0xff]
        %v523 = vld [vmem:[#allocation2 + $0x1d0] sm:$0xff]
        %v524 = vld [vmem:[#allocation2 + $0x1d8] sm:$0xff]
        %v525 = vld [vmem:[#allocation2 + $0x1e0] sm:$0xff]
        %v526 = vld [vmem:[#allocation2 + $0x1e8] sm:$0xff]
        %v527 = vld [vmem:[#allocation2 + $0x1f0] sm:$0xff]
        %v528 = vld [vmem:[#allocation2 + $0x1f8] sm:$0xff]
        %v529 = vld [vmem:[#allocation2 + $0x200] sm:$0xff]
        %v530 = vld [vmem:[#allocation2 + $0x208] sm:$0xff]
        %v531 = vld [vmem:[#allocation2 + $0x210] sm:$0xff]
        %v532 = vld [vmem:[#allocation2 + $0x218] sm:$0xff]
        %v533 = vld [vmem:[#allocation2 + $0x220] sm:$0xff]
        %v534 = vld [vmem:[#allocation2 + $0x228] sm:$0xff]
        %v535 = vld [vmem:[#allocation2 + $0x230] sm:$0xff]
        %v536 = vld [vmem:[#allocation2 + $0x238] sm:$0xff]
        %v537 = vld [vmem:[#allocation2 + $0x240] sm:$0xff]
        %v538 = vld [vmem:[#allocation2 + $0x248] sm:$0xff]
        %v539 = vld [vmem:[#allocation2 + $0x250] sm:$0xff]
        %v540 = vld [vmem:[#allocation2 + $0x258] sm:$0xff]
        %v541 = vld [vmem:[#allocation2 + $0x260] sm:$0xff]
        %v542 = vld [vmem:[#allocation2 + $0x268] sm:$0xff]
        %v543 = vld [vmem:[#allocation2 + $0x270] sm:$0xff]
        %v544 = vld [vmem:[#allocation2 + $0x278] sm:$0xff]
        %v545 = vld [vmem:[#allocation2 + $0x280] sm:$0xff]
        %v546 = vld [vmem:[#allocation2 + $0x288] sm:$0xff]
        %v547 = vld [vmem:[#allocation2 + $0x290] sm:$0xff]
        %v548 = vld [vmem:[#allocation2 + $0x298] sm:$0xff]
        %v549 = vld [vmem:[#allocation2 + $0x2a0] sm:$0xff]
        %v550 = vld [vmem:[#allocation2 + $0x2a8] sm:$0xff]
        %v551 = vld [vmem:[#allocation2 + $0x2b0] sm:$0xff]
        %v552 = vld [vmem:[#allocation2 + $0x2b8] sm:$0xff]
        %v553 = vld [vmem:[#allocation2 + $0x2c0] sm:$0xff]
        %v554 = vld [vmem:[#allocation2 + $0x2c8] sm:$0xff]
        %v555 = vld [vmem:[#allocation2 + $0x2d0] sm:$0xff]
        %v556 = vld [vmem:[#allocation2 + $0x2d8] sm:$0xff]
        %v557 = vld [vmem:[#allocation2 + $0x2e0] sm:$0xff]
        %v558 = vld [vmem:[#allocation2 + $0x2e8] sm:$0xff]
        %v559 = vld [vmem:[#allocation2 + $0x2f0] sm:$0xff]
        %v560 = vld [vmem:[#allocation2 + $0x2f8] sm:$0xff]
        %v561 = vld [vmem:[#allocation2 + $0x300] sm:$0xff]
        %v562 = vld [vmem:[#allocation2 + $0x308] sm:$0xff]
        %v563 = vld [vmem:[#allocation2 + $0x310] sm:$0xff]
        %v564 = vld [vmem:[#allocation2 + $0x318] sm:$0xff]
        %v565 = vld [vmem:[#allocation2 + $0x320] sm:$0xff]
        %v566 = vld [vmem:[#allocation2 + $0x328] sm:$0xff]
        %v567 = vld [vmem:[#allocation2 + $0x330] sm:$0xff]
        %v568 = vld [vmem:[#allocation2 + $0x338] sm:$0xff]
        %v569 = vld [vmem:[#allocation2 + $0x340] sm:$0xff]
        %v570 = vld [vmem:[#allocation2 + $0x348] sm:$0xff]
        %v571 = vld [vmem:[#allocation2 + $0x350] sm:$0xff]
        %v572 = vld [vmem:[#allocation2 + $0x358] sm:$0xff]
        %v573 = vld [vmem:[#allocation2 + $0x360] sm:$0xff]
        %v574 = vld [vmem:[#allocation2 + $0x368] sm:$0xff]
        %v575 = vld [vmem:[#allocation2 + $0x370] sm:$0xff]
        %v576 = vld [vmem:[#allocation2 + $0x378] sm:$0xff]
        %v577 = vld [vmem:[#allocation2 + $0x380] sm:$0xff]
        %v578 = vld [vmem:[#allocation2 + $0x388] sm:$0xff]
        %v579 = vld [vmem:[#allocation2 + $0x390] sm:$0xff]
        %v580 = vld [vmem:[#allocation2 + $0x398] sm:$0xff]
        %v581 = vld [vmem:[#allocation2 + $0x3a0] sm:$0xff]
        %v582 = vld [vmem:[#allocation2 + $0x3a8] sm:$0xff]
        %v583 = vld [vmem:[#allocation2 + $0x3b0] sm:$0xff]
        %v584 = vld [vmem:[#allocation2 + $0x3b8] sm:$0xff]
        %v585 = vld [vmem:[#allocation2 + $0x3c0] sm:$0xff]
        %v586 = vld [vmem:[#allocation2 + $0x3c8] sm:$0xff]
        %v587 = vld [vmem:[#allocation2 + $0x3d0] sm:$0xff]
        %v588 = vld [vmem:[#allocation2 + $0x3d8] sm:$0xff]
        %v589 = vld [vmem:[#allocation2 + $0x3e0] sm:$0xff]
        %v590 = vld [vmem:[#allocation2 + $0x3e8] sm:$0xff]
        %v591 = vld [vmem:[#allocation2 + $0x3f0] sm:$0xff]
        %v592 = vld [vmem:[#allocation2 + $0x3f8] sm:$0xff]
        %v593 = vld [vmem:[#allocation2 + $0x400] sm:$0xff]
        %v594 = vld [vmem:[#allocation2 + $0x408] sm:$0xff]
        %v595 = vld [vmem:[#allocation2 + $0x410] sm:$0xff]
        %v596 = vld [vmem:[#allocation2 + $0x418] sm:$0xff]
        %v597 = vld [vmem:[#allocation2 + $0x420] sm:$0xff]
        %v598 = vld [vmem:[#allocation2 + $0x428] sm:$0xff]
        %v599 = vld [vmem:[#allocation2 + $0x430] sm:$0xff]
        %v600 = vld [vmem:[#allocation2 + $0x438] sm:$0xff]
        %v601 = vld [vmem:[#allocation2 + $0x440] sm:$0xff]
        %v602 = vld [vmem:[#allocation2 + $0x448] sm:$0xff]
        %v603 = vld [vmem:[#allocation2 + $0x450] sm:$0xff]
        %v604 = vld [vmem:[#allocation2 + $0x458] sm:$0xff]
        %v605 = vld [vmem:[#allocation2 + $0x460] sm:$0xff]
        %v606 = vld [vmem:[#allocation2 + $0x468] sm:$0xff]
        %v607 = vld [vmem:[#allocation2 + $0x470] sm:$0xff]
        %v608 = vld [vmem:[#allocation2 + $0x478] sm:$0xff]
        %v609 = vld [vmem:[#allocation2 + $0x480] sm:$0xff]
        %v610 = vld [vmem:[#allocation2 + $0x488] sm:$0xff]
        %v611 = vld [vmem:[#allocation2 + $0x490] sm:$0xff]
        %v612 = vld [vmem:[#allocation2 + $0x498] sm:$0xff]
        %v613 = vld [vmem:[#allocation2 + $0x4a0] sm:$0xff]
        %v614 = vld [vmem:[#allocation2 + $0x4a8] sm:$0xff]
        %v615 = vld [vmem:[#allocation2 + $0x4b0] sm:$0xff]
        %v616 = vld [vmem:[#allocation2 + $0x4b8] sm:$0xff]
        %v617 = vld [vmem:[#allocation2 + $0x4c0] sm:$0xff]
        %v618 = vld [vmem:[#allocation2 + $0x4c8] sm:$0xff]
        %v619 = vld [vmem:[#allocation2 + $0x4d0] sm:$0xff]
        %v620 = vld [vmem:[#allocation2 + $0x4d8] sm:$0xff]
        %v621 = vld [vmem:[#allocation2 + $0x4e0] sm:$0xff]
        %v622 = vld [vmem:[#allocation2 + $0x4e8] sm:$0xff]
        %v623 = vld [vmem:[#allocation2 + $0x4f0] sm:$0xff]
        %v624 = vld [vmem:[#allocation2 + $0x4f8] sm:$0xff]
        %v625 = vld [vmem:[#allocation2 + $0x500] sm:$0xff]
        %v626 = vld [vmem:[#allocation2 + $0x508] sm:$0xff]
        %v627 = vld [vmem:[#allocation2 + $0x510] sm:$0xff]
        %v628 = vld [vmem:[#allocation2 + $0x518] sm:$0xff]
        %v629 = vld [vmem:[#allocation2 + $0x520] sm:$0xff]
        %v630 = vld [vmem:[#allocation2 + $0x528] sm:$0xff]
        %v631 = vld [vmem:[#allocation2 + $0x530] sm:$0xff]
        %v632 = vld [vmem:[#allocation2 + $0x538] sm:$0xff]
        %v633 = vld [vmem:[#allocation2 + $0x540] sm:$0xff]
        %v634 = vld [vmem:[#allocation2 + $0x548] sm:$0xff]
        %v635 = vld [vmem:[#allocation2 + $0x550] sm:$0xff]
        %v636 = vld [vmem:[#allocation2 + $0x558] sm:$0xff]
        %v637 = vld [vmem:[#allocation2 + $0x560] sm:$0xff]
        %v638 = vld [vmem:[#allocation2 + $0x568] sm:$0xff]
        %v639 = vld [vmem:[#allocation2 + $0x570] sm:$0xff]
        %v640 = vld [vmem:[#allocation2 + $0x578] sm:$0xff]
        %v641 = vld [vmem:[#allocation2 + $0x580] sm:$0xff]
        %v642 = vld [vmem:[#allocation2 + $0x588] sm:$0xff]
        %v643 = vld [vmem:[#allocation2 + $0x590] sm:$0xff]
        %v644 = vld [vmem:[#allocation2 + $0x598] sm:$0xff]
        %v645 = vld [vmem:[#allocation2 + $0x5a0] sm:$0xff]
        %v646 = vld [vmem:[#allocation2 + $0x5a8] sm:$0xff]
        %v647 = vld [vmem:[#allocation2 + $0x5b0] sm:$0xff]
        %v648 = vld [vmem:[#allocation2 + $0x5b8] sm:$0xff]
        %v649 = vld [vmem:[#allocation2 + $0x5c0] sm:$0xff]
        %v650 = vld [vmem:[#allocation2 + $0x5c8] sm:$0xff]
        %v651 = vld [vmem:[#allocation2 + $0x5d0] sm:$0xff]
        %v652 = vld [vmem:[#allocation2 + $0x5d8] sm:$0xff]
        %v653 = vld [vmem:[#allocation2 + $0x5e0] sm:$0xff]
        %v654 = vld [vmem:[#allocation2 + $0x5e8] sm:$0xff]
        %v655 = vld [vmem:[#allocation2 + $0x5f0] sm:$0xff]
        %v656 = vld [vmem:[#allocation2 + $0x5f8] sm:$0xff]
        %v657 = vld [vmem:[#allocation3] sm:$0xff]
        %v658 = vld [vmem:[#allocation3 + $0x8] sm:$0xff]
        %v659 = vld [vmem:[#allocation3 + $0x10] sm:$0xff]
        %v660 = vld [vmem:[#allocation3 + $0x18] sm:$0xff]
        %v661 = vld [vmem:[#allocation3 + $0x20] sm:$0xff]
        %v662 = vld [vmem:[#allocation3 + $0x28] sm:$0xff]
        %v663 = vld [vmem:[#allocation3 + $0x30] sm:$0xff]
        %v664 = vld [vmem:[#allocation3 + $0x38] sm:$0xff]
        %v665 = vld [vmem:[#allocation3 + $0x40] sm:$0xff]
        %v666 = vld [vmem:[#allocation3 + $0x48] sm:$0xff]
        %v667 = vld [vmem:[#allocation3 + $0x50] sm:$0xff]
        %v668 = vld [vmem:[#allocation3 + $0x58] sm:$0xff]
        %v669 = vld [vmem:[#allocation3 + $0x60] sm:$0xff]
        %v670 = vld [vmem:[#allocation3 + $0x68] sm:$0xff]
        %v671 = vld [vmem:[#allocation3 + $0x70] sm:$0xff]
        %v672 = vld [vmem:[#allocation3 + $0x78] sm:$0xff]
        %v673 = vld [vmem:[#allocation3 + $0x80] sm:$0xff]
        %v674 = vld [vmem:[#allocation3 + $0x88] sm:$0xff]
        %v675 = vld [vmem:[#allocation3 + $0x90] sm:$0xff]
        %v676 = vld [vmem:[#allocation3 + $0x98] sm:$0xff]
        %v677 = vld [vmem:[#allocation3 + $0xa0] sm:$0xff]
        %v678 = vld [vmem:[#allocation3 + $0xa8] sm:$0xff]
        %v679 = vld [vmem:[#allocation3 + $0xb0] sm:$0xff]
        %v680 = vld [vmem:[#allocation3 + $0xb8] sm:$0xff]
        %v681 = vld [vmem:[#allocation3 + $0xc0] sm:$0xff]
        %v682 = vld [vmem:[#allocation3 + $0xc8] sm:$0xff]
        %v683 = vld [vmem:[#allocation3 + $0xd0] sm:$0xff]
        %v684 = vld [vmem:[#allocation3 + $0xd8] sm:$0xff]
        %v685 = vld [vmem:[#allocation3 + $0xe0] sm:$0xff]
        %v686 = vld [vmem:[#allocation3 + $0xe8] sm:$0xff]
        %v687 = vld [vmem:[#allocation3 + $0xf0] sm:$0xff]
        %v688 = vld [vmem:[#allocation3 + $0xf8] sm:$0xff]
        %v689 = vld [vmem:[#allocation3 + $0x100] sm:$0xff]
        %v690 = vld [vmem:[#allocation3 + $0x108] sm:$0xff]
        %v691 = vld [vmem:[#allocation3 + $0x110] sm:$0xff]
        %v692 = vld [vmem:[#allocation3 + $0x118] sm:$0xff]
        %v693 = vld [vmem:[#allocation3 + $0x120] sm:$0xff]
        %v694 = vld [vmem:[#allocation3 + $0x128] sm:$0xff]
        %v695 = vld [vmem:[#allocation3 + $0x130] sm:$0xff]
        %v696 = vld [vmem:[#allocation3 + $0x138] sm:$0xff]
        %v697 = vld [vmem:[#allocation3 + $0x140] sm:$0xff]
        %v698 = vld [vmem:[#allocation3 + $0x148] sm:$0xff]
        %v699 = vld [vmem:[#allocation3 + $0x150] sm:$0xff]
        %v700 = vld [vmem:[#allocation3 + $0x158] sm:$0xff]
        %v701 = vld [vmem:[#allocation3 + $0x160] sm:$0xff]
        %v702 = vld [vmem:[#allocation3 + $0x168] sm:$0xff]
        %v703 = vld [vmem:[#allocation3 + $0x170] sm:$0xff]
        %v704 = vld [vmem:[#allocation3 + $0x178] sm:$0xff]
        %v705 = vld [vmem:[#allocation3 + $0x180] sm:$0xff]
        %v706 = vld [vmem:[#allocation3 + $0x188] sm:$0xff]
        %v707 = vld [vmem:[#allocation3 + $0x190] sm:$0xff]
        %v708 = vld [vmem:[#allocation3 + $0x198] sm:$0xff]
        %v709 = vld [vmem:[#allocation3 + $0x1a0] sm:$0xff]
        %v710 = vld [vmem:[#allocation3 + $0x1a8] sm:$0xff]
        %v711 = vld [vmem:[#allocation3 + $0x1b0] sm:$0xff]
        %v712 = vld [vmem:[#allocation3 + $0x1b8] sm:$0xff]
        %v713 = vld [vmem:[#allocation3 + $0x1c0] sm:$0xff]
        %v714 = vld [vmem:[#allocation3 + $0x1c8] sm:$0xff]
        %v715 = vld [vmem:[#allocation3 + $0x1d0] sm:$0xff]
        %v716 = vld [vmem:[#allocation3 + $0x1d8] sm:$0xff]
        %v717 = vld [vmem:[#allocation3 + $0x1e0] sm:$0xff]
        %v718 = vld [vmem:[#allocation3 + $0x1e8] sm:$0xff]
        %v719 = vld [vmem:[#allocation3 + $0x1f0] sm:$0xff]
        %v720 = vld [vmem:[#allocation3 + $0x1f8] sm:$0xff]
        %v721 = vld [vmem:[%s230] sm:$0xff]
        %v722 = vld [vmem:[%s230 + $0x8] sm:$0xf]
        %v723 = vld [vmem:[%s230 + $0xc] sm:$0xff]
        %v724 = vld [vmem:[%s230 + $0x14] sm:$0xf]
        %v725 = vld [vmem:[%s230 + $0x18] sm:$0xff]
        %v726 = vld [vmem:[%s230 + $0x20] sm:$0xf]
        %v727 = vld [vmem:[%s230 + $0x24] sm:$0xff]
        %v728 = vld [vmem:[%s230 + $0x2c] sm:$0xf]
        %v729 = vld [vmem:[%s230 + $0x30] sm:$0xff]
        %v730 = vld [vmem:[%s230 + $0x38] sm:$0xf]
        %v731 = vld [vmem:[%s230 + $0x3c] sm:$0xff]
        %v732 = vld [vmem:[%s230 + $0x44] sm:$0xf]
        %v733 = vld [vmem:[%s230 + $0x48] sm:$0xff]
        %v734 = vld [vmem:[%s230 + $0x50] sm:$0xf]
        %v735 = vld [vmem:[%s230 + $0x54] sm:$0xff]
        %v736 = vld [vmem:[%s230 + $0x5c] sm:$0xf]
        %v737 = vld [vmem:[%s230 + $0x60] sm:$0xff]
        %v738 = vld [vmem:[%s230 + $0x68] sm:$0xf]
        %v739 = vld [vmem:[%s230 + $0x6c] sm:$0xff]
        %v740 = vld [vmem:[%s230 + $0x74] sm:$0xf]
        %v741 = vld [vmem:[%s230 + $0x78] sm:$0xff]
        %v742 = vld [vmem:[%s230 + $0x80] sm:$0xf]
        %v743 = vld [vmem:[%s230 + $0x84] sm:$0xff]
        %v744 = vld [vmem:[%s230 + $0x8c] sm:$0xf]
        %v745 = vld [vmem:[%s230 + $0x90] sm:$0xff]
        %v746 = vld [vmem:[%s230 + $0x98] sm:$0xf]
        %v747 = vld [vmem:[%s230 + $0x9c] sm:$0xff]
        %v748 = vld [vmem:[%s230 + $0xa4] sm:$0xf]
        %v749 = vld [vmem:[%s230 + $0xa8] sm:$0xff]
        %v750 = vld [vmem:[%s230 + $0xb0] sm:$0xf]
        %v751 = vld [vmem:[%s230 + $0xb4] sm:$0xff]
        %v752 = vld [vmem:[%s230 + $0xbc] sm:$0xf]
        %v753 = vld [vmem:[%s230 + $0xc0] sm:$0xff]
        %v754 = vld [vmem:[%s230 + $0xc8] sm:$0xf]
        %v755 = vld [vmem:[%s230 + $0xcc] sm:$0xff]
        %v756 = vld [vmem:[%s230 + $0xd4] sm:$0xf]
        %v757 = vld [vmem:[%s230 + $0xd8] sm:$0xff]
        %v758 = vld [vmem:[%s230 + $0xe0] sm:$0xf]
        %v759 = vld [vmem:[%s230 + $0xe4] sm:$0xff]
        %v760 = vld [vmem:[%s230 + $0xec] sm:$0xf]
        %v761 = vld [vmem:[%s230 + $0xf0] sm:$0xff]
        %v762 = vld [vmem:[%s230 + $0xf8] sm:$0xf]
        %v763 = vld [vmem:[%s230 + $0xfc] sm:$0xff]
        %v764 = vld [vmem:[%s230 + $0x104] sm:$0xf]
        %v765 = vld [vmem:[%s230 + $0x108] sm:$0xff]
        %v766 = vld [vmem:[%s230 + $0x110] sm:$0xf]
        %v767 = vld [vmem:[%s230 + $0x114] sm:$0xff]
        %v768 = vld [vmem:[%s230 + $0x11c] sm:$0xf]
        %v769 = vld [vmem:[%s230 + $0x120] sm:$0xff]
        %v770 = vld [vmem:[%s230 + $0x128] sm:$0xf]
        %v771 = vld [vmem:[%s230 + $0x12c] sm:$0xff]
        %v772 = vld [vmem:[%s230 + $0x134] sm:$0xf]
        %v773 = vld [vmem:[%s230 + $0x138] sm:$0xff]
        %v774 = vld [vmem:[%s230 + $0x140] sm:$0xf]
        %v775 = vld [vmem:[%s230 + $0x144] sm:$0xff]
        %v776 = vld [vmem:[%s230 + $0x14c] sm:$0xf]
        %v777 = vld [vmem:[%s230 + $0x150] sm:$0xff]
        %v778 = vld [vmem:[%s230 + $0x158] sm:$0xf]
        %v779 = vld [vmem:[%s230 + $0x15c] sm:$0xff]
        %v780 = vld [vmem:[%s230 + $0x164] sm:$0xf]
        %v781 = vld [vmem:[%s230 + $0x168] sm:$0xff]
        %v782 = vld [vmem:[%s230 + $0x170] sm:$0xf]
        %v783 = vld [vmem:[%s230 + $0x174] sm:$0xff]
        %v784 = vld [vmem:[%s230 + $0x17c] sm:$0xf]
        %v849 = vunpack.c.l.b16 %v657
        %v850 = vunpack.c.h.b16 %v657
        %v851 = vunpack.c.l.b16 %v658
        %v852 = vunpack.c.h.b16 %v658
        %v853 = vunpack.c.l.b16 %v659
        %v854 = vunpack.c.h.b16 %v659
        %v855 = vunpack.c.l.b16 %v660
        %v856 = vunpack.c.h.b16 %v660
        %v857 = vunpack.c.l.b16 %v661
        %v858 = vunpack.c.h.b16 %v661
        %v859 = vunpack.c.l.b16 %v662
        %v860 = vunpack.c.h.b16 %v662
        %v861 = vunpack.c.l.b16 %v663
        %v862 = vunpack.c.h.b16 %v663
        %v863 = vunpack.c.l.b16 %v664
        %v864 = vunpack.c.h.b16 %v664
        %v865 = vunpack.c.l.b16 %v665
        %v866 = vunpack.c.h.b16 %v665
        %v867 = vunpack.c.l.b16 %v666
        %v868 = vunpack.c.h.b16 %v666
        %v869 = vunpack.c.l.b16 %v667
        %v870 = vunpack.c.h.b16 %v667
        %v871 = vunpack.c.l.b16 %v668
        %v872 = vunpack.c.h.b16 %v668
        %v873 = vunpack.c.l.b16 %v669
        %v874 = vunpack.c.h.b16 %v669
        %v875 = vunpack.c.l.b16 %v670
        %v876 = vunpack.c.h.b16 %v670
        %v877 = vunpack.c.l.b16 %v671
        %v878 = vunpack.c.h.b16 %v671
        %v879 = vunpack.c.l.b16 %v672
        %v880 = vunpack.c.h.b16 %v672
        %v881 = vunpack.c.l.b16 %v673
        %v882 = vunpack.c.h.b16 %v673
        %v883 = vunpack.c.l.b16 %v674
        %v884 = vunpack.c.h.b16 %v674
        %v885 = vunpack.c.l.b16 %v675
        %v886 = vunpack.c.h.b16 %v675
        %v887 = vunpack.c.l.b16 %v676
        %v888 = vunpack.c.h.b16 %v676
        %v889 = vunpack.c.l.b16 %v677
        %v890 = vunpack.c.h.b16 %v677
        %v891 = vunpack.c.l.b16 %v678
        %v892 = vunpack.c.h.b16 %v678
        %v893 = vunpack.c.l.b16 %v679
        %v894 = vunpack.c.h.b16 %v679
        %v895 = vunpack.c.l.b16 %v680
        %v896 = vunpack.c.h.b16 %v680
        %v897 = vunpack.c.l.b16 %v681
        %v898 = vunpack.c.h.b16 %v681
        %v899 = vunpack.c.l.b16 %v682
        %v900 = vunpack.c.h.b16 %v682
        %v901 = vunpack.c.l.b16 %v683
        %v902 = vunpack.c.h.b16 %v683
        %v903 = vunpack.c.l.b16 %v684
        %v904 = vunpack.c.h.b16 %v684
        %v905 = vunpack.c.l.b16 %v685
        %v906 = vunpack.c.h.b16 %v685
        %v907 = vunpack.c.l.b16 %v686
        %v908 = vunpack.c.h.b16 %v686
        %v909 = vunpack.c.l.b16 %v687
        %v910 = vunpack.c.h.b16 %v687
        %v911 = vunpack.c.l.b16 %v688
        %v912 = vunpack.c.h.b16 %v688
        %v913 = vunpack.c.l.b16 %v689
        %v914 = vunpack.c.h.b16 %v689
        %v915 = vunpack.c.l.b16 %v690
        %v916 = vunpack.c.h.b16 %v690
        %v917 = vunpack.c.l.b16 %v691
        %v918 = vunpack.c.h.b16 %v691
        %v919 = vunpack.c.l.b16 %v692
        %v920 = vunpack.c.h.b16 %v692
        %v921 = vunpack.c.l.b16 %v693
        %v922 = vunpack.c.h.b16 %v693
        %v923 = vunpack.c.l.b16 %v694
        %v924 = vunpack.c.h.b16 %v694
        %v925 = vunpack.c.l.b16 %v695
        %v926 = vunpack.c.h.b16 %v695
        %v927 = vunpack.c.l.b16 %v696
        %v928 = vunpack.c.h.b16 %v696
        %v929 = vunpack.c.l.b16 %v697
        %v930 = vunpack.c.h.b16 %v697
        %v931 = vunpack.c.l.b16 %v698
        %v932 = vunpack.c.h.b16 %v698
        %v933 = vunpack.c.l.b16 %v699
        %v934 = vunpack.c.h.b16 %v699
        %v935 = vunpack.c.l.b16 %v700
        %v936 = vunpack.c.h.b16 %v700
        %v937 = vunpack.c.l.b16 %v701
        %v938 = vunpack.c.h.b16 %v701
        %v939 = vunpack.c.l.b16 %v702
        %v940 = vunpack.c.h.b16 %v702
        %v941 = vunpack.c.l.b16 %v703
        %v942 = vunpack.c.h.b16 %v703
        %v943 = vunpack.c.l.b16 %v704
        %v944 = vunpack.c.h.b16 %v704
        %v945 = vunpack.c.l.b16 %v705
        %v946 = vunpack.c.h.b16 %v705
        %v947 = vunpack.c.l.b16 %v706
        %v948 = vunpack.c.h.b16 %v706
        %v949 = vunpack.c.l.b16 %v707
        %v950 = vunpack.c.h.b16 %v707
        %v951 = vunpack.c.l.b16 %v708
        %v952 = vunpack.c.h.b16 %v708
        %v953 = vunpack.c.l.b16 %v709
        %v954 = vunpack.c.h.b16 %v709
        %v955 = vunpack.c.l.b16 %v710
        %v956 = vunpack.c.h.b16 %v710
        %v957 = vunpack.c.l.b16 %v711
        %v958 = vunpack.c.h.b16 %v711
        %v959 = vunpack.c.l.b16 %v712
        %v960 = vunpack.c.h.b16 %v712
        %v961 = vunpack.c.l.b16 %v713
        %v962 = vunpack.c.h.b16 %v713
        %v963 = vunpack.c.l.b16 %v714
        %v964 = vunpack.c.h.b16 %v714
        %v965 = vunpack.c.l.b16 %v715
        %v966 = vunpack.c.h.b16 %v715
        %v967 = vunpack.c.l.b16 %v716
        %v968 = vunpack.c.h.b16 %v716
        %v969 = vunpack.c.l.b16 %v717
        %v970 = vunpack.c.h.b16 %v717
        %v971 = vunpack.c.l.b16 %v718
        %v972 = vunpack.c.h.b16 %v718
        %v973 = vunpack.c.l.b16 %v719
        %v974 = vunpack.c.h.b16 %v719
        %v975 = vunpack.c.l.b16 %v720
        %v976 = vunpack.c.h.b16 %v720
        %v977 = vpack.c.b16 %v851, %v849
        %v978 = vpack.c.b16 %v852, %v850
        %v979 = vpack.c.b16 %v855, %v853
        %v980 = vpack.c.b16 %v856, %v854
        %v981 = vpack.c.b16 %v859, %v857
        %v982 = vpack.c.b16 %v860, %v858
        %v983 = vpack.c.b16 %v863, %v861
        %v984 = vpack.c.b16 %v864, %v862
        %v985 = vpack.c.b16 %v867, %v865
        %v986 = vpack.c.b16 %v868, %v866
        %v987 = vpack.c.b16 %v871, %v869
        %v988 = vpack.c.b16 %v872, %v870
        %v989 = vpack.c.b16 %v875, %v873
        %v990 = vpack.c.b16 %v876, %v874
        %v991 = vpack.c.b16 %v879, %v877
        %v992 = vpack.c.b16 %v880, %v878
        %v993 = vpack.c.b16 %v883, %v881
        %v994 = vpack.c.b16 %v884, %v882
        %v995 = vpack.c.b16 %v887, %v885
        %v996 = vpack.c.b16 %v888, %v886
        %v997 = vpack.c.b16 %v891, %v889
        %v998 = vpack.c.b16 %v892, %v890
        %v999 = vpack.c.b16 %v895, %v893
        %v1000 = vpack.c.b16 %v896, %v894
        %v1001 = vpack.c.b16 %v899, %v897
        %v1002 = vpack.c.b16 %v900, %v898
        %v1003 = vpack.c.b16 %v903, %v901
        %v1004 = vpack.c.b16 %v904, %v902
        %v1005 = vpack.c.b16 %v907, %v905
        %v1006 = vpack.c.b16 %v908, %v906
        %v1007 = vpack.c.b16 %v911, %v909
        %v1008 = vpack.c.b16 %v912, %v910
        %v1009 = vpack.c.b16 %v915, %v913
        %v1010 = vpack.c.b16 %v916, %v914
        %v1011 = vpack.c.b16 %v919, %v917
        %v1012 = vpack.c.b16 %v920, %v918
        %v1013 = vpack.c.b16 %v923, %v921
        %v1014 = vpack.c.b16 %v924, %v922
        %v1015 = vpack.c.b16 %v927, %v925
        %v1016 = vpack.c.b16 %v928, %v926
        %v1017 = vpack.c.b16 %v931, %v929
        %v1018 = vpack.c.b16 %v932, %v930
        %v1019 = vpack.c.b16 %v935, %v933
        %v1020 = vpack.c.b16 %v936, %v934
        %v1021 = vpack.c.b16 %v939, %v937
        %v1022 = vpack.c.b16 %v940, %v938
        %v1023 = vpack.c.b16 %v943, %v941
        %v1024 = vpack.c.b16 %v944, %v942
        %v1025 = vpack.c.b16 %v947, %v945
        %v1026 = vpack.c.b16 %v948, %v946
        %v1027 = vpack.c.b16 %v951, %v949
        %v1028 = vpack.c.b16 %v952, %v950
        %v1029 = vpack.c.b16 %v955, %v953
        %v1030 = vpack.c.b16 %v956, %v954
        %v1031 = vpack.c.b16 %v959, %v957
        %v1032 = vpack.c.b16 %v960, %v958
        %v1033 = vpack.c.b16 %v963, %v961
        %v1034 = vpack.c.b16 %v964, %v962
        %v1035 = vpack.c.b16 %v967, %v965
        %v1036 = vpack.c.b16 %v968, %v966
        %v1037 = vpack.c.b16 %v971, %v969
        %v1038 = vpack.c.b16 %v972, %v970
        %v1039 = vpack.c.b16 %v975, %v973
        %v1040 = vpack.c.b16 %v976, %v974
        %v1169 = vunpack.c.l.b16 %v721
        %v1170 = vunpack.c.h.b16 %v721
        %v1171 = vunpack.c.l.b16 %v722
        %v1172 = vunpack.c.l.b16 %v723
        %v1173 = vunpack.c.h.b16 %v723
        %v1174 = vunpack.c.l.b16 %v724
        %v1175 = vunpack.c.l.b16 %v725
        %v1176 = vunpack.c.h.b16 %v725
        %v1177 = vunpack.c.l.b16 %v726
        %v1178 = vunpack.c.l.b16 %v727
        %v1179 = vunpack.c.h.b16 %v727
        %v1180 = vunpack.c.l.b16 %v728
        %v1181 = vunpack.c.l.b16 %v729
        %v1182 = vunpack.c.h.b16 %v729
        %v1183 = vunpack.c.l.b16 %v730
        %v1184 = vunpack.c.l.b16 %v731
        %v1185 = vunpack.c.h.b16 %v731
        %v1186 = vunpack.c.l.b16 %v732
        %v1187 = vunpack.c.l.b16 %v733
        %v1188 = vunpack.c.h.b16 %v733
        %v1189 = vunpack.c.l.b16 %v734
        %v1190 = vunpack.c.l.b16 %v735
        %v1191 = vunpack.c.h.b16 %v735
        %v1192 = vunpack.c.l.b16 %v736
        %v1193 = vunpack.c.l.b16 %v737
        %v1194 = vunpack.c.h.b16 %v737
        %v1195 = vunpack.c.l.b16 %v738
        %v1196 = vunpack.c.l.b16 %v739
        %v1197 = vunpack.c.h.b16 %v739
        %v1198 = vunpack.c.l.b16 %v740
        %v1199 = vunpack.c.l.b16 %v741
        %v1200 = vunpack.c.h.b16 %v741
        %v1201 = vunpack.c.l.b16 %v742
        %v1202 = vunpack.c.l.b16 %v743
        %v1203 = vunpack.c.h.b16 %v743
        %v1204 = vunpack.c.l.b16 %v744
        %v1205 = vunpack.c.l.b16 %v745
        %v1206 = vunpack.c.h.b16 %v745
        %v1207 = vunpack.c.l.b16 %v746
        %v1208 = vunpack.c.l.b16 %v747
        %v1209 = vunpack.c.h.b16 %v747
        %v1210 = vunpack.c.l.b16 %v748
        %v1211 = vunpack.c.l.b16 %v749
        %v1212 = vunpack.c.h.b16 %v749
        %v1213 = vunpack.c.l.b16 %v750
        %v1214 = vunpack.c.l.b16 %v751
        %v1215 = vunpack.c.h.b16 %v751
        %v1216 = vunpack.c.l.b16 %v752
        %v1217 = vunpack.c.l.b16 %v753
        %v1218 = vunpack.c.h.b16 %v753
        %v1219 = vunpack.c.l.b16 %v754
        %v1220 = vunpack.c.l.b16 %v755
        %v1221 = vunpack.c.h.b16 %v755
        %v1222 = vunpack.c.l.b16 %v756
        %v1223 = vunpack.c.l.b16 %v757
        %v1224 = vunpack.c.h.b16 %v757
        %v1225 = vunpack.c.l.b16 %v758
        %v1226 = vunpack.c.l.b16 %v759
        %v1227 = vunpack.c.h.b16 %v759
        %v1228 = vunpack.c.l.b16 %v760
        %v1229 = vunpack.c.l.b16 %v761
        %v1230 = vunpack.c.h.b16 %v761
        %v1231 = vunpack.c.l.b16 %v762
        %v1232 = vunpack.c.l.b16 %v763
        %v1233 = vunpack.c.h.b16 %v763
        %v1234 = vunpack.c.l.b16 %v764
        %v1235 = vunpack.c.l.b16 %v765
        %v1236 = vunpack.c.h.b16 %v765
        %v1237 = vunpack.c.l.b16 %v766
        %v1238 = vunpack.c.l.b16 %v767
        %v1239 = vunpack.c.h.b16 %v767
        %v1240 = vunpack.c.l.b16 %v768
        %v1241 = vunpack.c.l.b16 %v769
        %v1242 = vunpack.c.h.b16 %v769
        %v1243 = vunpack.c.l.b16 %v770
        %v1244 = vunpack.c.l.b16 %v771
        %v1245 = vunpack.c.h.b16 %v771
        %v1246 = vunpack.c.l.b16 %v772
        %v1247 = vunpack.c.l.b16 %v773
        %v1248 = vunpack.c.h.b16 %v773
        %v1249 = vunpack.c.l.b16 %v774
        %v1250 = vunpack.c.l.b16 %v775
        %v1251 = vunpack.c.h.b16 %v775
        %v1252 = vunpack.c.l.b16 %v776
        %v1253 = vunpack.c.l.b16 %v777
        %v1254 = vunpack.c.h.b16 %v777
        %v1255 = vunpack.c.l.b16 %v778
        %v1256 = vunpack.c.l.b16 %v779
        %v1257 = vunpack.c.h.b16 %v779
        %v1258 = vunpack.c.l.b16 %v780
        %v1259 = vunpack.c.l.b16 %v781
        %v1260 = vunpack.c.h.b16 %v781
        %v1261 = vunpack.c.l.b16 %v782
        %v1262 = vunpack.c.l.b16 %v783
        %v1263 = vunpack.c.h.b16 %v783
        %v1264 = vunpack.c.l.b16 %v784
        %v1265 = vpack.c.b16 %v1172, %v1169
        %v1266 = vpack.c.b16 %v1173, %v1170
        %v1267 = vpack.c.b16 %v1174, %v1171
        %v1268 = vpack.c.b16 %v1178, %v1175
        %v1269 = vpack.c.b16 %v1179, %v1176
        %v1270 = vpack.c.b16 %v1180, %v1177
        %v1271 = vpack.c.b16 %v1184, %v1181
        %v1272 = vpack.c.b16 %v1185, %v1182
        %v1273 = vpack.c.b16 %v1186, %v1183
        %v1274 = vpack.c.b16 %v1190, %v1187
        %v1275 = vpack.c.b16 %v1191, %v1188
        %v1276 = vpack.c.b16 %v1192, %v1189
        %v1277 = vpack.c.b16 %v1196, %v1193
        %v1278 = vpack.c.b16 %v1197, %v1194
        %v1279 = vpack.c.b16 %v1198, %v1195
        %v1280 = vpack.c.b16 %v1202, %v1199
        %v1281 = vpack.c.b16 %v1203, %v1200
        %v1282 = vpack.c.b16 %v1204, %v1201
        %v1283 = vpack.c.b16 %v1208, %v1205
        %v1284 = vpack.c.b16 %v1209, %v1206
        %v1285 = vpack.c.b16 %v1210, %v1207
        %v1286 = vpack.c.b16 %v1214, %v1211
        %v1287 = vpack.c.b16 %v1215, %v1212
        %v1288 = vpack.c.b16 %v1216, %v1213
        %v1289 = vpack.c.b16 %v1220, %v1217
        %v1290 = vpack.c.b16 %v1221, %v1218
        %v1291 = vpack.c.b16 %v1222, %v1219
        %v1292 = vpack.c.b16 %v1226, %v1223
        %v1293 = vpack.c.b16 %v1227, %v1224
        %v1294 = vpack.c.b16 %v1228, %v1225
        %v1295 = vpack.c.b16 %v1232, %v1229
        %v1296 = vpack.c.b16 %v1233, %v1230
        %v1297 = vpack.c.b16 %v1234, %v1231
        %v1298 = vpack.c.b16 %v1238, %v1235
        %v1299 = vpack.c.b16 %v1239, %v1236
        %v1300 = vpack.c.b16 %v1240, %v1237
        %v1301 = vpack.c.b16 %v1244, %v1241
        %v1302 = vpack.c.b16 %v1245, %v1242
        %v1303 = vpack.c.b16 %v1246, %v1243
        %v1304 = vpack.c.b16 %v1250, %v1247
        %v1305 = vpack.c.b16 %v1251, %v1248
        %v1306 = vpack.c.b16 %v1252, %v1249
        %v1307 = vpack.c.b16 %v1256, %v1253
        %v1308 = vpack.c.b16 %v1257, %v1254
        %v1309 = vpack.c.b16 %v1258, %v1255
        %v1310 = vpack.c.b16 %v1262, %v1259
        %v1311 = vpack.c.b16 %v1263, %v1260
        %v1312 = vpack.c.b16 %v1264, %v1261
        %1361 = vmatprep.subr.bf16.mxu0 %v1266
        %1362 = vmatpush1.bf16.msra.mxu0 %v1265
        %1363 = vmatprep.subr.bf16.mxu0 %v1269
        %1364 = vmatpush1.bf16.msra.mxu0 %v1268
        %1365 = vmatprep.subr.bf16.mxu0 %v1272
        %1366 = vmatpush1.bf16.msra.mxu0 %v1271
        %1367 = vmatprep.subr.bf16.mxu0 %v1275
        %1368 = vmatpush1.bf16.msra.mxu0 %v1274
        %1369 = vmatprep.subr.bf16.mxu0 %v1278
        %1370 = vmatpush1.bf16.msra.mxu0 %v1277
        %1371 = vmatprep.subr.bf16.mxu0 %v1281
        %1372 = vmatpush1.bf16.msra.mxu0 %v1280
        %1373 = vmatprep.subr.bf16.mxu0 %v1284
        %1374 = vmatpush1.bf16.msra.mxu0 %v1283
        %1375 = vmatprep.subr.bf16.mxu0 %v1287
        %1376 = vmatpush1.bf16.msra.mxu0 %v1286
        %1377 = vmatprep.subr.bf16.mxu0 %v1290
        %1378 = vmatpush1.bf16.msra.mxu0 %v1289
        %1379 = vmatprep.subr.bf16.mxu0 %v1293
        %1380 = vmatpush1.bf16.msra.mxu0 %v1292
        %1381 = vmatprep.subr.bf16.mxu0 %v1296
        %1382 = vmatpush1.bf16.msra.mxu0 %v1295
        %1383 = vmatprep.subr.bf16.mxu0 %v1299
        %1384 = vmatpush1.bf16.msra.mxu0 %v1298
        %1385 = vmatprep.subr.bf16.mxu0 %v1302
        %1386 = vmatpush1.bf16.msra.mxu0 %v1301
        %1387 = vmatprep.subr.bf16.mxu0 %v1305
        %1388 = vmatpush1.bf16.msra.mxu0 %v1304
        %1389 = vmatprep.subr.bf16.mxu0 %v1308
        %1390 = vmatpush1.bf16.msra.mxu0 %v1307
        %1391 = vmatprep.subr.bf16.mxu0 %v1311
        %1392 = vmatpush1.bf16.msra.mxu0 %v1310
        %1393 = vmatprep.mubr.bf16.mxu0 %v978
        %1394 = vmatmul.mubr.bf16.gmra.mrb[0].mxu0 %v977
        %v1395 = vpop.f32.mrb[0].mxu0
        %v1396 = vadd.f32 0.0, %v1395
        %v1397 = vpop.f32.mrb[0].mxu0
        %v1398 = vadd.f32 0.0, %v1397
        %v1399 = vpop.f32.mrb[0].mxu0
        %v1400 = vadd.f32 0.0, %v1399
        %v1401 = vpop.f32.mrb[0].mxu0
        %v1402 = vadd.f32 0.0, %v1401
        %1403 = vmatprep.mubr.bf16.mxu0 %v980
        %1404 = vmatmul.mubr.bf16.gmra.mrb[0].mxu0 %v979
        %v1405 = vpop.f32.mrb[0].mxu0
        %v1406 = vadd.f32 0.0, %v1405
        %v1407 = vpop.f32.mrb[0].mxu0
        %v1408 = vadd.f32 0.0, %v1407
        %v1409 = vpop.f32.mrb[0].mxu0
        %v1410 = vadd.f32 0.0, %v1409
        %v1411 = vpop.f32.mrb[0].mxu0
        %v1412 = vadd.f32 0.0, %v1411
        %1413 = vmatprep.mubr.bf16.mxu0 %v982
        %1414 = vmatmul.mubr.bf16.gmra.mrb[0].mxu0 %v981
        %v1415 = vpop.f32.mrb[0].mxu0
        %v1416 = vadd.f32 0.0, %v1415
        %v1417 = vpop.f32.mrb[0].mxu0
        %v1418 = vadd.f32 0.0, %v1417
        %v1419 = vpop.f32.mrb[0].mxu0
        %v1420 = vadd.f32 0.0, %v1419
        %v1421 = vpop.f32.mrb[0].mxu0
        %v1422 = vadd.f32 0.0, %v1421
        %1423 = vmatprep.mubr.bf16.mxu0 %v984
        %1424 = vmatmul.mubr.bf16.gmra.mrb[0].mxu0 %v983
        %v1425 = vpop.f32.mrb[0].mxu0
        %v1426 = vadd.f32 0.0, %v1425
        %v1427 = vpop.f32.mrb[0].mxu0
        %v1428 = vadd.f32 0.0, %v1427
        %v1429 = vpop.f32.mrb[0].mxu0
        %v1430 = vadd.f32 0.0, %v1429
        %v1431 = vpop.f32.mrb[0].mxu0
        %v1432 = vadd.f32 0.0, %v1431
        %1433 = vmatprep.mubr.bf16.mxu0 %v986
        %1434 = vmatmul.mubr.bf16.gmra.mrb[0].mxu0 %v985
        %v1435 = vpop.f32.mrb[0].mxu0
        %v1436 = vadd.f32 0.0, %v1435
        %v1437 = vpop.f32.mrb[0].mxu0
        %v1438 = vadd.f32 0.0, %v1437
        %v1439 = vpop.f32.mrb[0].mxu0
        %v1440 = vadd.f32 0.0, %v1439
        %v1441 = vpop.f32.mrb[0].mxu0
        %v1442 = vadd.f32 0.0, %v1441
        %1443 = vmatprep.mubr.bf16.mxu0 %v988
        %1444 = vmatmul.mubr.bf16.gmra.mrb[0].mxu0 %v987
        %v1445 = vpop.f32.mrb[0].mxu0
        %v1446 = vadd.f32 0.0, %v1445
        %v1447 = vpop.f32.mrb[0].mxu0
        %v1448 = vadd.f32 0.0, %v1447
        %v1449 = vpop.f32.mrb[0].mxu0
        %v1450 = vadd.f32 0.0, %v1449
        %v1451 = vpop.f32.mrb[0].mxu0
        %v1452 = vadd.f32 0.0, %v1451
        %1453 = vmatprep.mubr.bf16.mxu0 %v990
        %1454 = vmatmul.mubr.bf16.gmra.mrb[0].mxu0 %v989
        %v1455 = vpop.f32.mrb[0].mxu0
        %v1456 = vadd.f32 0.0, %v1455
        %v1457 = vpop.f32.mrb[0].mxu0
        %v1458 = vadd.f32 0.0, %v1457
        %v1459 = vpop.f32.mrb[0].mxu0
        %v1460 = vadd.f32 0.0, %v1459
        %v1461 = vpop.f32.mrb[0].mxu0
        %v1462 = vadd.f32 0.0, %v1461
        %1463 = vmatprep.mubr.bf16.mxu0 %v992
        %1464 = vmatmul.mubr.bf16.gmra.mrb[0].mxu0 %v991
        %v1465 = vpop.f32.mrb[0].mxu0
        %v1466 = vadd.f32 0.0, %v1465
        %v1467 = vpop.f32.mrb[0].mxu0
        %v1468 = vadd.f32 0.0, %v1467
        %v1469 = vpop.f32.mrb[0].mxu0
        %v1470 = vadd.f32 0.0, %v1469
        %v1471 = vpop.f32.mrb[0].mxu0
        %v1472 = vadd.f32 0.0, %v1471
        %1473 = vmatprep.mubr.bf16.mxu0 %v994
        %1474 = vmatmul.mubr.bf16.gmra.mrb[0].mxu0 %v993
        %v1475 = vpop.f32.mrb[0].mxu0
        %v1476 = vadd.f32 0.0, %v1475
        %v1477 = vpop.f32.mrb[0].mxu0
        %v1478 = vadd.f32 0.0, %v1477
        %v1479 = vpop.f32.mrb[0].mxu0
        %v1480 = vadd.f32 0.0, %v1479
        %v1481 = vpop.f32.mrb[0].mxu0
        %v1482 = vadd.f32 0.0, %v1481
        %1483 = vmatprep.mubr.bf16.mxu0 %v996
        %1484 = vmatmul.mubr.bf16.gmra.mrb[0].mxu0 %v995
        %v1485 = vpop.f32.mrb[0].mxu0
        %v1486 = vadd.f32 0.0, %v1485
        %v1487 = vpop.f32.mrb[0].mxu0
        %v1488 = vadd.f32 0.0, %v1487
        %v1489 = vpop.f32.mrb[0].mxu0
        %v1490 = vadd.f32 0.0, %v1489
        %v1491 = vpop.f32.mrb[0].mxu0
        %v1492 = vadd.f32 0.0, %v1491
        %1493 = vmatprep.mubr.bf16.mxu0 %v998
        %1494 = vmatmul.mubr.bf16.gmra.mrb[0].mxu0 %v997
        %v1495 = vpop.f32.mrb[0].mxu0
        %v1496 = vadd.f32 0.0, %v1495
        %v1497 = vpop.f32.mrb[0].mxu0
        %v1498 = vadd.f32 0.0, %v1497
        %v1499 = vpop.f32.mrb[0].mxu0
        %v1500 = vadd.f32 0.0, %v1499
        %v1501 = vpop.f32.mrb[0].mxu0
        %v1502 = vadd.f32 0.0, %v1501
        %1503 = vmatprep.mubr.bf16.mxu0 %v1000
        %1504 = vmatmul.mubr.bf16.gmra.mrb[0].mxu0 %v999
        %v1505 = vpop.f32.mrb[0].mxu0
        %v1506 = vadd.f32 0.0, %v1505
        %v1507 = vpop.f32.mrb[0].mxu0
        %v1508 = vadd.f32 0.0, %v1507
        %v1509 = vpop.f32.mrb[0].mxu0
        %v1510 = vadd.f32 0.0, %v1509
        %v1511 = vpop.f32.mrb[0].mxu0
        %v1512 = vadd.f32 0.0, %v1511
        %1513 = vmatprep.mubr.bf16.mxu0 %v1002
        %1514 = vmatmul.mubr.bf16.gmra.mrb[0].mxu0 %v1001
        %v1515 = vpop.f32.mrb[0].mxu0
        %v1516 = vadd.f32 0.0, %v1515
        %v1517 = vpop.f32.mrb[0].mxu0
        %v1518 = vadd.f32 0.0, %v1517
        %v1519 = vpop.f32.mrb[0].mxu0
        %v1520 = vadd.f32 0.0, %v1519
        %v1521 = vpop.f32.mrb[0].mxu0
        %v1522 = vadd.f32 0.0, %v1521
        %1523 = vmatprep.mubr.bf16.mxu0 %v1004
        %1524 = vmatmul.mubr.bf16.gmra.mrb[0].mxu0 %v1003
        %v1525 = vpop.f32.mrb[0].mxu0
        %v1526 = vadd.f32 0.0, %v1525
        %v1527 = vpop.f32.mrb[0].mxu0
        %v1528 = vadd.f32 0.0, %v1527
        %v1529 = vpop.f32.mrb[0].mxu0
        %v1530 = vadd.f32 0.0, %v1529
        %v1531 = vpop.f32.mrb[0].mxu0
        %v1532 = vadd.f32 0.0, %v1531
        %1533 = vmatprep.mubr.bf16.mxu0 %v1006
        %1534 = vmatmul.mubr.bf16.gmra.mrb[0].mxu0 %v1005
        %v1535 = vpop.f32.mrb[0].mxu0
        %v1536 = vadd.f32 0.0, %v1535
        %v1537 = vpop.f32.mrb[0].mxu0
        %v1538 = vadd.f32 0.0, %v1537
        %v1539 = vpop.f32.mrb[0].mxu0
        %v1540 = vadd.f32 0.0, %v1539
        %v1541 = vpop.f32.mrb[0].mxu0
        %v1542 = vadd.f32 0.0, %v1541
        %1543 = vmatprep.mubr.bf16.mxu0 %v1008
        %1544 = vmatmul.mubr.bf16.gmra.mrb[0].mxu0 %v1007
        %v1545 = vpop.f32.mrb[0].mxu0
        %v1546 = vadd.f32 0.0, %v1545
        %v1547 = vpop.f32.mrb[0].mxu0
        %v1548 = vadd.f32 0.0, %v1547
        %v1549 = vpop.f32.mrb[0].mxu0
        %v1550 = vadd.f32 0.0, %v1549
        %v1551 = vpop.f32.mrb[0].mxu0
        %v1552 = vadd.f32 0.0, %v1551
        %1553 = vmatprep.mubr.bf16.mxu0 %v1010
        %1554 = vmatmul.mubr.bf16.gmra.mrb[0].mxu0 %v1009
        %v1555 = vpop.f32.mrb[0].mxu0
        %v1556 = vadd.f32 0.0, %v1555
        %v1557 = vpop.f32.mrb[0].mxu0
        %v1558 = vadd.f32 0.0, %v1557
        %v1559 = vpop.f32.mrb[0].mxu0
        %v1560 = vadd.f32 0.0, %v1559
        %v1561 = vpop.f32.mrb[0].mxu0
        %v1562 = vadd.f32 0.0, %v1561
        %1563 = vmatprep.mubr.bf16.mxu0 %v1012
        %1564 = vmatmul.mubr.bf16.gmra.mrb[0].mxu0 %v1011
        %v1565 = vpop.f32.mrb[0].mxu0
        %v1566 = vadd.f32 0.0, %v1565
        %v1567 = vpop.f32.mrb[0].mxu0
        %v1568 = vadd.f32 0.0, %v1567
        %v1569 = vpop.f32.mrb[0].mxu0
        %v1570 = vadd.f32 0.0, %v1569
        %v1571 = vpop.f32.mrb[0].mxu0
        %v1572 = vadd.f32 0.0, %v1571
        %1573 = vmatprep.mubr.bf16.mxu0 %v1014
        %1574 = vmatmul.mubr.bf16.gmra.mrb[0].mxu0 %v1013
        %v1575 = vpop.f32.mrb[0].mxu0
        %v1576 = vadd.f32 0.0, %v1575
        %v1577 = vpop.f32.mrb[0].mxu0
        %v1578 = vadd.f32 0.0, %v1577
        %v1579 = vpop.f32.mrb[0].mxu0
        %v1580 = vadd.f32 0.0, %v1579
        %v1581 = vpop.f32.mrb[0].mxu0
        %v1582 = vadd.f32 0.0, %v1581
        %1583 = vmatprep.mubr.bf16.mxu0 %v1016
        %1584 = vmatmul.mubr.bf16.gmra.mrb[0].mxu0 %v1015
        %v1585 = vpop.f32.mrb[0].mxu0
        %v1586 = vadd.f32 0.0, %v1585
        %v1587 = vpop.f32.mrb[0].mxu0
        %v1588 = vadd.f32 0.0, %v1587
        %v1589 = vpop.f32.mrb[0].mxu0
        %v1590 = vadd.f32 0.0, %v1589
        %v1591 = vpop.f32.mrb[0].mxu0
        %v1592 = vadd.f32 0.0, %v1591
        %1593 = vmatprep.mubr.bf16.mxu0 %v1018
        %1594 = vmatmul.mubr.bf16.gmra.mrb[0].mxu0 %v1017
        %v1595 = vpop.f32.mrb[0].mxu0
        %v1596 = vadd.f32 0.0, %v1595
        %v1597 = vpop.f32.mrb[0].mxu0
        %v1598 = vadd.f32 0.0, %v1597
        %v1599 = vpop.f32.mrb[0].mxu0
        %v1600 = vadd.f32 0.0, %v1599
        %v1601 = vpop.f32.mrb[0].mxu0
        %v1602 = vadd.f32 0.0, %v1601
        %1603 = vmatprep.mubr.bf16.mxu0 %v1020
        %1604 = vmatmul.mubr.bf16.gmra.mrb[0].mxu0 %v1019
        %v1605 = vpop.f32.mrb[0].mxu0
        %v1606 = vadd.f32 0.0, %v1605
        %v1607 = vpop.f32.mrb[0].mxu0
        %v1608 = vadd.f32 0.0, %v1607
        %v1609 = vpop.f32.mrb[0].mxu0
        %v1610 = vadd.f32 0.0, %v1609
        %v1611 = vpop.f32.mrb[0].mxu0
        %v1612 = vadd.f32 0.0, %v1611
        %1613 = vmatprep.mubr.bf16.mxu0 %v1022
        %1614 = vmatmul.mubr.bf16.gmra.mrb[0].mxu0 %v1021
        %v1615 = vpop.f32.mrb[0].mxu0
        %v1616 = vadd.f32 0.0, %v1615
        %v1617 = vpop.f32.mrb[0].mxu0
        %v1618 = vadd.f32 0.0, %v1617
        %v1619 = vpop.f32.mrb[0].mxu0
        %v1620 = vadd.f32 0.0, %v1619
        %v1621 = vpop.f32.mrb[0].mxu0
        %v1622 = vadd.f32 0.0, %v1621
        %1623 = vmatprep.mubr.bf16.mxu0 %v1024
        %1624 = vmatmul.mubr.bf16.gmra.mrb[0].mxu0 %v1023
        %v1625 = vpop.f32.mrb[0].mxu0
        %v1626 = vadd.f32 0.0, %v1625
        %v1627 = vpop.f32.mrb[0].mxu0
        %v1628 = vadd.f32 0.0, %v1627
        %v1629 = vpop.f32.mrb[0].mxu0
        %v1630 = vadd.f32 0.0, %v1629
        %v1631 = vpop.f32.mrb[0].mxu0
        %v1632 = vadd.f32 0.0, %v1631
        %1633 = vmatprep.mubr.bf16.mxu0 %v1026
        %1634 = vmatmul.mubr.bf16.gmra.mrb[0].mxu0 %v1025
        %v1635 = vpop.f32.mrb[0].mxu0
        %v1636 = vadd.f32 0.0, %v1635
        %v1637 = vpop.f32.mrb[0].mxu0
        %v1638 = vadd.f32 0.0, %v1637
        %v1639 = vpop.f32.mrb[0].mxu0
        %v1640 = vadd.f32 0.0, %v1639
        %v1641 = vpop.f32.mrb[0].mxu0
        %v1642 = vadd.f32 0.0, %v1641
        %1643 = vmatprep.mubr.bf16.mxu0 %v1028
        %1644 = vmatmul.mubr.bf16.gmra.mrb[0].mxu0 %v1027
        %v1645 = vpop.f32.mrb[0].mxu0
        %v1646 = vadd.f32 0.0, %v1645
        %v1647 = vpop.f32.mrb[0].mxu0
        %v1648 = vadd.f32 0.0, %v1647
        %v1649 = vpop.f32.mrb[0].mxu0
        %v1650 = vadd.f32 0.0, %v1649
        %v1651 = vpop.f32.mrb[0].mxu0
        %v1652 = vadd.f32 0.0, %v1651
        %1653 = vmatprep.mubr.bf16.mxu0 %v1030
        %1654 = vmatmul.mubr.bf16.gmra.mrb[0].mxu0 %v1029
        %v1655 = vpop.f32.mrb[0].mxu0
        %v1656 = vadd.f32 0.0, %v1655
        %v1657 = vpop.f32.mrb[0].mxu0
        %v1658 = vadd.f32 0.0, %v1657
        %v1659 = vpop.f32.mrb[0].mxu0
        %v1660 = vadd.f32 0.0, %v1659
        %v1661 = vpop.f32.mrb[0].mxu0
        %v1662 = vadd.f32 0.0, %v1661
        %1663 = vmatprep.mubr.bf16.mxu0 %v1032
        %1664 = vmatmul.mubr.bf16.gmra.mrb[0].mxu0 %v1031
        %v1665 = vpop.f32.mrb[0].mxu0
        %v1666 = vadd.f32 0.0, %v1665
        %v1667 = vpop.f32.mrb[0].mxu0
        %v1668 = vadd.f32 0.0, %v1667
        %v1669 = vpop.f32.mrb[0].mxu0
        %v1670 = vadd.f32 0.0, %v1669
        %v1671 = vpop.f32.mrb[0].mxu0
        %v1672 = vadd.f32 0.0, %v1671
        %1673 = vmatprep.mubr.bf16.mxu0 %v1034
        %1674 = vmatmul.mubr.bf16.gmra.mrb[0].mxu0 %v1033
        %v1675 = vpop.f32.mrb[0].mxu0
        %v1676 = vadd.f32 0.0, %v1675
        %v1677 = vpop.f32.mrb[0].mxu0
        %v1678 = vadd.f32 0.0, %v1677
        %v1679 = vpop.f32.mrb[0].mxu0
        %v1680 = vadd.f32 0.0, %v1679
        %v1681 = vpop.f32.mrb[0].mxu0
        %v1682 = vadd.f32 0.0, %v1681
        %1683 = vmatprep.mubr.bf16.mxu0 %v1036
        %1684 = vmatmul.mubr.bf16.gmra.mrb[0].mxu0 %v1035
        %v1685 = vpop.f32.mrb[0].mxu0
        %v1686 = vadd.f32 0.0, %v1685
        %v1687 = vpop.f32.mrb[0].mxu0
        %v1688 = vadd.f32 0.0, %v1687
        %v1689 = vpop.f32.mrb[0].mxu0
        %v1690 = vadd.f32 0.0, %v1689
        %v1691 = vpop.f32.mrb[0].mxu0
        %v1692 = vadd.f32 0.0, %v1691
        %1693 = vmatprep.mubr.bf16.mxu0 %v1038
        %1694 = vmatmul.mubr.bf16.gmra.mrb[0].mxu0 %v1037
        %v1695 = vpop.f32.mrb[0].mxu0
        %v1696 = vadd.f32 0.0, %v1695
        %v1697 = vpop.f32.mrb[0].mxu0
        %v1698 = vadd.f32 0.0, %v1697
        %v1699 = vpop.f32.mrb[0].mxu0
        %v1700 = vadd.f32 0.0, %v1699
        %v1701 = vpop.f32.mrb[0].mxu0
        %v1702 = vadd.f32 0.0, %v1701
        %1703 = vmatprep.mubr.bf16.mxu0 %v1040
        %1704 = vmatmul.mubr.bf16.gmra.mrb[0].mxu0 %v1039
        %v1705 = vpop.f32.mrb[0].mxu0
        %v1706 = vadd.f32 0.0, %v1705
        %v1707 = vpop.f32.mrb[0].mxu0
        %v1708 = vadd.f32 0.0, %v1707
        %v1709 = vpop.f32.mrb[0].mxu0
        %v1710 = vadd.f32 0.0, %v1709
        %v1711 = vpop.f32.mrb[0].mxu0
        %v1712 = vadd.f32 0.0, %v1711
        %1713 = vdwg.mxu0
        %1714 = vmatprep.subr.bf16.mxu0 0
        %1715 = vmatpush1.bf16.msra.mxu0 %v1267
        %1716 = vmatprep.subr.bf16.mxu0 0
        %1717 = vmatpush1.bf16.msra.mxu0 %v1270
        %1718 = vmatprep.subr.bf16.mxu0 0
        %1719 = vmatpush1.bf16.msra.mxu0 %v1273
        %1720 = vmatprep.subr.bf16.mxu0 0
        %1721 = vmatpush1.bf16.msra.mxu0 %v1276
        %1722 = vmatprep.subr.bf16.mxu0 0
        %1723 = vmatpush1.bf16.msra.mxu0 %v1279
        %1724 = vmatprep.subr.bf16.mxu0 0
        %1725 = vmatpush1.bf16.msra.mxu0 %v1282
        %1726 = vmatprep.subr.bf16.mxu0 0
        %1727 = vmatpush1.bf16.msra.mxu0 %v1285
        %1728 = vmatprep.subr.bf16.mxu0 0
        %1729 = vmatpush1.bf16.msra.mxu0 %v1288
        %1730 = vmatprep.subr.bf16.mxu0 0
        %1731 = vmatpush1.bf16.msra.mxu0 %v1291
        %1732 = vmatprep.subr.bf16.mxu0 0
        %1733 = vmatpush1.bf16.msra.mxu0 %v1294
        %1734 = vmatprep.subr.bf16.mxu0 0
        %1735 = vmatpush1.bf16.msra.mxu0 %v1297
        %1736 = vmatprep.subr.bf16.mxu0 0
        %1737 = vmatpush1.bf16.msra.mxu0 %v1300
        %1738 = vmatprep.subr.bf16.mxu0 0
        %1739 = vmatpush1.bf16.msra.mxu0 %v1303
        %1740 = vmatprep.subr.bf16.mxu0 0
        %1741 = vmatpush1.bf16.msra.mxu0 %v1306
        %1742 = vmatprep.subr.bf16.mxu0 0
        %1743 = vmatpush1.bf16.msra.mxu0 %v1309
        %1744 = vmatprep.subr.bf16.mxu0 0
        %1745 = vmatpush1.bf16.msra.mxu0 %v1312
        %1746 = vmatprep.mubr.bf16.mxu0 %v978
        %1747 = vmatmul.mubr.bf16.gmra.mrb[0].mxu0 %v977
        %v1748 = vpop.f32.mrb[0].mxu0
        %v1749 = vadd.f32 0.0, %v1748
        %v1750 = vpop.f32.mrb[0].mxu0
        %v1751 = vpop.f32.mrb[0].mxu0
        %v1752 = vadd.f32 0.0, %v1751
        %v1753 = vpop.f32.mrb[0].mxu0
        %1754 = vmatprep.mubr.bf16.mxu0 %v980
        %1755 = vmatmul.mubr.bf16.gmra.mrb[0].mxu0 %v979
        %v1756 = vpop.f32.mrb[0].mxu0
        %v1757 = vadd.f32 0.0, %v1756
        %v1758 = vpop.f32.mrb[0].mxu0
        %v1759 = vpop.f32.mrb[0].mxu0
        %v1760 = vadd.f32 0.0, %v1759
        %v1761 = vpop.f32.mrb[0].mxu0
        %1762 = vmatprep.mubr.bf16.mxu0 %v982
        %1763 = vmatmul.mubr.bf16.gmra.mrb[0].mxu0 %v981
        %v1764 = vpop.f32.mrb[0].mxu0
        %v1765 = vadd.f32 0.0, %v1764
        %v1766 = vpop.f32.mrb[0].mxu0
        %v1767 = vpop.f32.mrb[0].mxu0
        %v1768 = vadd.f32 0.0, %v1767
        %v1769 = vpop.f32.mrb[0].mxu0
        %1770 = vmatprep.mubr.bf16.mxu0 %v984
        %1771 = vmatmul.mubr.bf16.gmra.mrb[0].mxu0 %v983
        %v1772 = vpop.f32.mrb[0].mxu0
        %v1773 = vadd.f32 0.0, %v1772
        %v1774 = vpop.f32.mrb[0].mxu0
        %v1775 = vpop.f32.mrb[0].mxu0
        %v1776 = vadd.f32 0.0, %v1775
        %v1777 = vpop.f32.mrb[0].mxu0
        %1778 = vmatprep.mubr.bf16.mxu0 %v986
        %1779 = vmatmul.mubr.bf16.gmra.mrb[0].mxu0 %v985
        %v1780 = vpop.f32.mrb[0].mxu0
        %v1781 = vadd.f32 0.0, %v1780
        %v1782 = vpop.f32.mrb[0].mxu0
        %v1783 = vpop.f32.mrb[0].mxu0
        %v1784 = vadd.f32 0.0, %v1783
        %v1785 = vpop.f32.mrb[0].mxu0
        %1786 = vmatprep.mubr.bf16.mxu0 %v988
        %1787 = vmatmul.mubr.bf16.gmra.mrb[0].mxu0 %v987
        %v1788 = vpop.f32.mrb[0].mxu0
        %v1789 = vadd.f32 0.0, %v1788
        %v1790 = vpop.f32.mrb[0].mxu0
        %v1791 = vpop.f32.mrb[0].mxu0
        %v1792 = vadd.f32 0.0, %v1791
        %v1793 = vpop.f32.mrb[0].mxu0
        %1794 = vmatprep.mubr.bf16.mxu0 %v990
        %1795 = vmatmul.mubr.bf16.gmra.mrb[0].mxu0 %v989
        %v1796 = vpop.f32.mrb[0].mxu0
        %v1797 = vadd.f32 0.0, %v1796
        %v1798 = vpop.f32.mrb[0].mxu0
        %v1799 = vpop.f32.mrb[0].mxu0
        %v1800 = vadd.f32 0.0, %v1799
        %v1801 = vpop.f32.mrb[0].mxu0
        %1802 = vmatprep.mubr.bf16.mxu0 %v992
        %1803 = vmatmul.mubr.bf16.gmra.mrb[0].mxu0 %v991
        %v1804 = vpop.f32.mrb[0].mxu0
        %v1805 = vadd.f32 0.0, %v1804
        %v1806 = vpop.f32.mrb[0].mxu0
        %v1807 = vpop.f32.mrb[0].mxu0
        %v1808 = vadd.f32 0.0, %v1807
        %v1809 = vpop.f32.mrb[0].mxu0
        %1810 = vmatprep.mubr.bf16.mxu0 %v994
        %1811 = vmatmul.mubr.bf16.gmra.mrb[0].mxu0 %v993
        %v1812 = vpop.f32.mrb[0].mxu0
        %v1813 = vadd.f32 0.0, %v1812
        %v1814 = vpop.f32.mrb[0].mxu0
        %v1815 = vpop.f32.mrb[0].mxu0
        %v1816 = vadd.f32 0.0, %v1815
        %v1817 = vpop.f32.mrb[0].mxu0
        %1818 = vmatprep.mubr.bf16.mxu0 %v996
        %1819 = vmatmul.mubr.bf16.gmra.mrb[0].mxu0 %v995
        %v1820 = vpop.f32.mrb[0].mxu0
        %v1821 = vadd.f32 0.0, %v1820
        %v1822 = vpop.f32.mrb[0].mxu0
        %v1823 = vpop.f32.mrb[0].mxu0
        %v1824 = vadd.f32 0.0, %v1823
        %v1825 = vpop.f32.mrb[0].mxu0
        %1826 = vmatprep.mubr.bf16.mxu0 %v998
        %1827 = vmatmul.mubr.bf16.gmra.mrb[0].mxu0 %v997
        %v1828 = vpop.f32.mrb[0].mxu0
        %v1829 = vadd.f32 0.0, %v1828
        %v1830 = vpop.f32.mrb[0].mxu0
        %v1831 = vpop.f32.mrb[0].mxu0
        %v1832 = vadd.f32 0.0, %v1831
        %v1833 = vpop.f32.mrb[0].mxu0
        %1834 = vmatprep.mubr.bf16.mxu0 %v1000
        %1835 = vmatmul.mubr.bf16.gmra.mrb[0].mxu0 %v999
        %v1836 = vpop.f32.mrb[0].mxu0
        %v1837 = vadd.f32 0.0, %v1836
        %v1838 = vpop.f32.mrb[0].mxu0
        %v1839 = vpop.f32.mrb[0].mxu0
        %v1840 = vadd.f32 0.0, %v1839
        %v1841 = vpop.f32.mrb[0].mxu0
        %1842 = vmatprep.mubr.bf16.mxu0 %v1002
        %1843 = vmatmul.mubr.bf16.gmra.mrb[0].mxu0 %v1001
        %v1844 = vpop.f32.mrb[0].mxu0
        %v1845 = vadd.f32 0.0, %v1844
        %v1846 = vpop.f32.mrb[0].mxu0
        %v1847 = vpop.f32.mrb[0].mxu0
        %v1848 = vadd.f32 0.0, %v1847
        %v1849 = vpop.f32.mrb[0].mxu0
        %1850 = vmatprep.mubr.bf16.mxu0 %v1004
        %1851 = vmatmul.mubr.bf16.gmra.mrb[0].mxu0 %v1003
        %v1852 = vpop.f32.mrb[0].mxu0
        %v1853 = vadd.f32 0.0, %v1852
        %v1854 = vpop.f32.mrb[0].mxu0
        %v1855 = vpop.f32.mrb[0].mxu0
        %v1856 = vadd.f32 0.0, %v1855
        %v1857 = vpop.f32.mrb[0].mxu0
        %1858 = vmatprep.mubr.bf16.mxu0 %v1006
        %1859 = vmatmul.mubr.bf16.gmra.mrb[0].mxu0 %v1005
        %v1860 = vpop.f32.mrb[0].mxu0
        %v1861 = vadd.f32 0.0, %v1860
        %v1862 = vpop.f32.mrb[0].mxu0
        %v1863 = vpop.f32.mrb[0].mxu0
        %v1864 = vadd.f32 0.0, %v1863
        %v1865 = vpop.f32.mrb[0].mxu0
        %1866 = vmatprep.mubr.bf16.mxu0 %v1008
        %1867 = vmatmul.mubr.bf16.gmra.mrb[0].mxu0 %v1007
        %v1868 = vpop.f32.mrb[0].mxu0
        %v1869 = vadd.f32 0.0, %v1868
        %v1870 = vpop.f32.mrb[0].mxu0
        %v1871 = vpop.f32.mrb[0].mxu0
        %v1872 = vadd.f32 0.0, %v1871
        %v1873 = vpop.f32.mrb[0].mxu0
        %1874 = vmatprep.mubr.bf16.mxu0 %v1010
        %1875 = vmatmul.mubr.bf16.gmra.mrb[0].mxu0 %v1009
        %v1876 = vpop.f32.mrb[0].mxu0
        %v1877 = vadd.f32 0.0, %v1876
        %v1878 = vpop.f32.mrb[0].mxu0
        %v1879 = vpop.f32.mrb[0].mxu0
        %v1880 = vadd.f32 0.0, %v1879
        %v1881 = vpop.f32.mrb[0].mxu0
        %1882 = vmatprep.mubr.bf16.mxu0 %v1012
        %1883 = vmatmul.mubr.bf16.gmra.mrb[0].mxu0 %v1011
        %v1884 = vpop.f32.mrb[0].mxu0
        %v1885 = vadd.f32 0.0, %v1884
        %v1886 = vpop.f32.mrb[0].mxu0
        %v1887 = vpop.f32.mrb[0].mxu0
        %v1888 = vadd.f32 0.0, %v1887
        %v1889 = vpop.f32.mrb[0].mxu0
        %1890 = vmatprep.mubr.bf16.mxu0 %v1014
        %1891 = vmatmul.mubr.bf16.gmra.mrb[0].mxu0 %v1013
        %v1892 = vpop.f32.mrb[0].mxu0
        %v1893 = vadd.f32 0.0, %v1892
        %v1894 = vpop.f32.mrb[0].mxu0
        %v1895 = vpop.f32.mrb[0].mxu0
        %v1896 = vadd.f32 0.0, %v1895
        %v1897 = vpop.f32.mrb[0].mxu0
        %1898 = vmatprep.mubr.bf16.mxu0 %v1016
        %1899 = vmatmul.mubr.bf16.gmra.mrb[0].mxu0 %v1015
        %v1900 = vpop.f32.mrb[0].mxu0
        %v1901 = vadd.f32 0.0, %v1900
        %v1902 = vpop.f32.mrb[0].mxu0
        %v1903 = vpop.f32.mrb[0].mxu0
        %v1904 = vadd.f32 0.0, %v1903
        %v1905 = vpop.f32.mrb[0].mxu0
        %1906 = vmatprep.mubr.bf16.mxu0 %v1018
        %1907 = vmatmul.mubr.bf16.gmra.mrb[0].mxu0 %v1017
        %v1908 = vpop.f32.mrb[0].mxu0
        %v1909 = vadd.f32 0.0, %v1908
        %v1910 = vpop.f32.mrb[0].mxu0
        %v1911 = vpop.f32.mrb[0].mxu0
        %v1912 = vadd.f32 0.0, %v1911
        %v1913 = vpop.f32.mrb[0].mxu0
        %1914 = vmatprep.mubr.bf16.mxu0 %v1020
        %1915 = vmatmul.mubr.bf16.gmra.mrb[0].mxu0 %v1019
        %v1916 = vpop.f32.mrb[0].mxu0
        %v1917 = vadd.f32 0.0, %v1916
        %v1918 = vpop.f32.mrb[0].mxu0
        %v1919 = vpop.f32.mrb[0].mxu0
        %v1920 = vadd.f32 0.0, %v1919
        %v1921 = vpop.f32.mrb[0].mxu0
        %1922 = vmatprep.mubr.bf16.mxu0 %v1022
        %1923 = vmatmul.mubr.bf16.gmra.mrb[0].mxu0 %v1021
        %v1924 = vpop.f32.mrb[0].mxu0
        %v1925 = vadd.f32 0.0, %v1924
        %v1926 = vpop.f32.mrb[0].mxu0
        %v1927 = vpop.f32.mrb[0].mxu0
        %v1928 = vadd.f32 0.0, %v1927
        %v1929 = vpop.f32.mrb[0].mxu0
        %1930 = vmatprep.mubr.bf16.mxu0 %v1024
        %1931 = vmatmul.mubr.bf16.gmra.mrb[0].mxu0 %v1023
        %v1932 = vpop.f32.mrb[0].mxu0
        %v1933 = vadd.f32 0.0, %v1932
        %v1934 = vpop.f32.mrb[0].mxu0
        %v1935 = vpop.f32.mrb[0].mxu0
        %v1936 = vadd.f32 0.0, %v1935
        %v1937 = vpop.f32.mrb[0].mxu0
        %1938 = vmatprep.mubr.bf16.mxu0 %v1026
        %1939 = vmatmul.mubr.bf16.gmra.mrb[0].mxu0 %v1025
        %v1940 = vpop.f32.mrb[0].mxu0
        %v1941 = vadd.f32 0.0, %v1940
        %v1942 = vpop.f32.mrb[0].mxu0
        %v1943 = vpop.f32.mrb[0].mxu0
        %v1944 = vadd.f32 0.0, %v1943
        %v1945 = vpop.f32.mrb[0].mxu0
        %1946 = vmatprep.mubr.bf16.mxu0 %v1028
        %1947 = vmatmul.mubr.bf16.gmra.mrb[0].mxu0 %v1027
        %v1948 = vpop.f32.mrb[0].mxu0
        %v1949 = vadd.f32 0.0, %v1948
        %v1950 = vpop.f32.mrb[0].mxu0
        %v1951 = vpop.f32.mrb[0].mxu0
        %v1952 = vadd.f32 0.0, %v1951
        %v1953 = vpop.f32.mrb[0].mxu0
        %1954 = vmatprep.mubr.bf16.mxu0 %v1030
        %1955 = vmatmul.mubr.bf16.gmra.mrb[0].mxu0 %v1029
        %v1956 = vpop.f32.mrb[0].mxu0
        %v1957 = vadd.f32 0.0, %v1956
        %v1958 = vpop.f32.mrb[0].mxu0
        %v1959 = vpop.f32.mrb[0].mxu0
        %v1960 = vadd.f32 0.0, %v1959
        %v1961 = vpop.f32.mrb[0].mxu0
        %1962 = vmatprep.mubr.bf16.mxu0 %v1032
        %1963 = vmatmul.mubr.bf16.gmra.mrb[0].mxu0 %v1031
        %v1964 = vpop.f32.mrb[0].mxu0
        %v1965 = vadd.f32 0.0, %v1964
        %v1966 = vpop.f32.mrb[0].mxu0
        %v1967 = vpop.f32.mrb[0].mxu0
        %v1968 = vadd.f32 0.0, %v1967
        %v1969 = vpop.f32.mrb[0].mxu0
        %1970 = vmatprep.mubr.bf16.mxu0 %v1034
        %1971 = vmatmul.mubr.bf16.gmra.mrb[0].mxu0 %v1033
        %v1972 = vpop.f32.mrb[0].mxu0
        %v1973 = vadd.f32 0.0, %v1972
        %v1974 = vpop.f32.mrb[0].mxu0
        %v1975 = vpop.f32.mrb[0].mxu0
        %v1976 = vadd.f32 0.0, %v1975
        %v1977 = vpop.f32.mrb[0].mxu0
        %1978 = vmatprep.mubr.bf16.mxu0 %v1036
        %1979 = vmatmul.mubr.bf16.gmra.mrb[0].mxu0 %v1035
        %v1980 = vpop.f32.mrb[0].mxu0
        %v1981 = vadd.f32 0.0, %v1980
        %v1982 = vpop.f32.mrb[0].mxu0
        %v1983 = vpop.f32.mrb[0].mxu0
        %v1984 = vadd.f32 0.0, %v1983
        %v1985 = vpop.f32.mrb[0].mxu0
        %1986 = vmatprep.mubr.bf16.mxu0 %v1038
        %1987 = vmatmul.mubr.bf16.gmra.mrb[0].mxu0 %v1037
        %v1988 = vpop.f32.mrb[0].mxu0
        %v1989 = vadd.f32 0.0, %v1988
        %v1990 = vpop.f32.mrb[0].mxu0
        %v1991 = vpop.f32.mrb[0].mxu0
        %v1992 = vadd.f32 0.0, %v1991
        %v1993 = vpop.f32.mrb[0].mxu0
        %1994 = vmatprep.mubr.bf16.mxu0 %v1040
        %1995 = vmatmul.mubr.bf16.gmra.mrb[0].mxu0 %v1039
        %v1996 = vpop.f32.mrb[0].mxu0
        %v1997 = vadd.f32 0.0, %v1996
        %v1998 = vpop.f32.mrb[0].mxu0
        %v1999 = vpop.f32.mrb[0].mxu0
        %v2000 = vadd.f32 0.0, %v1999
        %v2001 = vpop.f32.mrb[0].mxu0
        %2002 = vdwg.mxu0
        %v2003 = vadd.f32 %v465, %v1396
        %v2004 = vadd.f32 %v466, %v1398
        %v2005 = vadd.f32 %v467, %v1749
        %v2006 = vadd.f32 %v468, %v1400
        %v2007 = vadd.f32 %v469, %v1402
        %v2008 = vadd.f32 %v470, %v1752
        %v2009 = vadd.f32 %v471, %v1406
        %v2010 = vadd.f32 %v472, %v1408
        %v2011 = vadd.f32 %v473, %v1757
        %v2012 = vadd.f32 %v474, %v1410
        %v2013 = vadd.f32 %v475, %v1412
        %v2014 = vadd.f32 %v476, %v1760
        %v2015 = vadd.f32 %v477, %v1416
        %v2016 = vadd.f32 %v478, %v1418
        %v2017 = vadd.f32 %v479, %v1765
        %v2018 = vadd.f32 %v480, %v1420
        %v2019 = vadd.f32 %v481, %v1422
        %v2020 = vadd.f32 %v482, %v1768
        %v2021 = vadd.f32 %v483, %v1426
        %v2022 = vadd.f32 %v484, %v1428
        %v2023 = vadd.f32 %v485, %v1773
        %v2024 = vadd.f32 %v486, %v1430
        %v2025 = vadd.f32 %v487, %v1432
        %v2026 = vadd.f32 %v488, %v1776
        %v2027 = vadd.f32 %v489, %v1436
        %v2028 = vadd.f32 %v490, %v1438
        %v2029 = vadd.f32 %v491, %v1781
        %v2030 = vadd.f32 %v492, %v1440
        %v2031 = vadd.f32 %v493, %v1442
        %v2032 = vadd.f32 %v494, %v1784
        %v2033 = vadd.f32 %v495, %v1446
        %v2034 = vadd.f32 %v496, %v1448
        %v2035 = vadd.f32 %v497, %v1789
        %v2036 = vadd.f32 %v498, %v1450
        %v2037 = vadd.f32 %v499, %v1452
        %v2038 = vadd.f32 %v500, %v1792
        %v2039 = vadd.f32 %v501, %v1456
        %v2040 = vadd.f32 %v502, %v1458
        %v2041 = vadd.f32 %v503, %v1797
        %v2042 = vadd.f32 %v504, %v1460
        %v2043 = vadd.f32 %v505, %v1462
        %v2044 = vadd.f32 %v506, %v1800
        %v2045 = vadd.f32 %v507, %v1466
        %v2046 = vadd.f32 %v508, %v1468
        %v2047 = vadd.f32 %v509, %v1805
        %v2048 = vadd.f32 %v510, %v1470
        %v2049 = vadd.f32 %v511, %v1472
        %v2050 = vadd.f32 %v512, %v1808
        %v2051 = vadd.f32 %v513, %v1476
        %v2052 = vadd.f32 %v514, %v1478
        %v2053 = vadd.f32 %v515, %v1813
        %v2054 = vadd.f32 %v516, %v1480
        %v2055 = vadd.f32 %v517, %v1482
        %v2056 = vadd.f32 %v518, %v1816
        %v2057 = vadd.f32 %v519, %v1486
        %v2058 = vadd.f32 %v520, %v1488
        %v2059 = vadd.f32 %v521, %v1821
        %v2060 = vadd.f32 %v522, %v1490
        %v2061 = vadd.f32 %v523, %v1492
        %v2062 = vadd.f32 %v524, %v1824
        %v2063 = vadd.f32 %v525, %v1496
        %v2064 = vadd.f32 %v526, %v1498
        %v2065 = vadd.f32 %v527, %v1829
        %v2066 = vadd.f32 %v528, %v1500
        %v2067 = vadd.f32 %v529, %v1502
        %v2068 = vadd.f32 %v530, %v1832
        %v2069 = vadd.f32 %v531, %v1506
        %v2070 = vadd.f32 %v532, %v1508
        %v2071 = vadd.f32 %v533, %v1837
        %v2072 = vadd.f32 %v534, %v1510
        %v2073 = vadd.f32 %v535, %v1512
        %v2074 = vadd.f32 %v536, %v1840
        %v2075 = vadd.f32 %v537, %v1516
        %v2076 = vadd.f32 %v538, %v1518
        %v2077 = vadd.f32 %v539, %v1845
        %v2078 = vadd.f32 %v540, %v1520
        %v2079 = vadd.f32 %v541, %v1522
        %v2080 = vadd.f32 %v542, %v1848
        %v2081 = vadd.f32 %v543, %v1526
        %v2082 = vadd.f32 %v544, %v1528
        %v2083 = vadd.f32 %v545, %v1853
        %v2084 = vadd.f32 %v546, %v1530
        %v2085 = vadd.f32 %v547, %v1532
        %v2086 = vadd.f32 %v548, %v1856
        %v2087 = vadd.f32 %v549, %v1536
        %v2088 = vadd.f32 %v550, %v1538
        %v2089 = vadd.f32 %v551, %v1861
        %v2090 = vadd.f32 %v552, %v1540
        %v2091 = vadd.f32 %v553, %v1542
        %v2092 = vadd.f32 %v554, %v1864
        %v2093 = vadd.f32 %v555, %v1546
        %v2094 = vadd.f32 %v556, %v1548
        %v2095 = vadd.f32 %v557, %v1869
        %v2096 = vadd.f32 %v558, %v1550
        %v2097 = vadd.f32 %v559, %v1552
        %v2098 = vadd.f32 %v560, %v1872
        %v2099 = vadd.f32 %v561, %v1556
        %v2100 = vadd.f32 %v562, %v1558
        %v2101 = vadd.f32 %v563, %v1877
        %v2102 = vadd.f32 %v564, %v1560
        %v2103 = vadd.f32 %v565, %v1562
        %v2104 = vadd.f32 %v566, %v1880
        %v2105 = vadd.f32 %v567, %v1566
        %v2106 = vadd.f32 %v568, %v1568
        %v2107 = vadd.f32 %v569, %v1885
        %v2108 = vadd.f32 %v570, %v1570
        %v2109 = vadd.f32 %v571, %v1572
        %v2110 = vadd.f32 %v572, %v1888
        %v2111 = vadd.f32 %v573, %v1576
        %v2112 = vadd.f32 %v574, %v1578
        %v2113 = vadd.f32 %v575, %v1893
        %v2114 = vadd.f32 %v576, %v1580
        %v2115 = vadd.f32 %v577, %v1582
        %v2116 = vadd.f32 %v578, %v1896
        %v2117 = vadd.f32 %v579, %v1586
        %v2118 = vadd.f32 %v580, %v1588
        %v2119 = vadd.f32 %v581, %v1901
        %v2120 = vadd.f32 %v582, %v1590
        %v2121 = vadd.f32 %v583, %v1592
        %v2122 = vadd.f32 %v584, %v1904
        %v2123 = vadd.f32 %v585, %v1596
        %v2124 = vadd.f32 %v586, %v1598
        %v2125 = vadd.f32 %v587, %v1909
        %v2126 = vadd.f32 %v588, %v1600
        %v2127 = vadd.f32 %v589, %v1602
        %v2128 = vadd.f32 %v590, %v1912
        %v2129 = vadd.f32 %v591, %v1606
        %v2130 = vadd.f32 %v592, %v1608
        %v2131 = vadd.f32 %v593, %v1917
        %v2132 = vadd.f32 %v594, %v1610
        %v2133 = vadd.f32 %v595, %v1612
        %v2134 = vadd.f32 %v596, %v1920
        %v2135 = vadd.f32 %v597, %v1616
        %v2136 = vadd.f32 %v598, %v1618
        %v2137 = vadd.f32 %v599, %v1925
        %v2138 = vadd.f32 %v600, %v1620
        %v2139 = vadd.f32 %v601, %v1622
        %v2140 = vadd.f32 %v602, %v1928
        %v2141 = vadd.f32 %v603, %v1626
        %v2142 = vadd.f32 %v604, %v1628
        %v2143 = vadd.f32 %v605, %v1933
        %v2144 = vadd.f32 %v606, %v1630
        %v2145 = vadd.f32 %v607, %v1632
        %v2146 = vadd.f32 %v608, %v1936
        %v2147 = vadd.f32 %v609, %v1636
        %v2148 = vadd.f32 %v610, %v1638
        %v2149 = vadd.f32 %v611, %v1941
        %v2150 = vadd.f32 %v612, %v1640
        %v2151 = vadd.f32 %v613, %v1642
        %v2152 = vadd.f32 %v614, %v1944
        %v2153 = vadd.f32 %v615, %v1646
        %v2154 = vadd.f32 %v616, %v1648
        %v2155 = vadd.f32 %v617, %v1949
        %v2156 = vadd.f32 %v618, %v1650
        %v2157 = vadd.f32 %v619, %v1652
        %v2158 = vadd.f32 %v620, %v1952
        %v2159 = vadd.f32 %v621, %v1656
        %v2160 = vadd.f32 %v622, %v1658
        %v2161 = vadd.f32 %v623, %v1957
        %v2162 = vadd.f32 %v624, %v1660
        %v2163 = vadd.f32 %v625, %v1662
        %v2164 = vadd.f32 %v626, %v1960
        %v2165 = vadd.f32 %v627, %v1666
        %v2166 = vadd.f32 %v628, %v1668
        %v2167 = vadd.f32 %v629, %v1965
        %v2168 = vadd.f32 %v630, %v1670
        %v2169 = vadd.f32 %v631, %v1672
        %v2170 = vadd.f32 %v632, %v1968
        %v2171 = vadd.f32 %v633, %v1676
        %v2172 = vadd.f32 %v634, %v1678
        %v2173 = vadd.f32 %v635, %v1973
        %v2174 = vadd.f32 %v636, %v1680
        %v2175 = vadd.f32 %v637, %v1682
        %v2176 = vadd.f32 %v638, %v1976
        %v2177 = vadd.f32 %v639, %v1686
        %v2178 = vadd.f32 %v640, %v1688
        %v2179 = vadd.f32 %v641, %v1981
        %v2180 = vadd.f32 %v642, %v1690
        %v2181 = vadd.f32 %v643, %v1692
        %v2182 = vadd.f32 %v644, %v1984
        %v2183 = vadd.f32 %v645, %v1696
        %v2184 = vadd.f32 %v646, %v1698
        %v2185 = vadd.f32 %v647, %v1989
        %v2186 = vadd.f32 %v648, %v1700
        %v2187 = vadd.f32 %v649, %v1702
        %v2188 = vadd.f32 %v650, %v1992
        %v2189 = vadd.f32 %v651, %v1706
        %v2190 = vadd.f32 %v652, %v1708
        %v2191 = vadd.f32 %v653, %v1997
        %v2192 = vadd.f32 %v654, %v1710
        %v2193 = vadd.f32 %v655, %v1712
        %v2194 = vadd.f32 %v656, %v2000
        %2195 = vst [vmem:[#allocation2] sm:$0xff] %v2003
        %2196 = vst [vmem:[#allocation2 + $0x8] sm:$0xff] %v2004
        %2197 = vst [vmem:[#allocation2 + $0x10] sm:$0xff] %v2005
        %2198 = vst [vmem:[#allocation2 + $0x18] sm:$0xff] %v2006
        %2199 = vst [vmem:[#allocation2 + $0x20] sm:$0xff] %v2007
        %2200 = vst [vmem:[#allocation2 + $0x28] sm:$0xff] %v2008
        %2201 = vst [vmem:[#allocation2 + $0x30] sm:$0xff] %v2009
        %2202 = vst [vmem:[#allocation2 + $0x38] sm:$0xff] %v2010
        %2203 = vst [vmem:[#allocation2 + $0x40] sm:$0xff] %v2011
        %2204 = vst [vmem:[#allocation2 + $0x48] sm:$0xff] %v2012
        %2205 = vst [vmem:[#allocation2 + $0x50] sm:$0xff] %v2013
        %2206 = vst [vmem:[#allocation2 + $0x58] sm:$0xff] %v2014
        %2207 = vst [vmem:[#allocation2 + $0x60] sm:$0xff] %v2015
        %2208 = vst [vmem:[#allocation2 + $0x68] sm:$0xff] %v2016
        %2209 = vst [vmem:[#allocation2 + $0x70] sm:$0xff] %v2017
        %2210 = vst [vmem:[#allocation2 + $0x78] sm:$0xff] %v2018
        %2211 = vst [vmem:[#allocation2 + $0x80] sm:$0xff] %v2019
        %2212 = vst [vmem:[#allocation2 + $0x88] sm:$0xff] %v2020
        %2213 = vst [vmem:[#allocation2 + $0x90] sm:$0xff] %v2021
        %2214 = vst [vmem:[#allocation2 + $0x98] sm:$0xff] %v2022
        %2215 = vst [vmem:[#allocation2 + $0xa0] sm:$0xff] %v2023
        %2216 = vst [vmem:[#allocation2 + $0xa8] sm:$0xff] %v2024
        %2217 = vst [vmem:[#allocation2 + $0xb0] sm:$0xff] %v2025
        %2218 = vst [vmem:[#allocation2 + $0xb8] sm:$0xff] %v2026
        %2219 = vst [vmem:[#allocation2 + $0xc0] sm:$0xff] %v2027
        %2220 = vst [vmem:[#allocation2 + $0xc8] sm:$0xff] %v2028
        %2221 = vst [vmem:[#allocation2 + $0xd0] sm:$0xff] %v2029
        %2222 = vst [vmem:[#allocation2 + $0xd8] sm:$0xff] %v2030
        %2223 = vst [vmem:[#allocation2 + $0xe0] sm:$0xff] %v2031
        %2224 = vst [vmem:[#allocation2 + $0xe8] sm:$0xff] %v2032
        %2225 = vst [vmem:[#allocation2 + $0xf0] sm:$0xff] %v2033
        %2226 = vst [vmem:[#allocation2 + $0xf8] sm:$0xff] %v2034
        %2227 = vst [vmem:[#allocation2 + $0x100] sm:$0xff] %v2035
        %2228 = vst [vmem:[#allocation2 + $0x108] sm:$0xff] %v2036
        %2229 = vst [vmem:[#allocation2 + $0x110] sm:$0xff] %v2037
        %2230 = vst [vmem:[#allocation2 + $0x118] sm:$0xff] %v2038
        %2231 = vst [vmem:[#allocation2 + $0x120] sm:$0xff] %v2039
        %2232 = vst [vmem:[#allocation2 + $0x128] sm:$0xff] %v2040
        %2233 = vst [vmem:[#allocation2 + $0x130] sm:$0xff] %v2041
        %2234 = vst [vmem:[#allocation2 + $0x138] sm:$0xff] %v2042
        %2235 = vst [vmem:[#allocation2 + $0x140] sm:$0xff] %v2043
        %2236 = vst [vmem:[#allocation2 + $0x148] sm:$0xff] %v2044
        %2237 = vst [vmem:[#allocation2 + $0x150] sm:$0xff] %v2045
        %2238 = vst [vmem:[#allocation2 + $0x158] sm:$0xff] %v2046
        %2239 = vst [vmem:[#allocation2 + $0x160] sm:$0xff] %v2047
        %2240 = vst [vmem:[#allocation2 + $0x168] sm:$0xff] %v2048
        %2241 = vst [vmem:[#allocation2 + $0x170] sm:$0xff] %v2049
        %2242 = vst [vmem:[#allocation2 + $0x178] sm:$0xff] %v2050
        %2243 = vst [vmem:[#allocation2 + $0x180] sm:$0xff] %v2051
        %2244 = vst [vmem:[#allocation2 + $0x188] sm:$0xff] %v2052
        %2245 = vst [vmem:[#allocation2 + $0x190] sm:$0xff] %v2053
        %2246 = vst [vmem:[#allocation2 + $0x198] sm:$0xff] %v2054
        %2247 = vst [vmem:[#allocation2 + $0x1a0] sm:$0xff] %v2055
        %2248 = vst [vmem:[#allocation2 + $0x1a8] sm:$0xff] %v2056
        %2249 = vst [vmem:[#allocation2 + $0x1b0] sm:$0xff] %v2057
        %2250 = vst [vmem:[#allocation2 + $0x1b8] sm:$0xff] %v2058
        %2251 = vst [vmem:[#allocation2 + $0x1c0] sm:$0xff] %v2059
        %2252 = vst [vmem:[#allocation2 + $0x1c8] sm:$0xff] %v2060
        %2253 = vst [vmem:[#allocation2 + $0x1d0] sm:$0xff] %v2061
        %2254 = vst [vmem:[#allocation2 + $0x1d8] sm:$0xff] %v2062
        %2255 = vst [vmem:[#allocation2 + $0x1e0] sm:$0xff] %v2063
        %2256 = vst [vmem:[#allocation2 + $0x1e8] sm:$0xff] %v2064
        %2257 = vst [vmem:[#allocation2 + $0x1f0] sm:$0xff] %v2065
        %2258 = vst [vmem:[#allocation2 + $0x1f8] sm:$0xff] %v2066
        %2259 = vst [vmem:[#allocation2 + $0x200] sm:$0xff] %v2067
        %2260 = vst [vmem:[#allocation2 + $0x208] sm:$0xff] %v2068
        %2261 = vst [vmem:[#allocation2 + $0x210] sm:$0xff] %v2069
        %2262 = vst [vmem:[#allocation2 + $0x218] sm:$0xff] %v2070
        %2263 = vst [vmem:[#allocation2 + $0x220] sm:$0xff] %v2071
        %2264 = vst [vmem:[#allocation2 + $0x228] sm:$0xff] %v2072
        %2265 = vst [vmem:[#allocation2 + $0x230] sm:$0xff] %v2073
        %2266 = vst [vmem:[#allocation2 + $0x238] sm:$0xff] %v2074
        %2267 = vst [vmem:[#allocation2 + $0x240] sm:$0xff] %v2075
        %2268 = vst [vmem:[#allocation2 + $0x248] sm:$0xff] %v2076
        %2269 = vst [vmem:[#allocation2 + $0x250] sm:$0xff] %v2077
        %2270 = vst [vmem:[#allocation2 + $0x258] sm:$0xff] %v2078
        %2271 = vst [vmem:[#allocation2 + $0x260] sm:$0xff] %v2079
        %2272 = vst [vmem:[#allocation2 + $0x268] sm:$0xff] %v2080
        %2273 = vst [vmem:[#allocation2 + $0x270] sm:$0xff] %v2081
        %2274 = vst [vmem:[#allocation2 + $0x278] sm:$0xff] %v2082
        %2275 = vst [vmem:[#allocation2 + $0x280] sm:$0xff] %v2083
        %2276 = vst [vmem:[#allocation2 + $0x288] sm:$0xff] %v2084
        %2277 = vst [vmem:[#allocation2 + $0x290] sm:$0xff] %v2085
        %2278 = vst [vmem:[#allocation2 + $0x298] sm:$0xff] %v2086
        %2279 = vst [vmem:[#allocation2 + $0x2a0] sm:$0xff] %v2087
        %2280 = vst [vmem:[#allocation2 + $0x2a8] sm:$0xff] %v2088
        %2281 = vst [vmem:[#allocation2 + $0x2b0] sm:$0xff] %v2089
        %2282 = vst [vmem:[#allocation2 + $0x2b8] sm:$0xff] %v2090
        %2283 = vst [vmem:[#allocation2 + $0x2c0] sm:$0xff] %v2091
        %2284 = vst [vmem:[#allocation2 + $0x2c8] sm:$0xff] %v2092
        %2285 = vst [vmem:[#allocation2 + $0x2d0] sm:$0xff] %v2093
        %2286 = vst [vmem:[#allocation2 + $0x2d8] sm:$0xff] %v2094
        %2287 = vst [vmem:[#allocation2 + $0x2e0] sm:$0xff] %v2095
        %2288 = vst [vmem:[#allocation2 + $0x2e8] sm:$0xff] %v2096
        %2289 = vst [vmem:[#allocation2 + $0x2f0] sm:$0xff] %v2097
        %2290 = vst [vmem:[#allocation2 + $0x2f8] sm:$0xff] %v2098
        %2291 = vst [vmem:[#allocation2 + $0x300] sm:$0xff] %v2099
        %2292 = vst [vmem:[#allocation2 + $0x308] sm:$0xff] %v2100
        %2293 = vst [vmem:[#allocation2 + $0x310] sm:$0xff] %v2101
        %2294 = vst [vmem:[#allocation2 + $0x318] sm:$0xff] %v2102
        %2295 = vst [vmem:[#allocation2 + $0x320] sm:$0xff] %v2103
        %2296 = vst [vmem:[#allocation2 + $0x328] sm:$0xff] %v2104
        %2297 = vst [vmem:[#allocation2 + $0x330] sm:$0xff] %v2105
        %2298 = vst [vmem:[#allocation2 + $0x338] sm:$0xff] %v2106
        %2299 = vst [vmem:[#allocation2 + $0x340] sm:$0xff] %v2107
        %2300 = vst [vmem:[#allocation2 + $0x348] sm:$0xff] %v2108
        %2301 = vst [vmem:[#allocation2 + $0x350] sm:$0xff] %v2109
        %2302 = vst [vmem:[#allocation2 + $0x358] sm:$0xff] %v2110
        %2303 = vst [vmem:[#allocation2 + $0x360] sm:$0xff] %v2111
        %2304 = vst [vmem:[#allocation2 + $0x368] sm:$0xff] %v2112
        %2305 = vst [vmem:[#allocation2 + $0x370] sm:$0xff] %v2113
        %2306 = vst [vmem:[#allocation2 + $0x378] sm:$0xff] %v2114
        %2307 = vst [vmem:[#allocation2 + $0x380] sm:$0xff] %v2115
        %2308 = vst [vmem:[#allocation2 + $0x388] sm:$0xff] %v2116
        %2309 = vst [vmem:[#allocation2 + $0x390] sm:$0xff] %v2117
        %2310 = vst [vmem:[#allocation2 + $0x398] sm:$0xff] %v2118
        %2311 = vst [vmem:[#allocation2 + $0x3a0] sm:$0xff] %v2119
        %2312 = vst [vmem:[#allocation2 + $0x3a8] sm:$0xff] %v2120
        %2313 = vst [vmem:[#allocation2 + $0x3b0] sm:$0xff] %v2121
        %2314 = vst [vmem:[#allocation2 + $0x3b8] sm:$0xff] %v2122
        %2315 = vst [vmem:[#allocation2 + $0x3c0] sm:$0xff] %v2123
        %2316 = vst [vmem:[#allocation2 + $0x3c8] sm:$0xff] %v2124
        %2317 = vst [vmem:[#allocation2 + $0x3d0] sm:$0xff] %v2125
        %2318 = vst [vmem:[#allocation2 + $0x3d8] sm:$0xff] %v2126
        %2319 = vst [vmem:[#allocation2 + $0x3e0] sm:$0xff] %v2127
        %2320 = vst [vmem:[#allocation2 + $0x3e8] sm:$0xff] %v2128
        %2321 = vst [vmem:[#allocation2 + $0x3f0] sm:$0xff] %v2129
        %2322 = vst [vmem:[#allocation2 + $0x3f8] sm:$0xff] %v2130
        %2323 = vst [vmem:[#allocation2 + $0x400] sm:$0xff] %v2131
        %2324 = vst [vmem:[#allocation2 + $0x408] sm:$0xff] %v2132
        %2325 = vst [vmem:[#allocation2 + $0x410] sm:$0xff] %v2133
        %2326 = vst [vmem:[#allocation2 + $0x418] sm:$0xff] %v2134
        %2327 = vst [vmem:[#allocation2 + $0x420] sm:$0xff] %v2135
        %2328 = vst [vmem:[#allocation2 + $0x428] sm:$0xff] %v2136
        %2329 = vst [vmem:[#allocation2 + $0x430] sm:$0xff] %v2137
        %2330 = vst [vmem:[#allocation2 + $0x438] sm:$0xff] %v2138
        %2331 = vst [vmem:[#allocation2 + $0x440] sm:$0xff] %v2139
        %2332 = vst [vmem:[#allocation2 + $0x448] sm:$0xff] %v2140
        %2333 = vst [vmem:[#allocation2 + $0x450] sm:$0xff] %v2141
        %2334 = vst [vmem:[#allocation2 + $0x458] sm:$0xff] %v2142
        %2335 = vst [vmem:[#allocation2 + $0x460] sm:$0xff] %v2143
        %2336 = vst [vmem:[#allocation2 + $0x468] sm:$0xff] %v2144
        %2337 = vst [vmem:[#allocation2 + $0x470] sm:$0xff] %v2145
        %2338 = vst [vmem:[#allocation2 + $0x478] sm:$0xff] %v2146
        %2339 = vst [vmem:[#allocation2 + $0x480] sm:$0xff] %v2147
        %2340 = vst [vmem:[#allocation2 + $0x488] sm:$0xff] %v2148
        %2341 = vst [vmem:[#allocation2 + $0x490] sm:$0xff] %v2149
        %2342 = vst [vmem:[#allocation2 + $0x498] sm:$0xff] %v2150
        %2343 = vst [vmem:[#allocation2 + $0x4a0] sm:$0xff] %v2151
        %2344 = vst [vmem:[#allocation2 + $0x4a8] sm:$0xff] %v2152
        %2345 = vst [vmem:[#allocation2 + $0x4b0] sm:$0xff] %v2153
        %2346 = vst [vmem:[#allocation2 + $0x4b8] sm:$0xff] %v2154
        %2347 = vst [vmem:[#allocation2 + $0x4c0] sm:$0xff] %v2155
        %2348 = vst [vmem:[#allocation2 + $0x4c8] sm:$0xff] %v2156
        %2349 = vst [vmem:[#allocation2 + $0x4d0] sm:$0xff] %v2157
        %2350 = vst [vmem:[#allocation2 + $0x4d8] sm:$0xff] %v2158
        %2351 = vst [vmem:[#allocation2 + $0x4e0] sm:$0xff] %v2159
        %2352 = vst [vmem:[#allocation2 + $0x4e8] sm:$0xff] %v2160
        %2353 = vst [vmem:[#allocation2 + $0x4f0] sm:$0xff] %v2161
        %2354 = vst [vmem:[#allocation2 + $0x4f8] sm:$0xff] %v2162
        %2355 = vst [vmem:[#allocation2 + $0x500] sm:$0xff] %v2163
        %2356 = vst [vmem:[#allocation2 + $0x508] sm:$0xff] %v2164
        %2357 = vst [vmem:[#allocation2 + $0x510] sm:$0xff] %v2165
        %2358 = vst [vmem:[#allocation2 + $0x518] sm:$0xff] %v2166
        %2359 = vst [vmem:[#allocation2 + $0x520] sm:$0xff] %v2167
        %2360 = vst [vmem:[#allocation2 + $0x528] sm:$0xff] %v2168
        %2361 = vst [vmem:[#allocation2 + $0x530] sm:$0xff] %v2169
        %2362 = vst [vmem:[#allocation2 + $0x538] sm:$0xff] %v2170
        %2363 = vst [vmem:[#allocation2 + $0x540] sm:$0xff] %v2171
        %2364 = vst [vmem:[#allocation2 + $0x548] sm:$0xff] %v2172
        %2365 = vst [vmem:[#allocation2 + $0x550] sm:$0xff] %v2173
        %2366 = vst [vmem:[#allocation2 + $0x558] sm:$0xff] %v2174
        %2367 = vst [vmem:[#allocation2 + $0x560] sm:$0xff] %v2175
        %2368 = vst [vmem:[#allocation2 + $0x568] sm:$0xff] %v2176
        %2369 = vst [vmem:[#allocation2 + $0x570] sm:$0xff] %v2177
        %2370 = vst [vmem:[#allocation2 + $0x578] sm:$0xff] %v2178
        %2371 = vst [vmem:[#allocation2 + $0x580] sm:$0xff] %v2179
        %2372 = vst [vmem:[#allocation2 + $0x588] sm:$0xff] %v2180
        %2373 = vst [vmem:[#allocation2 + $0x590] sm:$0xff] %v2181
        %2374 = vst [vmem:[#allocation2 + $0x598] sm:$0xff] %v2182
        %2375 = vst [vmem:[#allocation2 + $0x5a0] sm:$0xff] %v2183
        %2376 = vst [vmem:[#allocation2 + $0x5a8] sm:$0xff] %v2184
        %2377 = vst [vmem:[#allocation2 + $0x5b0] sm:$0xff] %v2185
        %2378 = vst [vmem:[#allocation2 + $0x5b8] sm:$0xff] %v2186
        %2379 = vst [vmem:[#allocation2 + $0x5c0] sm:$0xff] %v2187
        %2380 = vst [vmem:[#allocation2 + $0x5c8] sm:$0xff] %v2188
        %2381 = vst [vmem:[#allocation2 + $0x5d0] sm:$0xff] %v2189
        %2382 = vst [vmem:[#allocation2 + $0x5d8] sm:$0xff] %v2190
        %2383 = vst [vmem:[#allocation2 + $0x5e0] sm:$0xff] %v2191
        %2384 = vst [vmem:[#allocation2 + $0x5e8] sm:$0xff] %v2192
        %2385 = vst [vmem:[#allocation2 + $0x5f0] sm:$0xff] %v2193
        %2386 = vst [vmem:[#allocation2 + $0x5f8] sm:$0xff] %v2194
        // Predicated region
        $region45: #{tpu_custom_call.1} parent=31 // pred_check
          %p2387 = pneg %p269
        $region46: #{tpu_custom_call.1} parent=31 // pred_check_branch
          %2389 = sbr.rel (%p2387) target = $region48
        $region47: #{tpu_custom_call.1} parent=31 // pred_region
          %v2390 = vld [vmem:[#allocation2] sm:$0xff]
          %v2391 = vld [vmem:[#allocation2 + $0x8] sm:$0xff]
          %v2392 = vld [vmem:[#allocation2 + $0x10] sm:$0xff]
          %v2393 = vld [vmem:[#allocation2 + $0x18] sm:$0xff]
          %v2394 = vld [vmem:[#allocation2 + $0x20] sm:$0xff]
          %v2395 = vld [vmem:[#allocation2 + $0x28] sm:$0xff]
          %v2396 = vld [vmem:[#allocation2 + $0x30] sm:$0xff]
          %v2397 = vld [vmem:[#allocation2 + $0x38] sm:$0xff]
          %v2398 = vld [vmem:[#allocation2 + $0x40] sm:$0xff]
          %v2399 = vld [vmem:[#allocation2 + $0x48] sm:$0xff]
          %v2400 = vld [vmem:[#allocation2 + $0x50] sm:$0xff]
          %v2401 = vld [vmem:[#allocation2 + $0x58] sm:$0xff]
          %v2402 = vld [vmem:[#allocation2 + $0x60] sm:$0xff]
          %v2403 = vld [vmem:[#allocation2 + $0x68] sm:$0xff]
          %v2404 = vld [vmem:[#allocation2 + $0x70] sm:$0xff]
          %v2405 = vld [vmem:[#allocation2 + $0x78] sm:$0xff]
          %v2406 = vld [vmem:[#allocation2 + $0x80] sm:$0xff]
          %v2407 = vld [vmem:[#allocation2 + $0x88] sm:$0xff]
          %v2408 = vld [vmem:[#allocation2 + $0x90] sm:$0xff]
          %v2409 = vld [vmem:[#allocation2 + $0x98] sm:$0xff]
          %v2410 = vld [vmem:[#allocation2 + $0xa0] sm:$0xff]
          %v2411 = vld [vmem:[#allocation2 + $0xa8] sm:$0xff]
          %v2412 = vld [vmem:[#allocation2 + $0xb0] sm:$0xff]
          %v2413 = vld [vmem:[#allocation2 + $0xb8] sm:$0xff]
          %v2414 = vld [vmem:[#allocation2 + $0xc0] sm:$0xff]
          %v2415 = vld [vmem:[#allocation2 + $0xc8] sm:$0xff]
          %v2416 = vld [vmem:[#allocation2 + $0xd0] sm:$0xff]
          %v2417 = vld [vmem:[#allocation2 + $0xd8] sm:$0xff]
          %v2418 = vld [vmem:[#allocation2 + $0xe0] sm:$0xff]
          %v2419 = vld [vmem:[#allocation2 + $0xe8] sm:$0xff]
          %v2420 = vld [vmem:[#allocation2 + $0xf0] sm:$0xff]
          %v2421 = vld [vmem:[#allocation2 + $0xf8] sm:$0xff]
          %v2422 = vld [vmem:[#allocation2 + $0x100] sm:$0xff]
          %v2423 = vld [vmem:[#allocation2 + $0x108] sm:$0xff]
          %v2424 = vld [vmem:[#allocation2 + $0x110] sm:$0xff]
          %v2425 = vld [vmem:[#allocation2 + $0x118] sm:$0xff]
          %v2426 = vld [vmem:[#allocation2 + $0x120] sm:$0xff]
          %v2427 = vld [vmem:[#allocation2 + $0x128] sm:$0xff]
          %v2428 = vld [vmem:[#allocation2 + $0x130] sm:$0xff]
          %v2429 = vld [vmem:[#allocation2 + $0x138] sm:$0xff]
          %v2430 = vld [vmem:[#allocation2 + $0x140] sm:$0xff]
          %v2431 = vld [vmem:[#allocation2 + $0x148] sm:$0xff]
          %v2432 = vld [vmem:[#allocation2 + $0x150] sm:$0xff]
          %v2433 = vld [vmem:[#allocation2 + $0x158] sm:$0xff]
          %v2434 = vld [vmem:[#allocation2 + $0x160] sm:$0xff]
          %v2435 = vld [vmem:[#allocation2 + $0x168] sm:$0xff]
          %v2436 = vld [vmem:[#allocation2 + $0x170] sm:$0xff]
          %v2437 = vld [vmem:[#allocation2 + $0x178] sm:$0xff]
          %v2438 = vld [vmem:[#allocation2 + $0x180] sm:$0xff]
          %v2439 = vld [vmem:[#allocation2 + $0x188] sm:$0xff]
          %v2440 = vld [vmem:[#allocation2 + $0x190] sm:$0xff]
          %v2441 = vld [vmem:[#allocation2 + $0x198] sm:$0xff]
          %v2442 = vld [vmem:[#allocation2 + $0x1a0] sm:$0xff]
          %v2443 = vld [vmem:[#allocation2 + $0x1a8] sm:$0xff]
          %v2444 = vld [vmem:[#allocation2 + $0x1b0] sm:$0xff]
          %v2445 = vld [vmem:[#allocation2 + $0x1b8] sm:$0xff]
          %v2446 = vld [vmem:[#allocation2 + $0x1c0] sm:$0xff]
          %v2447 = vld [vmem:[#allocation2 + $0x1c8] sm:$0xff]
          %v2448 = vld [vmem:[#allocation2 + $0x1d0] sm:$0xff]
          %v2449 = vld [vmem:[#allocation2 + $0x1d8] sm:$0xff]
          %v2450 = vld [vmem:[#allocation2 + $0x1e0] sm:$0xff]
          %v2451 = vld [vmem:[#allocation2 + $0x1e8] sm:$0xff]
          %v2452 = vld [vmem:[#allocation2 + $0x1f0] sm:$0xff]
          %v2453 = vld [vmem:[#allocation2 + $0x1f8] sm:$0xff]
          %v2454 = vld [vmem:[#allocation2 + $0x200] sm:$0xff]
          %v2455 = vld [vmem:[#allocation2 + $0x208] sm:$0xff]
          %v2456 = vld [vmem:[#allocation2 + $0x210] sm:$0xff]
          %v2457 = vld [vmem:[#allocation2 + $0x218] sm:$0xff]
          %v2458 = vld [vmem:[#allocation2 + $0x220] sm:$0xff]
          %v2459 = vld [vmem:[#allocation2 + $0x228] sm:$0xff]
          %v2460 = vld [vmem:[#allocation2 + $0x230] sm:$0xff]
          %v2461 = vld [vmem:[#allocation2 + $0x238] sm:$0xff]
          %v2462 = vld [vmem:[#allocation2 + $0x240] sm:$0xff]
          %v2463 = vld [vmem:[#allocation2 + $0x248] sm:$0xff]
          %v2464 = vld [vmem:[#allocation2 + $0x250] sm:$0xff]
          %v2465 = vld [vmem:[#allocation2 + $0x258] sm:$0xff]
          %v2466 = vld [vmem:[#allocation2 + $0x260] sm:$0xff]
          %v2467 = vld [vmem:[#allocation2 + $0x268] sm:$0xff]
          %v2468 = vld [vmem:[#allocation2 + $0x270] sm:$0xff]
          %v2469 = vld [vmem:[#allocation2 + $0x278] sm:$0xff]
          %v2470 = vld [vmem:[#allocation2 + $0x280] sm:$0xff]
          %v2471 = vld [vmem:[#allocation2 + $0x288] sm:$0xff]
          %v2472 = vld [vmem:[#allocation2 + $0x290] sm:$0xff]
          %v2473 = vld [vmem:[#allocation2 + $0x298] sm:$0xff]
          %v2474 = vld [vmem:[#allocation2 + $0x2a0] sm:$0xff]
          %v2475 = vld [vmem:[#allocation2 + $0x2a8] sm:$0xff]
          %v2476 = vld [vmem:[#allocation2 + $0x2b0] sm:$0xff]
          %v2477 = vld [vmem:[#allocation2 + $0x2b8] sm:$0xff]
          %v2478 = vld [vmem:[#allocation2 + $0x2c0] sm:$0xff]
          %v2479 = vld [vmem:[#allocation2 + $0x2c8] sm:$0xff]
          %v2480 = vld [vmem:[#allocation2 + $0x2d0] sm:$0xff]
          %v2481 = vld [vmem:[#allocation2 + $0x2d8] sm:$0xff]
          %v2482 = vld [vmem:[#allocation2 + $0x2e0] sm:$0xff]
          %v2483 = vld [vmem:[#allocation2 + $0x2e8] sm:$0xff]
          %v2484 = vld [vmem:[#allocation2 + $0x2f0] sm:$0xff]
          %v2485 = vld [vmem:[#allocation2 + $0x2f8] sm:$0xff]
          %v2486 = vld [vmem:[#allocation2 + $0x300] sm:$0xff]
          %v2487 = vld [vmem:[#allocation2 + $0x308] sm:$0xff]
          %v2488 = vld [vmem:[#allocation2 + $0x310] sm:$0xff]
          %v2489 = vld [vmem:[#allocation2 + $0x318] sm:$0xff]
          %v2490 = vld [vmem:[#allocation2 + $0x320] sm:$0xff]
          %v2491 = vld [vmem:[#allocation2 + $0x328] sm:$0xff]
          %v2492 = vld [vmem:[#allocation2 + $0x330] sm:$0xff]
          %v2493 = vld [vmem:[#allocation2 + $0x338] sm:$0xff]
          %v2494 = vld [vmem:[#allocation2 + $0x340] sm:$0xff]
          %v2495 = vld [vmem:[#allocation2 + $0x348] sm:$0xff]
          %v2496 = vld [vmem:[#allocation2 + $0x350] sm:$0xff]
          %v2497 = vld [vmem:[#allocation2 + $0x358] sm:$0xff]
          %v2498 = vld [vmem:[#allocation2 + $0x360] sm:$0xff]
          %v2499 = vld [vmem:[#allocation2 + $0x368] sm:$0xff]
          %v2500 = vld [vmem:[#allocation2 + $0x370] sm:$0xff]
          %v2501 = vld [vmem:[#allocation2 + $0x378] sm:$0xff]
          %v2502 = vld [vmem:[#allocation2 + $0x380] sm:$0xff]
          %v2503 = vld [vmem:[#allocation2 + $0x388] sm:$0xff]
          %v2504 = vld [vmem:[#allocation2 + $0x390] sm:$0xff]
          %v2505 = vld [vmem:[#allocation2 + $0x398] sm:$0xff]
          %v2506 = vld [vmem:[#allocation2 + $0x3a0] sm:$0xff]
          %v2507 = vld [vmem:[#allocation2 + $0x3a8] sm:$0xff]
          %v2508 = vld [vmem:[#allocation2 + $0x3b0] sm:$0xff]
          %v2509 = vld [vmem:[#allocation2 + $0x3b8] sm:$0xff]
          %v2510 = vld [vmem:[#allocation2 + $0x3c0] sm:$0xff]
          %v2511 = vld [vmem:[#allocation2 + $0x3c8] sm:$0xff]
          %v2512 = vld [vmem:[#allocation2 + $0x3d0] sm:$0xff]
          %v2513 = vld [vmem:[#allocation2 + $0x3d8] sm:$0xff]
          %v2514 = vld [vmem:[#allocation2 + $0x3e0] sm:$0xff]
          %v2515 = vld [vmem:[#allocation2 + $0x3e8] sm:$0xff]
          %v2516 = vld [vmem:[#allocation2 + $0x3f0] sm:$0xff]
          %v2517 = vld [vmem:[#allocation2 + $0x3f8] sm:$0xff]
          %v2518 = vld [vmem:[#allocation2 + $0x400] sm:$0xff]
          %v2519 = vld [vmem:[#allocation2 + $0x408] sm:$0xff]
          %v2520 = vld [vmem:[#allocation2 + $0x410] sm:$0xff]
          %v2521 = vld [vmem:[#allocation2 + $0x418] sm:$0xff]
          %v2522 = vld [vmem:[#allocation2 + $0x420] sm:$0xff]
          %v2523 = vld [vmem:[#allocation2 + $0x428] sm:$0xff]
          %v2524 = vld [vmem:[#allocation2 + $0x430] sm:$0xff]
          %v2525 = vld [vmem:[#allocation2 + $0x438] sm:$0xff]
          %v2526 = vld [vmem:[#allocation2 + $0x440] sm:$0xff]
          %v2527 = vld [vmem:[#allocation2 + $0x448] sm:$0xff]
          %v2528 = vld [vmem:[#allocation2 + $0x450] sm:$0xff]
          %v2529 = vld [vmem:[#allocation2 + $0x458] sm:$0xff]
          %v2530 = vld [vmem:[#allocation2 + $0x460] sm:$0xff]
          %v2531 = vld [vmem:[#allocation2 + $0x468] sm:$0xff]
          %v2532 = vld [vmem:[#allocation2 + $0x470] sm:$0xff]
          %v2533 = vld [vmem:[#allocation2 + $0x478] sm:$0xff]
          %v2534 = vld [vmem:[#allocation2 + $0x480] sm:$0xff]
          %v2535 = vld [vmem:[#allocation2 + $0x488] sm:$0xff]
          %v2536 = vld [vmem:[#allocation2 + $0x490] sm:$0xff]
          %v2537 = vld [vmem:[#allocation2 + $0x498] sm:$0xff]
          %v2538 = vld [vmem:[#allocation2 + $0x4a0] sm:$0xff]
          %v2539 = vld [vmem:[#allocation2 + $0x4a8] sm:$0xff]
          %v2540 = vld [vmem:[#allocation2 + $0x4b0] sm:$0xff]
          %v2541 = vld [vmem:[#allocation2 + $0x4b8] sm:$0xff]
          %v2542 = vld [vmem:[#allocation2 + $0x4c0] sm:$0xff]
          %v2543 = vld [vmem:[#allocation2 + $0x4c8] sm:$0xff]
          %v2544 = vld [vmem:[#allocation2 + $0x4d0] sm:$0xff]
          %v2545 = vld [vmem:[#allocation2 + $0x4d8] sm:$0xff]
          %v2546 = vld [vmem:[#allocation2 + $0x4e0] sm:$0xff]
          %v2547 = vld [vmem:[#allocation2 + $0x4e8] sm:$0xff]
          %v2548 = vld [vmem:[#allocation2 + $0x4f0] sm:$0xff]
          %v2549 = vld [vmem:[#allocation2 + $0x4f8] sm:$0xff]
          %v2550 = vld [vmem:[#allocation2 + $0x500] sm:$0xff]
          %v2551 = vld [vmem:[#allocation2 + $0x508] sm:$0xff]
          %v2552 = vld [vmem:[#allocation2 + $0x510] sm:$0xff]
          %v2553 = vld [vmem:[#allocation2 + $0x518] sm:$0xff]
          %v2554 = vld [vmem:[#allocation2 + $0x520] sm:$0xff]
          %v2555 = vld [vmem:[#allocation2 + $0x528] sm:$0xff]
          %v2556 = vld [vmem:[#allocation2 + $0x530] sm:$0xff]
          %v2557 = vld [vmem:[#allocation2 + $0x538] sm:$0xff]
          %v2558 = vld [vmem:[#allocation2 + $0x540] sm:$0xff]
          %v2559 = vld [vmem:[#allocation2 + $0x548] sm:$0xff]
          %v2560 = vld [vmem:[#allocation2 + $0x550] sm:$0xff]
          %v2561 = vld [vmem:[#allocation2 + $0x558] sm:$0xff]
          %v2562 = vld [vmem:[#allocation2 + $0x560] sm:$0xff]
          %v2563 = vld [vmem:[#allocation2 + $0x568] sm:$0xff]
          %v2564 = vld [vmem:[#allocation2 + $0x570] sm:$0xff]
          %v2565 = vld [vmem:[#allocation2 + $0x578] sm:$0xff]
          %v2566 = vld [vmem:[#allocation2 + $0x580] sm:$0xff]
          %v2567 = vld [vmem:[#allocation2 + $0x588] sm:$0xff]
          %v2568 = vld [vmem:[#allocation2 + $0x590] sm:$0xff]
          %v2569 = vld [vmem:[#allocation2 + $0x598] sm:$0xff]
          %v2570 = vld [vmem:[#allocation2 + $0x5a0] sm:$0xff]
          %v2571 = vld [vmem:[#allocation2 + $0x5a8] sm:$0xff]
          %v2572 = vld [vmem:[#allocation2 + $0x5b0] sm:$0xff]
          %v2573 = vld [vmem:[#allocation2 + $0x5b8] sm:$0xff]
          %v2574 = vld [vmem:[#allocation2 + $0x5c0] sm:$0xff]
          %v2575 = vld [vmem:[#allocation2 + $0x5c8] sm:$0xff]
          %v2576 = vld [vmem:[#allocation2 + $0x5d0] sm:$0xff]
          %v2577 = vld [vmem:[#allocation2 + $0x5d8] sm:$0xff]
          %v2578 = vld [vmem:[#allocation2 + $0x5e0] sm:$0xff]
          %v2579 = vld [vmem:[#allocation2 + $0x5e8] sm:$0xff]
          %v2580 = vld [vmem:[#allocation2 + $0x5f0] sm:$0xff]
          %v2581 = vld [vmem:[#allocation2 + $0x5f8] sm:$0xff]
          %v2582 = vld [vmem:[%s264] sm:$0x7]
          %v2584 = vlaneseq
          %v2585 = vshrl.u32 %v2584, 7
          %v2586 = vsub.s32 0, %v2585
          %v2587 = vrot.slane %v2582, %v2586
          %v2588 = vlaneseq
          %v2589 = vshrl.u32 %v2588, 7
          %v2590 = vsub.s32 1, %v2589
          %v2591 = vrot.slane %v2582, %v2590
          %v2592 = vlaneseq
          %v2593 = vshrl.u32 %v2592, 7
          %v2594 = vsub.s32 2, %v2593
          %v2595 = vrot.slane %v2582, %v2594
          %v2599 = vadd.f32 %v2390, %v2587
          %v2600 = vadd.f32 %v2391, %v2591
          %v2601 = vadd.f32 %v2392, %v2595
          %v2602 = vadd.f32 %v2393, %v2587
          %v2603 = vadd.f32 %v2394, %v2591
          %v2604 = vadd.f32 %v2395, %v2595
          %v2605 = vadd.f32 %v2396, %v2587
          %v2606 = vadd.f32 %v2397, %v2591
          %v2607 = vadd.f32 %v2398, %v2595
          %v2608 = vadd.f32 %v2399, %v2587
          %v2609 = vadd.f32 %v2400, %v2591
          %v2610 = vadd.f32 %v2401, %v2595
          %v2611 = vadd.f32 %v2402, %v2587
          %v2612 = vadd.f32 %v2403, %v2591
          %v2613 = vadd.f32 %v2404, %v2595
          %v2614 = vadd.f32 %v2405, %v2587
          %v2615 = vadd.f32 %v2406, %v2591
          %v2616 = vadd.f32 %v2407, %v2595
          %v2617 = vadd.f32 %v2408, %v2587
          %v2618 = vadd.f32 %v2409, %v2591
          %v2619 = vadd.f32 %v2410, %v2595
          %v2620 = vadd.f32 %v2411, %v2587
          %v2621 = vadd.f32 %v2412, %v2591
          %v2622 = vadd.f32 %v2413, %v2595
          %v2623 = vadd.f32 %v2414, %v2587
          %v2624 = vadd.f32 %v2415, %v2591
          %v2625 = vadd.f32 %v2416, %v2595
          %v2626 = vadd.f32 %v2417, %v2587
          %v2627 = vadd.f32 %v2418, %v2591
          %v2628 = vadd.f32 %v2419, %v2595
          %v2629 = vadd.f32 %v2420, %v2587
          %v2630 = vadd.f32 %v2421, %v2591
          %v2631 = vadd.f32 %v2422, %v2595
          %v2632 = vadd.f32 %v2423, %v2587
          %v2633 = vadd.f32 %v2424, %v2591
          %v2634 = vadd.f32 %v2425, %v2595
          %v2635 = vadd.f32 %v2426, %v2587
          %v2636 = vadd.f32 %v2427, %v2591
          %v2637 = vadd.f32 %v2428, %v2595
          %v2638 = vadd.f32 %v2429, %v2587
          %v2639 = vadd.f32 %v2430, %v2591
          %v2640 = vadd.f32 %v2431, %v2595
          %v2641 = vadd.f32 %v2432, %v2587
          %v2642 = vadd.f32 %v2433, %v2591
          %v2643 = vadd.f32 %v2434, %v2595
          %v2644 = vadd.f32 %v2435, %v2587
          %v2645 = vadd.f32 %v2436, %v2591
          %v2646 = vadd.f32 %v2437, %v2595
          %v2647 = vadd.f32 %v2438, %v2587
          %v2648 = vadd.f32 %v2439, %v2591
          %v2649 = vadd.f32 %v2440, %v2595
          %v2650 = vadd.f32 %v2441, %v2587
          %v2651 = vadd.f32 %v2442, %v2591
          %v2652 = vadd.f32 %v2443, %v2595
          %v2653 = vadd.f32 %v2444, %v2587
          %v2654 = vadd.f32 %v2445, %v2591
          %v2655 = vadd.f32 %v2446, %v2595
          %v2656 = vadd.f32 %v2447, %v2587
          %v2657 = vadd.f32 %v2448, %v2591
          %v2658 = vadd.f32 %v2449, %v2595
          %v2659 = vadd.f32 %v2450, %v2587
          %v2660 = vadd.f32 %v2451, %v2591
          %v2661 = vadd.f32 %v2452, %v2595
          %v2662 = vadd.f32 %v2453, %v2587
          %v2663 = vadd.f32 %v2454, %v2591
          %v2664 = vadd.f32 %v2455, %v2595
          %v2665 = vadd.f32 %v2456, %v2587
          %v2666 = vadd.f32 %v2457, %v2591
          %v2667 = vadd.f32 %v2458, %v2595
          %v2668 = vadd.f32 %v2459, %v2587
          %v2669 = vadd.f32 %v2460, %v2591
          %v2670 = vadd.f32 %v2461, %v2595
          %v2671 = vadd.f32 %v2462, %v2587
          %v2672 = vadd.f32 %v2463, %v2591
          %v2673 = vadd.f32 %v2464, %v2595
          %v2674 = vadd.f32 %v2465, %v2587
          %v2675 = vadd.f32 %v2466, %v2591
          %v2676 = vadd.f32 %v2467, %v2595
          %v2677 = vadd.f32 %v2468, %v2587
          %v2678 = vadd.f32 %v2469, %v2591
          %v2679 = vadd.f32 %v2470, %v2595
          %v2680 = vadd.f32 %v2471, %v2587
          %v2681 = vadd.f32 %v2472, %v2591
          %v2682 = vadd.f32 %v2473, %v2595
          %v2683 = vadd.f32 %v2474, %v2587
          %v2684 = vadd.f32 %v2475, %v2591
          %v2685 = vadd.f32 %v2476, %v2595
          %v2686 = vadd.f32 %v2477, %v2587
          %v2687 = vadd.f32 %v2478, %v2591
          %v2688 = vadd.f32 %v2479, %v2595
          %v2689 = vadd.f32 %v2480, %v2587
          %v2690 = vadd.f32 %v2481, %v2591
          %v2691 = vadd.f32 %v2482, %v2595
          %v2692 = vadd.f32 %v2483, %v2587
          %v2693 = vadd.f32 %v2484, %v2591
          %v2694 = vadd.f32 %v2485, %v2595
          %v2695 = vadd.f32 %v2486, %v2587
          %v2696 = vadd.f32 %v2487, %v2591
          %v2697 = vadd.f32 %v2488, %v2595
          %v2698 = vadd.f32 %v2489, %v2587
          %v2699 = vadd.f32 %v2490, %v2591
          %v2700 = vadd.f32 %v2491, %v2595
          %v2701 = vadd.f32 %v2492, %v2587
          %v2702 = vadd.f32 %v2493, %v2591
          %v2703 = vadd.f32 %v2494, %v2595
          %v2704 = vadd.f32 %v2495, %v2587
          %v2705 = vadd.f32 %v2496, %v2591
          %v2706 = vadd.f32 %v2497, %v2595
          %v2707 = vadd.f32 %v2498, %v2587
          %v2708 = vadd.f32 %v2499, %v2591
          %v2709 = vadd.f32 %v2500, %v2595
          %v2710 = vadd.f32 %v2501, %v2587
          %v2711 = vadd.f32 %v2502, %v2591
          %v2712 = vadd.f32 %v2503, %v2595
          %v2713 = vadd.f32 %v2504, %v2587
          %v2714 = vadd.f32 %v2505, %v2591
          %v2715 = vadd.f32 %v2506, %v2595
          %v2716 = vadd.f32 %v2507, %v2587
          %v2717 = vadd.f32 %v2508, %v2591
          %v2718 = vadd.f32 %v2509, %v2595
          %v2719 = vadd.f32 %v2510, %v2587
          %v2720 = vadd.f32 %v2511, %v2591
          %v2721 = vadd.f32 %v2512, %v2595
          %v2722 = vadd.f32 %v2513, %v2587
          %v2723 = vadd.f32 %v2514, %v2591
          %v2724 = vadd.f32 %v2515, %v2595
          %v2725 = vadd.f32 %v2516, %v2587
          %v2726 = vadd.f32 %v2517, %v2591
          %v2727 = vadd.f32 %v2518, %v2595
          %v2728 = vadd.f32 %v2519, %v2587
          %v2729 = vadd.f32 %v2520, %v2591
          %v2730 = vadd.f32 %v2521, %v2595
          %v2731 = vadd.f32 %v2522, %v2587
          %v2732 = vadd.f32 %v2523, %v2591
          %v2733 = vadd.f32 %v2524, %v2595
          %v2734 = vadd.f32 %v2525, %v2587
          %v2735 = vadd.f32 %v2526, %v2591
          %v2736 = vadd.f32 %v2527, %v2595
          %v2737 = vadd.f32 %v2528, %v2587
          %v2738 = vadd.f32 %v2529, %v2591
          %v2739 = vadd.f32 %v2530, %v2595
          %v2740 = vadd.f32 %v2531, %v2587
          %v2741 = vadd.f32 %v2532, %v2591
          %v2742 = vadd.f32 %v2533, %v2595
          %v2743 = vadd.f32 %v2534, %v2587
          %v2744 = vadd.f32 %v2535, %v2591
          %v2745 = vadd.f32 %v2536, %v2595
          %v2746 = vadd.f32 %v2537, %v2587
          %v2747 = vadd.f32 %v2538, %v2591
          %v2748 = vadd.f32 %v2539, %v2595
          %v2749 = vadd.f32 %v2540, %v2587
          %v2750 = vadd.f32 %v2541, %v2591
          %v2751 = vadd.f32 %v2542, %v2595
          %v2752 = vadd.f32 %v2543, %v2587
          %v2753 = vadd.f32 %v2544, %v2591
          %v2754 = vadd.f32 %v2545, %v2595
          %v2755 = vadd.f32 %v2546, %v2587
          %v2756 = vadd.f32 %v2547, %v2591
          %v2757 = vadd.f32 %v2548, %v2595
          %v2758 = vadd.f32 %v2549, %v2587
          %v2759 = vadd.f32 %v2550, %v2591
          %v2760 = vadd.f32 %v2551, %v2595
          %v2761 = vadd.f32 %v2552, %v2587
          %v2762 = vadd.f32 %v2553, %v2591
          %v2763 = vadd.f32 %v2554, %v2595
          %v2764 = vadd.f32 %v2555, %v2587
          %v2765 = vadd.f32 %v2556, %v2591
          %v2766 = vadd.f32 %v2557, %v2595
          %v2767 = vadd.f32 %v2558, %v2587
          %v2768 = vadd.f32 %v2559, %v2591
          %v2769 = vadd.f32 %v2560, %v2595
          %v2770 = vadd.f32 %v2561, %v2587
          %v2771 = vadd.f32 %v2562, %v2591
          %v2772 = vadd.f32 %v2563, %v2595
          %v2773 = vadd.f32 %v2564, %v2587
          %v2774 = vadd.f32 %v2565, %v2591
          %v2775 = vadd.f32 %v2566, %v2595
          %v2776 = vadd.f32 %v2567, %v2587
          %v2777 = vadd.f32 %v2568, %v2591
          %v2778 = vadd.f32 %v2569, %v2595
          %v2779 = vadd.f32 %v2570, %v2587
          %v2780 = vadd.f32 %v2571, %v2591
          %v2781 = vadd.f32 %v2572, %v2595
          %v2782 = vadd.f32 %v2573, %v2587
          %v2783 = vadd.f32 %v2574, %v2591
          %v2784 = vadd.f32 %v2575, %v2595
          %v2785 = vadd.f32 %v2576, %v2587
          %v2786 = vadd.f32 %v2577, %v2591
          %v2787 = vadd.f32 %v2578, %v2595
          %v2788 = vadd.f32 %v2579, %v2587
          %v2789 = vadd.f32 %v2580, %v2591
          %v2790 = vadd.f32 %v2581, %v2595
          %v2791 = vpack.c.bf16 %v2602, %v2599
          %v2792 = vpack.c.bf16 %v2603, %v2600
          %v2793 = vpack.c.bf16 %v2604, %v2601
          %v2794 = vpack.c.bf16 %v2608, %v2605
          %v2795 = vpack.c.bf16 %v2609, %v2606
          %v2796 = vpack.c.bf16 %v2610, %v2607
          %v2797 = vpack.c.bf16 %v2614, %v2611
          %v2798 = vpack.c.bf16 %v2615, %v2612
          %v2799 = vpack.c.bf16 %v2616, %v2613
          %v2800 = vpack.c.bf16 %v2620, %v2617
          %v2801 = vpack.c.bf16 %v2621, %v2618
          %v2802 = vpack.c.bf16 %v2622, %v2619
          %v2803 = vpack.c.bf16 %v2626, %v2623
          %v2804 = vpack.c.bf16 %v2627, %v2624
          %v2805 = vpack.c.bf16 %v2628, %v2625
          %v2806 = vpack.c.bf16 %v2632, %v2629
          %v2807 = vpack.c.bf16 %v2633, %v2630
          %v2808 = vpack.c.bf16 %v2634, %v2631
          %v2809 = vpack.c.bf16 %v2638, %v2635
          %v2810 = vpack.c.bf16 %v2639, %v2636
          %v2811 = vpack.c.bf16 %v2640, %v2637
          %v2812 = vpack.c.bf16 %v2644, %v2641
          %v2813 = vpack.c.bf16 %v2645, %v2642
          %v2814 = vpack.c.bf16 %v2646, %v2643
          %v2815 = vpack.c.bf16 %v2650, %v2647
          %v2816 = vpack.c.bf16 %v2651, %v2648
          %v2817 = vpack.c.bf16 %v2652, %v2649
          %v2818 = vpack.c.bf16 %v2656, %v2653
          %v2819 = vpack.c.bf16 %v2657, %v2654
          %v2820 = vpack.c.bf16 %v2658, %v2655
          %v2821 = vpack.c.bf16 %v2662, %v2659
          %v2822 = vpack.c.bf16 %v2663, %v2660
          %v2823 = vpack.c.bf16 %v2664, %v2661
          %v2824 = vpack.c.bf16 %v2668, %v2665
          %v2825 = vpack.c.bf16 %v2669, %v2666
          %v2826 = vpack.c.bf16 %v2670, %v2667
          %v2827 = vpack.c.bf16 %v2674, %v2671
          %v2828 = vpack.c.bf16 %v2675, %v2672
          %v2829 = vpack.c.bf16 %v2676, %v2673
          %v2830 = vpack.c.bf16 %v2680, %v2677
          %v2831 = vpack.c.bf16 %v2681, %v2678
          %v2832 = vpack.c.bf16 %v2682, %v2679
          %v2833 = vpack.c.bf16 %v2686, %v2683
          %v2834 = vpack.c.bf16 %v2687, %v2684
          %v2835 = vpack.c.bf16 %v2688, %v2685
          %v2836 = vpack.c.bf16 %v2692, %v2689
          %v2837 = vpack.c.bf16 %v2693, %v2690
          %v2838 = vpack.c.bf16 %v2694, %v2691
          %v2839 = vpack.c.bf16 %v2698, %v2695
          %v2840 = vpack.c.bf16 %v2699, %v2696
          %v2841 = vpack.c.bf16 %v2700, %v2697
          %v2842 = vpack.c.bf16 %v2704, %v2701
          %v2843 = vpack.c.bf16 %v2705, %v2702
          %v2844 = vpack.c.bf16 %v2706, %v2703
          %v2845 = vpack.c.bf16 %v2710, %v2707
          %v2846 = vpack.c.bf16 %v2711, %v2708
          %v2847 = vpack.c.bf16 %v2712, %v2709
          %v2848 = vpack.c.bf16 %v2716, %v2713
          %v2849 = vpack.c.bf16 %v2717, %v2714
          %v2850 = vpack.c.bf16 %v2718, %v2715
          %v2851 = vpack.c.bf16 %v2722, %v2719
          %v2852 = vpack.c.bf16 %v2723, %v2720
          %v2853 = vpack.c.bf16 %v2724, %v2721
          %v2854 = vpack.c.bf16 %v2728, %v2725
          %v2855 = vpack.c.bf16 %v2729, %v2726
          %v2856 = vpack.c.bf16 %v2730, %v2727
          %v2857 = vpack.c.bf16 %v2734, %v2731
          %v2858 = vpack.c.bf16 %v2735, %v2732
          %v2859 = vpack.c.bf16 %v2736, %v2733
          %v2860 = vpack.c.bf16 %v2740, %v2737
          %v2861 = vpack.c.bf16 %v2741, %v2738
          %v2862 = vpack.c.bf16 %v2742, %v2739
          %v2863 = vpack.c.bf16 %v2746, %v2743
          %v2864 = vpack.c.bf16 %v2747, %v2744
          %v2865 = vpack.c.bf16 %v2748, %v2745
          %v2866 = vpack.c.bf16 %v2752, %v2749
          %v2867 = vpack.c.bf16 %v2753, %v2750
          %v2868 = vpack.c.bf16 %v2754, %v2751
          %v2869 = vpack.c.bf16 %v2758, %v2755
          %v2870 = vpack.c.bf16 %v2759, %v2756
          %v2871 = vpack.c.bf16 %v2760, %v2757
          %v2872 = vpack.c.bf16 %v2764, %v2761
          %v2873 = vpack.c.bf16 %v2765, %v2762
          %v2874 = vpack.c.bf16 %v2766, %v2763
          %v2875 = vpack.c.bf16 %v2770, %v2767
          %v2876 = vpack.c.bf16 %v2771, %v2768
          %v2877 = vpack.c.bf16 %v2772, %v2769
          %v2878 = vpack.c.bf16 %v2776, %v2773
          %v2879 = vpack.c.bf16 %v2777, %v2774
          %v2880 = vpack.c.bf16 %v2778, %v2775
          %v2881 = vpack.c.bf16 %v2782, %v2779
          %v2882 = vpack.c.bf16 %v2783, %v2780
          %v2883 = vpack.c.bf16 %v2784, %v2781
          %v2884 = vpack.c.bf16 %v2788, %v2785
          %v2885 = vpack.c.bf16 %v2789, %v2786
          %v2886 = vpack.c.bf16 %v2790, %v2787
          %v2983 = vunpack.c.l.b16 %v2791
          %v2984 = vunpack.c.l.b16 %v2792
          %v2985 = vunpack.c.l.b16 %v2793
          %v2986 = vunpack.c.h.b16 %v2791
          %v2987 = vunpack.c.h.b16 %v2792
          %v2988 = vunpack.c.h.b16 %v2793
          %v2989 = vunpack.c.l.b16 %v2794
          %v2990 = vunpack.c.l.b16 %v2795
          %v2991 = vunpack.c.l.b16 %v2796
          %v2992 = vunpack.c.h.b16 %v2794
          %v2993 = vunpack.c.h.b16 %v2795
          %v2994 = vunpack.c.h.b16 %v2796
          %v2995 = vunpack.c.l.b16 %v2797
          %v2996 = vunpack.c.l.b16 %v2798
          %v2997 = vunpack.c.l.b16 %v2799
          %v2998 = vunpack.c.h.b16 %v2797
          %v2999 = vunpack.c.h.b16 %v2798
          %v3000 = vunpack.c.h.b16 %v2799
          %v3001 = vunpack.c.l.b16 %v2800
          %v3002 = vunpack.c.l.b16 %v2801
          %v3003 = vunpack.c.l.b16 %v2802
          %v3004 = vunpack.c.h.b16 %v2800
          %v3005 = vunpack.c.h.b16 %v2801
          %v3006 = vunpack.c.h.b16 %v2802
          %v3007 = vunpack.c.l.b16 %v2803
          %v3008 = vunpack.c.l.b16 %v2804
          %v3009 = vunpack.c.l.b16 %v2805
          %v3010 = vunpack.c.h.b16 %v2803
          %v3011 = vunpack.c.h.b16 %v2804
          %v3012 = vunpack.c.h.b16 %v2805
          %v3013 = vunpack.c.l.b16 %v2806
          %v3014 = vunpack.c.l.b16 %v2807
          %v3015 = vunpack.c.l.b16 %v2808
          %v3016 = vunpack.c.h.b16 %v2806
          %v3017 = vunpack.c.h.b16 %v2807
          %v3018 = vunpack.c.h.b16 %v2808
          %v3019 = vunpack.c.l.b16 %v2809
          %v3020 = vunpack.c.l.b16 %v2810
          %v3021 = vunpack.c.l.b16 %v2811
          %v3022 = vunpack.c.h.b16 %v2809
          %v3023 = vunpack.c.h.b16 %v2810
          %v3024 = vunpack.c.h.b16 %v2811
          %v3025 = vunpack.c.l.b16 %v2812
          %v3026 = vunpack.c.l.b16 %v2813
          %v3027 = vunpack.c.l.b16 %v2814
          %v3028 = vunpack.c.h.b16 %v2812
          %v3029 = vunpack.c.h.b16 %v2813
          %v3030 = vunpack.c.h.b16 %v2814
          %v3031 = vunpack.c.l.b16 %v2815
          %v3032 = vunpack.c.l.b16 %v2816
          %v3033 = vunpack.c.l.b16 %v2817
          %v3034 = vunpack.c.h.b16 %v2815
          %v3035 = vunpack.c.h.b16 %v2816
          %v3036 = vunpack.c.h.b16 %v2817
          %v3037 = vunpack.c.l.b16 %v2818
          %v3038 = vunpack.c.l.b16 %v2819
          %v3039 = vunpack.c.l.b16 %v2820
          %v3040 = vunpack.c.h.b16 %v2818
          %v3041 = vunpack.c.h.b16 %v2819
          %v3042 = vunpack.c.h.b16 %v2820
          %v3043 = vunpack.c.l.b16 %v2821
          %v3044 = vunpack.c.l.b16 %v2822
          %v3045 = vunpack.c.l.b16 %v2823
          %v3046 = vunpack.c.h.b16 %v2821
          %v3047 = vunpack.c.h.b16 %v2822
          %v3048 = vunpack.c.h.b16 %v2823
          %v3049 = vunpack.c.l.b16 %v2824
          %v3050 = vunpack.c.l.b16 %v2825
          %v3051 = vunpack.c.l.b16 %v2826
          %v3052 = vunpack.c.h.b16 %v2824
          %v3053 = vunpack.c.h.b16 %v2825
          %v3054 = vunpack.c.h.b16 %v2826
          %v3055 = vunpack.c.l.b16 %v2827
          %v3056 = vunpack.c.l.b16 %v2828
          %v3057 = vunpack.c.l.b16 %v2829
          %v3058 = vunpack.c.h.b16 %v2827
          %v3059 = vunpack.c.h.b16 %v2828
          %v3060 = vunpack.c.h.b16 %v2829
          %v3061 = vunpack.c.l.b16 %v2830
          %v3062 = vunpack.c.l.b16 %v2831
          %v3063 = vunpack.c.l.b16 %v2832
          %v3064 = vunpack.c.h.b16 %v2830
          %v3065 = vunpack.c.h.b16 %v2831
          %v3066 = vunpack.c.h.b16 %v2832
          %v3067 = vunpack.c.l.b16 %v2833
          %v3068 = vunpack.c.l.b16 %v2834
          %v3069 = vunpack.c.l.b16 %v2835
          %v3070 = vunpack.c.h.b16 %v2833
          %v3071 = vunpack.c.h.b16 %v2834
          %v3072 = vunpack.c.h.b16 %v2835
          %v3073 = vunpack.c.l.b16 %v2836
          %v3074 = vunpack.c.l.b16 %v2837
          %v3075 = vunpack.c.l.b16 %v2838
          %v3076 = vunpack.c.h.b16 %v2836
          %v3077 = vunpack.c.h.b16 %v2837
          %v3078 = vunpack.c.h.b16 %v2838
          %v3079 = vunpack.c.l.b16 %v2839
          %v3080 = vunpack.c.l.b16 %v2840
          %v3081 = vunpack.c.l.b16 %v2841
          %v3082 = vunpack.c.h.b16 %v2839
          %v3083 = vunpack.c.h.b16 %v2840
          %v3084 = vunpack.c.h.b16 %v2841
          %v3085 = vunpack.c.l.b16 %v2842
          %v3086 = vunpack.c.l.b16 %v2843
          %v3087 = vunpack.c.l.b16 %v2844
          %v3088 = vunpack.c.h.b16 %v2842
          %v3089 = vunpack.c.h.b16 %v2843
          %v3090 = vunpack.c.h.b16 %v2844
          %v3091 = vunpack.c.l.b16 %v2845
          %v3092 = vunpack.c.l.b16 %v2846
          %v3093 = vunpack.c.l.b16 %v2847
          %v3094 = vunpack.c.h.b16 %v2845
          %v3095 = vunpack.c.h.b16 %v2846
          %v3096 = vunpack.c.h.b16 %v2847
          %v3097 = vunpack.c.l.b16 %v2848
          %v3098 = vunpack.c.l.b16 %v2849
          %v3099 = vunpack.c.l.b16 %v2850
          %v3100 = vunpack.c.h.b16 %v2848
          %v3101 = vunpack.c.h.b16 %v2849
          %v3102 = vunpack.c.h.b16 %v2850
          %v3103 = vunpack.c.l.b16 %v2851
          %v3104 = vunpack.c.l.b16 %v2852
          %v3105 = vunpack.c.l.b16 %v2853
          %v3106 = vunpack.c.h.b16 %v2851
          %v3107 = vunpack.c.h.b16 %v2852
          %v3108 = vunpack.c.h.b16 %v2853
          %v3109 = vunpack.c.l.b16 %v2854
          %v3110 = vunpack.c.l.b16 %v2855
          %v3111 = vunpack.c.l.b16 %v2856
          %v3112 = vunpack.c.h.b16 %v2854
          %v3113 = vunpack.c.h.b16 %v2855
          %v3114 = vunpack.c.h.b16 %v2856
          %v3115 = vunpack.c.l.b16 %v2857
          %v3116 = vunpack.c.l.b16 %v2858
          %v3117 = vunpack.c.l.b16 %v2859
          %v3118 = vunpack.c.h.b16 %v2857
          %v3119 = vunpack.c.h.b16 %v2858
          %v3120 = vunpack.c.h.b16 %v2859
          %v3121 = vunpack.c.l.b16 %v2860
          %v3122 = vunpack.c.l.b16 %v2861
          %v3123 = vunpack.c.l.b16 %v2862
          %v3124 = vunpack.c.h.b16 %v2860
          %v3125 = vunpack.c.h.b16 %v2861
          %v3126 = vunpack.c.h.b16 %v2862
          %v3127 = vunpack.c.l.b16 %v2863
          %v3128 = vunpack.c.l.b16 %v2864
          %v3129 = vunpack.c.l.b16 %v2865
          %v3130 = vunpack.c.h.b16 %v2863
          %v3131 = vunpack.c.h.b16 %v2864
          %v3132 = vunpack.c.h.b16 %v2865
          %v3133 = vunpack.c.l.b16 %v2866
          %v3134 = vunpack.c.l.b16 %v2867
          %v3135 = vunpack.c.l.b16 %v2868
          %v3136 = vunpack.c.h.b16 %v2866
          %v3137 = vunpack.c.h.b16 %v2867
          %v3138 = vunpack.c.h.b16 %v2868
          %v3139 = vunpack.c.l.b16 %v2869
          %v3140 = vunpack.c.l.b16 %v2870
          %v3141 = vunpack.c.l.b16 %v2871
          %v3142 = vunpack.c.h.b16 %v2869
          %v3143 = vunpack.c.h.b16 %v2870
          %v3144 = vunpack.c.h.b16 %v2871
          %v3145 = vunpack.c.l.b16 %v2872
          %v3146 = vunpack.c.l.b16 %v2873
          %v3147 = vunpack.c.l.b16 %v2874
          %v3148 = vunpack.c.h.b16 %v2872
          %v3149 = vunpack.c.h.b16 %v2873
          %v3150 = vunpack.c.h.b16 %v2874
          %v3151 = vunpack.c.l.b16 %v2875
          %v3152 = vunpack.c.l.b16 %v2876
          %v3153 = vunpack.c.l.b16 %v2877
          %v3154 = vunpack.c.h.b16 %v2875
          %v3155 = vunpack.c.h.b16 %v2876
          %v3156 = vunpack.c.h.b16 %v2877
          %v3157 = vunpack.c.l.b16 %v2878
          %v3158 = vunpack.c.l.b16 %v2879
          %v3159 = vunpack.c.l.b16 %v2880
          %v3160 = vunpack.c.h.b16 %v2878
          %v3161 = vunpack.c.h.b16 %v2879
          %v3162 = vunpack.c.h.b16 %v2880
          %v3163 = vunpack.c.l.b16 %v2881
          %v3164 = vunpack.c.l.b16 %v2882
          %v3165 = vunpack.c.l.b16 %v2883
          %v3166 = vunpack.c.h.b16 %v2881
          %v3167 = vunpack.c.h.b16 %v2882
          %v3168 = vunpack.c.h.b16 %v2883
          %v3169 = vunpack.c.l.b16 %v2884
          %v3170 = vunpack.c.l.b16 %v2885
          %v3171 = vunpack.c.l.b16 %v2886
          %v3172 = vunpack.c.h.b16 %v2884
          %v3173 = vunpack.c.h.b16 %v2885
          %v3174 = vunpack.c.h.b16 %v2886
          %v3175 = vpack.c.b16 %v2984, %v2983
          %v3176 = vpack.c.b16 %v2985, %v2985
          %v3177 = vpack.c.b16 %v2987, %v2986
          %v3178 = vpack.c.b16 %v2988, %v2988
          %v3179 = vpack.c.b16 %v2990, %v2989
          %v3180 = vpack.c.b16 %v2991, %v2991
          %v3181 = vpack.c.b16 %v2993, %v2992
          %v3182 = vpack.c.b16 %v2994, %v2994
          %v3183 = vpack.c.b16 %v2996, %v2995
          %v3184 = vpack.c.b16 %v2997, %v2997
          %v3185 = vpack.c.b16 %v2999, %v2998
          %v3186 = vpack.c.b16 %v3000, %v3000
          %v3187 = vpack.c.b16 %v3002, %v3001
          %v3188 = vpack.c.b16 %v3003, %v3003
          %v3189 = vpack.c.b16 %v3005, %v3004
          %v3190 = vpack.c.b16 %v3006, %v3006
          %v3191 = vpack.c.b16 %v3008, %v3007
          %v3192 = vpack.c.b16 %v3009, %v3009
          %v3193 = vpack.c.b16 %v3011, %v3010
          %v3194 = vpack.c.b16 %v3012, %v3012
          %v3195 = vpack.c.b16 %v3014, %v3013
          %v3196 = vpack.c.b16 %v3015, %v3015
          %v3197 = vpack.c.b16 %v3017, %v3016
          %v3198 = vpack.c.b16 %v3018, %v3018
          %v3199 = vpack.c.b16 %v3020, %v3019
          %v3200 = vpack.c.b16 %v3021, %v3021
          %v3201 = vpack.c.b16 %v3023, %v3022
          %v3202 = vpack.c.b16 %v3024, %v3024
          %v3203 = vpack.c.b16 %v3026, %v3025
          %v3204 = vpack.c.b16 %v3027, %v3027
          %v3205 = vpack.c.b16 %v3029, %v3028
          %v3206 = vpack.c.b16 %v3030, %v3030
          %v3207 = vpack.c.b16 %v3032, %v3031
          %v3208 = vpack.c.b16 %v3033, %v3033
          %v3209 = vpack.c.b16 %v3035, %v3034
          %v3210 = vpack.c.b16 %v3036, %v3036
          %v3211 = vpack.c.b16 %v3038, %v3037
          %v3212 = vpack.c.b16 %v3039, %v3039
          %v3213 = vpack.c.b16 %v3041, %v3040
          %v3214 = vpack.c.b16 %v3042, %v3042
          %v3215 = vpack.c.b16 %v3044, %v3043
          %v3216 = vpack.c.b16 %v3045, %v3045
          %v3217 = vpack.c.b16 %v3047, %v3046
          %v3218 = vpack.c.b16 %v3048, %v3048
          %v3219 = vpack.c.b16 %v3050, %v3049
          %v3220 = vpack.c.b16 %v3051, %v3051
          %v3221 = vpack.c.b16 %v3053, %v3052
          %v3222 = vpack.c.b16 %v3054, %v3054
          %v3223 = vpack.c.b16 %v3056, %v3055
          %v3224 = vpack.c.b16 %v3057, %v3057
          %v3225 = vpack.c.b16 %v3059, %v3058
          %v3226 = vpack.c.b16 %v3060, %v3060
          %v3227 = vpack.c.b16 %v3062, %v3061
          %v3228 = vpack.c.b16 %v3063, %v3063
          %v3229 = vpack.c.b16 %v3065, %v3064
          %v3230 = vpack.c.b16 %v3066, %v3066
          %v3231 = vpack.c.b16 %v3068, %v3067
          %v3232 = vpack.c.b16 %v3069, %v3069
          %v3233 = vpack.c.b16 %v3071, %v3070
          %v3234 = vpack.c.b16 %v3072, %v3072
          %v3235 = vpack.c.b16 %v3074, %v3073
          %v3236 = vpack.c.b16 %v3075, %v3075
          %v3237 = vpack.c.b16 %v3077, %v3076
          %v3238 = vpack.c.b16 %v3078, %v3078
          %v3239 = vpack.c.b16 %v3080, %v3079
          %v3240 = vpack.c.b16 %v3081, %v3081
          %v3241 = vpack.c.b16 %v3083, %v3082
          %v3242 = vpack.c.b16 %v3084, %v3084
          %v3243 = vpack.c.b16 %v3086, %v3085
          %v3244 = vpack.c.b16 %v3087, %v3087
          %v3245 = vpack.c.b16 %v3089, %v3088
          %v3246 = vpack.c.b16 %v3090, %v3090
          %v3247 = vpack.c.b16 %v3092, %v3091
          %v3248 = vpack.c.b16 %v3093, %v3093
          %v3249 = vpack.c.b16 %v3095, %v3094
          %v3250 = vpack.c.b16 %v3096, %v3096
          %v3251 = vpack.c.b16 %v3098, %v3097
          %v3252 = vpack.c.b16 %v3099, %v3099
          %v3253 = vpack.c.b16 %v3101, %v3100
          %v3254 = vpack.c.b16 %v3102, %v3102
          %v3255 = vpack.c.b16 %v3104, %v3103
          %v3256 = vpack.c.b16 %v3105, %v3105
          %v3257 = vpack.c.b16 %v3107, %v3106
          %v3258 = vpack.c.b16 %v3108, %v3108
          %v3259 = vpack.c.b16 %v3110, %v3109
          %v3260 = vpack.c.b16 %v3111, %v3111
          %v3261 = vpack.c.b16 %v3113, %v3112
          %v3262 = vpack.c.b16 %v3114, %v3114
          %v3263 = vpack.c.b16 %v3116, %v3115
          %v3264 = vpack.c.b16 %v3117, %v3117
          %v3265 = vpack.c.b16 %v3119, %v3118
          %v3266 = vpack.c.b16 %v3120, %v3120
          %v3267 = vpack.c.b16 %v3122, %v3121
          %v3268 = vpack.c.b16 %v3123, %v3123
          %v3269 = vpack.c.b16 %v3125, %v3124
          %v3270 = vpack.c.b16 %v3126, %v3126
          %v3271 = vpack.c.b16 %v3128, %v3127
          %v3272 = vpack.c.b16 %v3129, %v3129
          %v3273 = vpack.c.b16 %v3131, %v3130
          %v3274 = vpack.c.b16 %v3132, %v3132
          %v3275 = vpack.c.b16 %v3134, %v3133
          %v3276 = vpack.c.b16 %v3135, %v3135
          %v3277 = vpack.c.b16 %v3137, %v3136
          %v3278 = vpack.c.b16 %v3138, %v3138
          %v3279 = vpack.c.b16 %v3140, %v3139
          %v3280 = vpack.c.b16 %v3141, %v3141
          %v3281 = vpack.c.b16 %v3143, %v3142
          %v3282 = vpack.c.b16 %v3144, %v3144
          %v3283 = vpack.c.b16 %v3146, %v3145
          %v3284 = vpack.c.b16 %v3147, %v3147
          %v3285 = vpack.c.b16 %v3149, %v3148
          %v3286 = vpack.c.b16 %v3150, %v3150
          %v3287 = vpack.c.b16 %v3152, %v3151
          %v3288 = vpack.c.b16 %v3153, %v3153
          %v3289 = vpack.c.b16 %v3155, %v3154
          %v3290 = vpack.c.b16 %v3156, %v3156
          %v3291 = vpack.c.b16 %v3158, %v3157
          %v3292 = vpack.c.b16 %v3159, %v3159
          %v3293 = vpack.c.b16 %v3161, %v3160
          %v3294 = vpack.c.b16 %v3162, %v3162
          %v3295 = vpack.c.b16 %v3164, %v3163
          %v3296 = vpack.c.b16 %v3165, %v3165
          %v3297 = vpack.c.b16 %v3167, %v3166
          %v3298 = vpack.c.b16 %v3168, %v3168
          %v3299 = vpack.c.b16 %v3170, %v3169
          %v3300 = vpack.c.b16 %v3171, %v3171
          %v3301 = vpack.c.b16 %v3173, %v3172
          %v3302 = vpack.c.b16 %v3174, %v3174
          %3431 = vst [vmem:[%s256] sm:$0xff] %v3175
          %3432 = vst [vmem:[%s256 + $0x8] sm:$0xf] %v3176
          %3433 = vst [vmem:[%s256 + $0xc] sm:$0xff] %v3177
          %3434 = vst [vmem:[%s256 + $0x14] sm:$0xf] %v3178
          %3435 = vst [vmem:[%s256 + $0x18] sm:$0xff] %v3179
          %3436 = vst [vmem:[%s256 + $0x20] sm:$0xf] %v3180
          %3437 = vst [vmem:[%s256 + $0x24] sm:$0xff] %v3181
          %3438 = vst [vmem:[%s256 + $0x2c] sm:$0xf] %v3182
          %3439 = vst [vmem:[%s256 + $0x30] sm:$0xff] %v3183
          %3440 = vst [vmem:[%s256 + $0x38] sm:$0xf] %v3184
          %3441 = vst [vmem:[%s256 + $0x3c] sm:$0xff] %v3185
          %3442 = vst [vmem:[%s256 + $0x44] sm:$0xf] %v3186
          %3443 = vst [vmem:[%s256 + $0x48] sm:$0xff] %v3187
          %3444 = vst [vmem:[%s256 + $0x50] sm:$0xf] %v3188
          %3445 = vst [vmem:[%s256 + $0x54] sm:$0xff] %v3189
          %3446 = vst [vmem:[%s256 + $0x5c] sm:$0xf] %v3190
          %3447 = vst [vmem:[%s256 + $0x60] sm:$0xff] %v3191
          %3448 = vst [vmem:[%s256 + $0x68] sm:$0xf] %v3192
          %3449 = vst [vmem:[%s256 + $0x6c] sm:$0xff] %v3193
          %3450 = vst [vmem:[%s256 + $0x74] sm:$0xf] %v3194
          %3451 = vst [vmem:[%s256 + $0x78] sm:$0xff] %v3195
          %3452 = vst [vmem:[%s256 + $0x80] sm:$0xf] %v3196
          %3453 = vst [vmem:[%s256 + $0x84] sm:$0xff] %v3197
          %3454 = vst [vmem:[%s256 + $0x8c] sm:$0xf] %v3198
          %3455 = vst [vmem:[%s256 + $0x90] sm:$0xff] %v3199
          %3456 = vst [vmem:[%s256 + $0x98] sm:$0xf] %v3200
          %3457 = vst [vmem:[%s256 + $0x9c] sm:$0xff] %v3201
          %3458 = vst [vmem:[%s256 + $0xa4] sm:$0xf] %v3202
          %3459 = vst [vmem:[%s256 + $0xa8] sm:$0xff] %v3203
          %3460 = vst [vmem:[%s256 + $0xb0] sm:$0xf] %v3204
          %3461 = vst [vmem:[%s256 + $0xb4] sm:$0xff] %v3205
          %3462 = vst [vmem:[%s256 + $0xbc] sm:$0xf] %v3206
          %3463 = vst [vmem:[%s256 + $0xc0] sm:$0xff] %v3207
          %3464 = vst [vmem:[%s256 + $0xc8] sm:$0xf] %v3208
          %3465 = vst [vmem:[%s256 + $0xcc] sm:$0xff] %v3209
          %3466 = vst [vmem:[%s256 + $0xd4] sm:$0xf] %v3210
          %3467 = vst [vmem:[%s256 + $0xd8] sm:$0xff] %v3211
          %3468 = vst [vmem:[%s256 + $0xe0] sm:$0xf] %v3212
          %3469 = vst [vmem:[%s256 + $0xe4] sm:$0xff] %v3213
          %3470 = vst [vmem:[%s256 + $0xec] sm:$0xf] %v3214
          %3471 = vst [vmem:[%s256 + $0xf0] sm:$0xff] %v3215
          %3472 = vst [vmem:[%s256 + $0xf8] sm:$0xf] %v3216
          %3473 = vst [vmem:[%s256 + $0xfc] sm:$0xff] %v3217
          %3474 = vst [vmem:[%s256 + $0x104] sm:$0xf] %v3218
          %3475 = vst [vmem:[%s256 + $0x108] sm:$0xff] %v3219
          %3476 = vst [vmem:[%s256 + $0x110] sm:$0xf] %v3220
          %3477 = vst [vmem:[%s256 + $0x114] sm:$0xff] %v3221
          %3478 = vst [vmem:[%s256 + $0x11c] sm:$0xf] %v3222
          %3479 = vst [vmem:[%s256 + $0x120] sm:$0xff] %v3223
          %3480 = vst [vmem:[%s256 + $0x128] sm:$0xf] %v3224
          %3481 = vst [vmem:[%s256 + $0x12c] sm:$0xff] %v3225
          %3482 = vst [vmem:[%s256 + $0x134] sm:$0xf] %v3226
          %3483 = vst [vmem:[%s256 + $0x138] sm:$0xff] %v3227
          %3484 = vst [vmem:[%s256 + $0x140] sm:$0xf] %v3228
          %3485 = vst [vmem:[%s256 + $0x144] sm:$0xff] %v3229
          %3486 = vst [vmem:[%s256 + $0x14c] sm:$0xf] %v3230
          %3487 = vst [vmem:[%s256 + $0x150] sm:$0xff] %v3231
          %3488 = vst [vmem:[%s256 + $0x158] sm:$0xf] %v3232
          %3489 = vst [vmem:[%s256 + $0x15c] sm:$0xff] %v3233
          %3490 = vst [vmem:[%s256 + $0x164] sm:$0xf] %v3234
          %3491 = vst [vmem:[%s256 + $0x168] sm:$0xff] %v3235
          %3492 = vst [vmem:[%s256 + $0x170] sm:$0xf] %v3236
          %3493 = vst [vmem:[%s256 + $0x174] sm:$0xff] %v3237
          %3494 = vst [vmem:[%s256 + $0x17c] sm:$0xf] %v3238
          %3495 = vst [vmem:[%s256 + $0x180] sm:$0xff] %v3239
          %3496 = vst [vmem:[%s256 + $0x188] sm:$0xf] %v3240
          %3497 = vst [vmem:[%s256 + $0x18c] sm:$0xff] %v3241
          %3498 = vst [vmem:[%s256 + $0x194] sm:$0xf] %v3242
          %3499 = vst [vmem:[%s256 + $0x198] sm:$0xff] %v3243
          %3500 = vst [vmem:[%s256 + $0x1a0] sm:$0xf] %v3244
          %3501 = vst [vmem:[%s256 + $0x1a4] sm:$0xff] %v3245
          %3502 = vst [vmem:[%s256 + $0x1ac] sm:$0xf] %v3246
          %3503 = vst [vmem:[%s256 + $0x1b0] sm:$0xff] %v3247
          %3504 = vst [vmem:[%s256 + $0x1b8] sm:$0xf] %v3248
          %3505 = vst [vmem:[%s256 + $0x1bc] sm:$0xff] %v3249
          %3506 = vst [vmem:[%s256 + $0x1c4] sm:$0xf] %v3250
          %3507 = vst [vmem:[%s256 + $0x1c8] sm:$0xff] %v3251
          %3508 = vst [vmem:[%s256 + $0x1d0] sm:$0xf] %v3252
          %3509 = vst [vmem:[%s256 + $0x1d4] sm:$0xff] %v3253
          %3510 = vst [vmem:[%s256 + $0x1dc] sm:$0xf] %v3254
          %3511 = vst [vmem:[%s256 + $0x1e0] sm:$0xff] %v3255
          %3512 = vst [vmem:[%s256 + $0x1e8] sm:$0xf] %v3256
          %3513 = vst [vmem:[%s256 + $0x1ec] sm:$0xff] %v3257
          %3514 = vst [vmem:[%s256 + $0x1f4] sm:$0xf] %v3258
          %3515 = vst [vmem:[%s256 + $0x1f8] sm:$0xff] %v3259
          %3516 = vst [vmem:[%s256 + $0x200] sm:$0xf] %v3260
          %3517 = vst [vmem:[%s256 + $0x204] sm:$0xff] %v3261
          %3518 = vst [vmem:[%s256 + $0x20c] sm:$0xf] %v3262
          %3519 = vst [vmem:[%s256 + $0x210] sm:$0xff] %v3263
          %3520 = vst [vmem:[%s256 + $0x218] sm:$0xf] %v3264
          %3521 = vst [vmem:[%s256 + $0x21c] sm:$0xff] %v3265
          %3522 = vst [vmem:[%s256 + $0x224] sm:$0xf] %v3266
          %3523 = vst [vmem:[%s256 + $0x228] sm:$0xff] %v3267
          %3524 = vst [vmem:[%s256 + $0x230] sm:$0xf] %v3268
          %3525 = vst [vmem:[%s256 + $0x234] sm:$0xff] %v3269
          %3526 = vst [vmem:[%s256 + $0x23c] sm:$0xf] %v3270
          %3527 = vst [vmem:[%s256 + $0x240] sm:$0xff] %v3271
          %3528 = vst [vmem:[%s256 + $0x248] sm:$0xf] %v3272
          %3529 = vst [vmem:[%s256 + $0x24c] sm:$0xff] %v3273
          %3530 = vst [vmem:[%s256 + $0x254] sm:$0xf] %v3274
          %3531 = vst [vmem:[%s256 + $0x258] sm:$0xff] %v3275
          %3532 = vst [vmem:[%s256 + $0x260] sm:$0xf] %v3276
          %3533 = vst [vmem:[%s256 + $0x264] sm:$0xff] %v3277
          %3534 = vst [vmem:[%s256 + $0x26c] sm:$0xf] %v3278
          %3535 = vst [vmem:[%s256 + $0x270] sm:$0xff] %v3279
          %3536 = vst [vmem:[%s256 + $0x278] sm:$0xf] %v3280
          %3537 = vst [vmem:[%s256 + $0x27c] sm:$0xff] %v3281
          %3538 = vst [vmem:[%s256 + $0x284] sm:$0xf] %v3282
          %3539 = vst [vmem:[%s256 + $0x288] sm:$0xff] %v3283
          %3540 = vst [vmem:[%s256 + $0x290] sm:$0xf] %v3284
          %3541 = vst [vmem:[%s256 + $0x294] sm:$0xff] %v3285
          %3542 = vst [vmem:[%s256 + $0x29c] sm:$0xf] %v3286
          %3543 = vst [vmem:[%s256 + $0x2a0] sm:$0xff] %v3287
          %3544 = vst [vmem:[%s256 + $0x2a8] sm:$0xf] %v3288
          %3545 = vst [vmem:[%s256 + $0x2ac] sm:$0xff] %v3289
          %3546 = vst [vmem:[%s256 + $0x2b4] sm:$0xf] %v3290
          %3547 = vst [vmem:[%s256 + $0x2b8] sm:$0xff] %v3291
          %3548 = vst [vmem:[%s256 + $0x2c0] sm:$0xf] %v3292
          %3549 = vst [vmem:[%s256 + $0x2c4] sm:$0xff] %v3293
          %3550 = vst [vmem:[%s256 + $0x2cc] sm:$0xf] %v3294
          %3551 = vst [vmem:[%s256 + $0x2d0] sm:$0xff] %v3295
          %3552 = vst [vmem:[%s256 + $0x2d8] sm:$0xf] %v3296
          %3553 = vst [vmem:[%s256 + $0x2dc] sm:$0xff] %v3297
          %3554 = vst [vmem:[%s256 + $0x2e4] sm:$0xf] %v3298
          %3555 = vst [vmem:[%s256 + $0x2e8] sm:$0xff] %v3299
          %3556 = vst [vmem:[%s256 + $0x2f0] sm:$0xf] %v3300
          %3557 = vst [vmem:[%s256 + $0x2f4] sm:$0xff] %v3301
          %3558 = vst [vmem:[%s256 + $0x2fc] sm:$0xf] %v3302
        $region48: #{tpu_custom_call.1} parent=31 // pred_fallthru
          _
        %s3559 = sand.u32 %s132, 1
        %s3560 = scalar_lea.sflag [#allocation5], %s3559
        %s3561 = sand.u32 %s132, 1
        %s3562 = smul.addr %s3561, 768
        %s3563 = scalar_lea.vmem [#allocation8], %s3562
        // Predicated region
        $region49: #{tpu_custom_call.1} parent=31 // pred_check
          %p3564 = pneg %p142
        $region50: #{tpu_custom_call.1} parent=31 // pred_check_branch
          %3566 = sbr.rel (%p3564) target = $region52
        $region51: #{tpu_custom_call.1} parent=31 // pred_region
          %s3567 = smul.u32 64, %s26
          %s3568 = smul.u32 3, %s27
          %s3570 = ssub.s32 12288, 12288
          %3571 = vsyncadd %s3560, %s3570
          %s3572 = smul.addr %s3567, 6
          %s3573 = sadd.s32 %s3568, %s3572
          %s3574 = smul.addr %s3573, 64
          %s3575 = scalar_lea.hbm %s3, %s3574
          %s3576 = sshll.u32 %s3563, 4
          %s3577 = int_to_ptr.vmem [resolvable:$true] %s3576
          %3582 = dma.vmem_to_hbm [thread:$0]  %s3577, 12288, %s3575, %s3560, 192, 384, 12
        $region52: #{tpu_custom_call.1} parent=31 // pred_fallthru
          _
      $region32: #{tpu_custom_call.1} parent=5 // pred_fallthru
        _
      %p3583 = scmp.le.s32.totalorder 2, %s16
      // Predicated region
      $region53: #{tpu_custom_call.1} parent=5 // pred_check
        %p3584 = pneg %p3583
      $region54: #{tpu_custom_call.1} parent=5 // pred_check_branch
        %3586 = sbr.rel (%p3584) target = $region56
      $region55: #{tpu_custom_call.1} parent=5 // pred_region
        %s3587 = ssub.s32 %s16, 2
        // Predicated region
        $region57: #{tpu_custom_call.1} parent=55 // pred_check
          %p3588 = pneg %p148
        $region58: #{tpu_custom_call.1} parent=55 // pred_check_branch
          %3590 = sbr.rel (%p3588) target = $region60
        $region59: #{tpu_custom_call.1} parent=55 // pred_region
          %s3591 = sand.u32 %s133, 1
          %s3592 = scalar_lea.sflag [#allocation5], %s3591
          %s3593 = sand.u32 %s133, 1
          %s3594 = smul.addr %s3593, 768
          %s3595 = scalar_lea.vmem [#allocation8], %s3594
          %3596 = dma.done %s3592, 12288
        $region60: #{tpu_custom_call.1} parent=55 // pred_fallthru
          _
      $region56: #{tpu_custom_call.1} parent=5 // pred_fallthru
        _
    $region6: #{tpu_custom_call.1} parent=1 // loop_footer
      %s20 = sadd.s32 1, %s16
    $region7: #{tpu_custom_call.1} parent=1 // loop_footer_branch
      %15 = sbr.rel target = $region3
    $region8: #{tpu_custom_call.1} parent=1 // loop_exit
      _
    %3597 = vsyncpa [#allocation4], 1
    %s3598 = scalar_lea.sflag [#allocation4], 1
    %3599 = vsyncpa %s3598, 1
    %3600 = vsyncpa [#allocation7], 1
    %s3601 = scalar_lea.sflag [#allocation7], 1
    %3602 = vsyncpa %s3601, 1
    %3603 = vsyncpa [#allocation5], 1
    %s3604 = scalar_lea.sflag [#allocation5], 1
    %3605 = vsyncpa %s3604, 1

</llo_original>
